<compile_context>
chip_gen: v7x
topology: tpu7x:2x2x1
jax: 0.10.0
libtpu: 0.0.40
codegen_flags: <defaults>
</compile_context>

<pallas_src>
import functools

import jax
import jax.numpy as jnp
from jax.experimental import pallas as pl
from jax.experimental.pallas import tpu as pltpu


# ----------------------------- fused Pallas kernel -------------------------- #

def _cnn_kernel(xr_ref, wct_ref, bc_ref, w1_ref, b1_ref, w2_ref, b2_ref,
                out_ref, aflat_ref, *, batch, nr_filters, seg, tap_offsets):
    """Whole network for the whole (small) batch in one invocation.

    xr_ref   : (B, Cin, FLAT) f32  zero-padded input images, rows flattened (width WP)
    wct_ref  : (k*k, F, Cin)  f32  per-tap conv weights
    bc_ref   : (F, 1)         f32  conv bias
    w1_ref   : (F*seg, U)     f32  FC1 weight with torch flatten + pad columns folded in
    b1_ref   : (1, U), w2_ref : (U, C), b2_ref : (1, C)
    out_ref  : (B, C)
    aflat_ref: (B, F*seg)     f32  VMEM scratch for the flattened conv activations
    """
    xr = xr_ref[...]                     # (B, Cin, FLAT)
    wct = wct_ref[...]                   # (k*k, F, Cin)

    # ---- Conv2d on the padded WPxWP grid: k*k accumulated per-tap matmuls.
    # Each tap is a static lane shift of the flattened padded image; positions that
    # "wrap" rows / run into padding are garbage but are zeroed out by w1's zero rows.
    acc = jnp.zeros((nr_filters, batch * seg), dtype=jnp.float32)
    for t, off in enumerate(tap_offsets):                         # static unroll (9 taps)
        xt = jnp.concatenate(
            [xr[b, :, off:off + seg] for b in range(batch)], axis=1)   # (Cin, B*seg)
        acc = acc + jnp.dot(wct[t], xt, preferred_element_type=jnp.float32)
    act = jax.nn.sigmoid(acc + bc_ref[...])                       # (F, B*seg) f32

    # ---- Flatten to (B, F*seg) in torch NCHW order via VMEM scratch stores
    # (every column of aflat is written exactly once -> no init needed).
    for b in range(batch):
        for f in range(nr_filters):
            aflat_ref[pl.ds(b, 1), pl.ds(f * seg, seg)] = \
                act[f:f + 1, b * seg:(b + 1) * seg]

    # ---- FC1 (+ sigmoid) and FC2: two matmuls with M = batch (single contraction each).
    h = jax.nn.sigmoid(
        jnp.dot(aflat_ref[...], w1_ref[...], preferred_element_type=jnp.float32)
        + b1_ref[...])                                            # (B, U)
    out_ref[...] = (jnp.dot(h, w2_ref[...], preferred_element_type=jnp.float32)
                    + b2_ref[...])                                # (B, C)


# ------------------------------ parameter packing --------------------------- #

def pack_params(params, *, k, p, s, width):
    """One-time repack of torch-shaped parameters into kernel-ready f32 arrays."""
    assert s == 1, "padded-grid tap-shift conv assumes unit stride"
    w_conv, b_conv, w_fc1, b_fc1, w_fc2, b_fc2 = params
    F, Cin = w_conv.shape[0], w_conv.shape[1]
    U, C = w_fc1.shape[0], w_fc2.shape[0]
    WP = width + 2 * p                          # padded width (18)
    OD = (width - k + 2 * p) // s + 1           # conv output dim (16)
    seg = WP * WP                               # padded-grid positions per sample (324)

    wct = jnp.transpose(w_conv, (2, 3, 0, 1)).reshape(k * k, F, Cin).astype(jnp.float32)
    bc = b_conv.reshape(F, 1).astype(jnp.float32)
    # Fold torch's NCHW flatten AND the padded-grid conv layout into the FC1 weight:
    # valid (i, j) < OD keep their weight, the extra padded-grid columns get zeros.
    w1 = w_fc1.reshape(U, F, OD, OD)
    w1 = jnp.pad(w1, ((0, 0), (0, 0), (0, WP - OD), (0, WP - OD)))   # (U, F, WP, WP)
    w1 = w1.reshape(U, F * seg).T.astype(jnp.float32)                # (F*seg, U)
    b1 = b_fc1.reshape(1, U).astype(jnp.float32)
    w2 = w_fc2.T.astype(jnp.float32)                                 # (U, C)
    b2 = b_fc2.reshape(1, C).astype(jnp.float32)
    return (wct, bc, w1, b1, w2, b2)


# ------------------------------- JAX wrapper -------------------------------- #

def cnn_forward(x, packed, *, k, p, s, width):
    if s != 1:
        raise NotImplementedError("kernel assumes stride 1")
    wct, bc, w1, b1, w2, b2 = packed
    B, Cin = x.shape[0], x.shape[1]
    F = wct.shape[1]
    U = w1.shape[1]
    C = w2.shape[1]
    WP = width + 2 * p
    seg = WP * WP
    # last flat index read by any tap is (seg-1) + (k-1)*(WP+1); pad rows accordingly.
    need = seg + (k - 1) * (WP + 1)
    HP = -(-need // WP)                         # total padded rows (21)
    pad_bottom = HP - width - p                 # 4

    # Hot-path wrapper work: ONE pad + reshape (fused by XLA). Everything else is fused
    # inside the single pallas_call below.
    xr = jnp.pad(x.astype(jnp.float32),
                 ((0, 0), (0, 0), (p, pad_bottom), (p, p))).reshape(B, Cin, HP * WP)

    taps = tuple(kh * WP + kw for kh in range(k) for kw in range(k))
    kernel = functools.partial(_cnn_kernel, batch=B, nr_filters=F, seg=seg,
                               tap_offsets=taps)

    flops = 2 * (k * k * F * Cin * B * seg + B * (F * seg) * U + B * U * C)
    transcendentals = B * seg * F + B * U
    bytes_accessed = 4 * (xr.size + wct.size + bc.size + w1.size + b1.size
                          + w2.size + b2.size + B * C)

    vmem = pl.BlockSpec(memory_space=pltpu.MemorySpace.VMEM)
    out = pl.pallas_call(
        kernel,
        out_shape=jax.ShapeDtypeStruct((B, C), jnp.float32),
        in_specs=[vmem] * 7,
        out_specs=vmem,
        scratch_shapes=[pltpu.VMEM((B, F * seg), jnp.float32)],
        cost_estimate=pl.CostEstimate(flops=flops,
                                      transcendentals=transcendentals,
                                      bytes_accessed=bytes_accessed),
    )(xr, wct, bc, w1, b1, w2, b2)
    return out


def cnn_reference(x, params, *, k, p, s):
    """Pure-JAX f32 reference matching the torch module."""
    w_conv, b_conv, w_fc1, b_fc1, w_fc2, b_fc2 = params
    out1 = jax.lax.conv_general_dilated(
        x, w_conv, window_strides=(s, s), padding=[(p, p), (p, p)],
        dimension_numbers=("NCHW", "OIHW", "NCHW"),
        precision=jax.lax.Precision.HIGHEST)
    out1 = jax.nn.sigmoid(out1 + b_conv[None, :, None, None])
    flat = out1.reshape(out1.shape[0], -1)
    h = jax.nn.sigmoid(flat @ w_fc1.T + b_fc1)
    return h @ w_fc2.T + b_fc2


# --------------------------------- main ------------------------------------ #

if __name__ == "__main__":
    # module hyper-params (small, consistent with the torch module)
    in_ch, nr_filters, k, p_size, s_size, width = 4, 8, 3, 1, 1, 16
    C, nr_units = 10, 32
    input_dim = (width - k + 2 * p_size) // s_size + 1            # 16
    fc_in = input_dim ** 2 * nr_filters                            # 2048
    B = 2

    key = jax.random.PRNGKey(0)
    kx, k1, k2, k3, k4, k5, k6 = jax.random.split(key, 7)

    x = jax.random.normal(kx, (B, in_ch, width, width), dtype=jnp.float32)

    # deterministic synthetic parameters (torch shapes)
    w_conv = 0.1 * jax.random.normal(k1, (nr_filters, in_ch, k, k), jnp.float32)
    b_conv = 0.1 * jax.random.normal(k2, (nr_filters,), jnp.float32)
    w_fc1 = 0.05 * jax.random.normal(k3, (nr_units, fc_in), jnp.float32)
    b_fc1 = 0.05 * jax.random.normal(k4, (nr_units,), jnp.float32)
    w_fc2 = 0.05 * jax.random.normal(k5, (C, nr_units), jnp.float32)
    b_fc2 = 0.05 * jax.random.normal(k6, (C,), jnp.float32)
    params = (w_conv, b_conv, w_fc1, b_fc1, w_fc2, b_fc2)

    # pack once, outside the per-call hot path
    packed = pack_params(params, k=k, p=p_size, s=s_size, width=width)

    fwd = jax.jit(functools.partial(cnn_forward, k=k, p=p_size, s=s_size, width=width))
    out = jax.block_until_ready(fwd(x, packed))
    assert out.shape == (B, C) and out.dtype == jnp.float32

    ref = cnn_reference(x, params, k=k, p=p_size, s=s_size)
    max_err = float(jnp.max(jnp.abs(out - ref)))
    # all-f32 path is typically ~1e-5; keep a conservative bound
    assert max_err < 5e-2, f"max abs error vs reference: {max_err}"

    print("KERNEL_OK")
</pallas_src>

<mosaic_0001>
module attributes {stable_mosaic.version = 11 : i64} {
  func.func @_cnn_kernel(%arg0: memref<2x4x378xf32, #tpu.memory_space<vmem>>, %arg1: memref<9x8x4xf32, #tpu.memory_space<vmem>>, %arg2: memref<8x1xf32, #tpu.memory_space<vmem>>, %arg3: memref<2592x32xf32, #tpu.memory_space<vmem>>, %arg4: memref<1x32xf32, #tpu.memory_space<vmem>>, %arg5: memref<32x10xf32, #tpu.memory_space<vmem>>, %arg6: memref<1x10xf32, #tpu.memory_space<vmem>>, %arg7: memref<2x10xf32, #tpu.memory_space<vmem>>, %arg8: memref<2x2592xf32, #tpu.memory_space<vmem>>) attributes {dimension_semantics = [], scalar_prefetch = 0 : i64, scratch_operands = 1 : i64, tpu.core_type = #tpu.core_type<tc>} {
    %c0 = arith.constant 0 : index
    %c0_0 = arith.constant 0 : index
    %c0_1 = arith.constant 0 : index
    %0 = vector.load %arg0[%c0, %c0_0, %c0_1] : memref<2x4x378xf32, #tpu.memory_space<vmem>>, vector<2x4x378xf32>
    %c0_2 = arith.constant 0 : index
    %c0_3 = arith.constant 0 : index
    %c0_4 = arith.constant 0 : index
    %1 = vector.load %arg1[%c0_2, %c0_3, %c0_4] : memref<9x8x4xf32, #tpu.memory_space<vmem>>, vector<9x8x4xf32>
    %cst = arith.constant 0.000000e+00 : f32
    %2 = vector.broadcast %cst : f32 to vector<8x648xf32>
    %3 = vector.extract_strided_slice %0 {offsets = [0, 0, 0], sizes = [1, 4, 324], strides = [1, 1, 1]} : vector<2x4x378xf32> to vector<1x4x324xf32>
    %4 = vector.shape_cast %3 : vector<1x4x324xf32> to vector<4x324xf32>
    %5 = vector.extract_strided_slice %0 {offsets = [1, 0, 0], sizes = [1, 4, 324], strides = [1, 1, 1]} : vector<2x4x378xf32> to vector<1x4x324xf32>
    %6 = vector.shape_cast %5 : vector<1x4x324xf32> to vector<4x324xf32>
    %7 = tpu.concatenate %4, %6 in 1 : vector<4x324xf32>, vector<4x324xf32> -> vector<4x648xf32>
    %8 = vector.extract_strided_slice %1 {offsets = [0, 0, 0], sizes = [1, 8, 4], strides = [1, 1, 1]} : vector<9x8x4xf32> to vector<1x8x4xf32>
    %9 = vector.shape_cast %8 : vector<1x8x4xf32> to vector<8x4xf32>
    %cst_5 = arith.constant dense<0.000000e+00> : vector<8x648xf32>
    %10 = tpu.matmul %9, %7, %cst_5 {dimension_numbers = #tpu.dot_dimension_numbers<[1], [0], [0], [1], [0, 0, 1, 1], [], []>} : vector<8x4xf32>, vector<4x648xf32>, vector<8x648xf32> -> vector<8x648xf32>
    %11 = arith.addf %2, %10 : vector<8x648xf32>
    %12 = vector.extract_strided_slice %0 {offsets = [0, 0, 1], sizes = [1, 4, 324], strides = [1, 1, 1]} : vector<2x4x378xf32> to vector<1x4x324xf32>
    %13 = vector.shape_cast %12 : vector<1x4x324xf32> to vector<4x324xf32>
    %14 = vector.extract_strided_slice %0 {offsets = [1, 0, 1], sizes = [1, 4, 324], strides = [1, 1, 1]} : vector<2x4x378xf32> to vector<1x4x324xf32>
    %15 = vector.shape_cast %14 : vector<1x4x324xf32> to vector<4x324xf32>
    %16 = tpu.concatenate %13, %15 in 1 : vector<4x324xf32>, vector<4x324xf32> -> vector<4x648xf32>
    %17 = vector.extract_strided_slice %1 {offsets = [1, 0, 0], sizes = [1, 8, 4], strides = [1, 1, 1]} : vector<9x8x4xf32> to vector<1x8x4xf32>
    %18 = vector.shape_cast %17 : vector<1x8x4xf32> to vector<8x4xf32>
    %cst_6 = arith.constant dense<0.000000e+00> : vector<8x648xf32>
    %19 = tpu.matmul %18, %16, %cst_6 {dimension_numbers = #tpu.dot_dimension_numbers<[1], [0], [0], [1], [0, 0, 1, 1], [], []>} : vector<8x4xf32>, vector<4x648xf32>, vector<8x648xf32> -> vector<8x648xf32>
    %20 = arith.addf %11, %19 : vector<8x648xf32>
    %21 = vector.extract_strided_slice %0 {offsets = [0, 0, 2], sizes = [1, 4, 324], strides = [1, 1, 1]} : vector<2x4x378xf32> to vector<1x4x324xf32>
    %22 = vector.shape_cast %21 : vector<1x4x324xf32> to vector<4x324xf32>
    %23 = vector.extract_strided_slice %0 {offsets = [1, 0, 2], sizes = [1, 4, 324], strides = [1, 1, 1]} : vector<2x4x378xf32> to vector<1x4x324xf32>
    %24 = vector.shape_cast %23 : vector<1x4x324xf32> to vector<4x324xf32>
    %25 = tpu.concatenate %22, %24 in 1 : vector<4x324xf32>, vector<4x324xf32> -> vector<4x648xf32>
    %26 = vector.extract_strided_slice %1 {offsets = [2, 0, 0], sizes = [1, 8, 4], strides = [1, 1, 1]} : vector<9x8x4xf32> to vector<1x8x4xf32>
    %27 = vector.shape_cast %26 : vector<1x8x4xf32> to vector<8x4xf32>
    %cst_7 = arith.constant dense<0.000000e+00> : vector<8x648xf32>
    %28 = tpu.matmul %27, %25, %cst_7 {dimension_numbers = #tpu.dot_dimension_numbers<[1], [0], [0], [1], [0, 0, 1, 1], [], []>} : vector<8x4xf32>, vector<4x648xf32>, vector<8x648xf32> -> vector<8x648xf32>
    %29 = arith.addf %20, %28 : vector<8x648xf32>
    %30 = vector.extract_strided_slice %0 {offsets = [0, 0, 18], sizes = [1, 4, 324], strides = [1, 1, 1]} : vector<2x4x378xf32> to vector<1x4x324xf32>
    %31 = vector.shape_cast %30 : vector<1x4x324xf32> to vector<4x324xf32>
    %32 = vector.extract_strided_slice %0 {offsets = [1, 0, 18], sizes = [1, 4, 324], strides = [1, 1, 1]} : vector<2x4x378xf32> to vector<1x4x324xf32>
    %33 = vector.shape_cast %32 : vector<1x4x324xf32> to vector<4x324xf32>
    %34 = tpu.concatenate %31, %33 in 1 : vector<4x324xf32>, vector<4x324xf32> -> vector<4x648xf32>
    %35 = vector.extract_strided_slice %1 {offsets = [3, 0, 0], sizes = [1, 8, 4], strides = [1, 1, 1]} : vector<9x8x4xf32> to vector<1x8x4xf32>
    %36 = vector.shape_cast %35 : vector<1x8x4xf32> to vector<8x4xf32>
    %cst_8 = arith.constant dense<0.000000e+00> : vector<8x648xf32>
    %37 = tpu.matmul %36, %34, %cst_8 {dimension_numbers = #tpu.dot_dimension_numbers<[1], [0], [0], [1], [0, 0, 1, 1], [], []>} : vector<8x4xf32>, vector<4x648xf32>, vector<8x648xf32> -> vector<8x648xf32>
    %38 = arith.addf %29, %37 : vector<8x648xf32>
    %39 = vector.extract_strided_slice %0 {offsets = [0, 0, 19], sizes = [1, 4, 324], strides = [1, 1, 1]} : vector<2x4x378xf32> to vector<1x4x324xf32>
    %40 = vector.shape_cast %39 : vector<1x4x324xf32> to vector<4x324xf32>
    %41 = vector.extract_strided_slice %0 {offsets = [1, 0, 19], sizes = [1, 4, 324], strides = [1, 1, 1]} : vector<2x4x378xf32> to vector<1x4x324xf32>
    %42 = vector.shape_cast %41 : vector<1x4x324xf32> to vector<4x324xf32>
    %43 = tpu.concatenate %40, %42 in 1 : vector<4x324xf32>, vector<4x324xf32> -> vector<4x648xf32>
    %44 = vector.extract_strided_slice %1 {offsets = [4, 0, 0], sizes = [1, 8, 4], strides = [1, 1, 1]} : vector<9x8x4xf32> to vector<1x8x4xf32>
    %45 = vector.shape_cast %44 : vector<1x8x4xf32> to vector<8x4xf32>
    %cst_9 = arith.constant dense<0.000000e+00> : vector<8x648xf32>
    %46 = tpu.matmul %45, %43, %cst_9 {dimension_numbers = #tpu.dot_dimension_numbers<[1], [0], [0], [1], [0, 0, 1, 1], [], []>} : vector<8x4xf32>, vector<4x648xf32>, vector<8x648xf32> -> vector<8x648xf32>
    %47 = arith.addf %38, %46 : vector<8x648xf32>
    %48 = vector.extract_strided_slice %0 {offsets = [0, 0, 20], sizes = [1, 4, 324], strides = [1, 1, 1]} : vector<2x4x378xf32> to vector<1x4x324xf32>
    %49 = vector.shape_cast %48 : vector<1x4x324xf32> to vector<4x324xf32>
    %50 = vector.extract_strided_slice %0 {offsets = [1, 0, 20], sizes = [1, 4, 324], strides = [1, 1, 1]} : vector<2x4x378xf32> to vector<1x4x324xf32>
    %51 = vector.shape_cast %50 : vector<1x4x324xf32> to vector<4x324xf32>
    %52 = tpu.concatenate %49, %51 in 1 : vector<4x324xf32>, vector<4x324xf32> -> vector<4x648xf32>
    %53 = vector.extract_strided_slice %1 {offsets = [5, 0, 0], sizes = [1, 8, 4], strides = [1, 1, 1]} : vector<9x8x4xf32> to vector<1x8x4xf32>
    %54 = vector.shape_cast %53 : vector<1x8x4xf32> to vector<8x4xf32>
    %cst_10 = arith.constant dense<0.000000e+00> : vector<8x648xf32>
    %55 = tpu.matmul %54, %52, %cst_10 {dimension_numbers = #tpu.dot_dimension_numbers<[1], [0], [0], [1], [0, 0, 1, 1], [], []>} : vector<8x4xf32>, vector<4x648xf32>, vector<8x648xf32> -> vector<8x648xf32>
    %56 = arith.addf %47, %55 : vector<8x648xf32>
    %57 = vector.extract_strided_slice %0 {offsets = [0, 0, 36], sizes = [1, 4, 324], strides = [1, 1, 1]} : vector<2x4x378xf32> to vector<1x4x324xf32>
    %58 = vector.shape_cast %57 : vector<1x4x324xf32> to vector<4x324xf32>
    %59 = vector.extract_strided_slice %0 {offsets = [1, 0, 36], sizes = [1, 4, 324], strides = [1, 1, 1]} : vector<2x4x378xf32> to vector<1x4x324xf32>
    %60 = vector.shape_cast %59 : vector<1x4x324xf32> to vector<4x324xf32>
    %61 = tpu.concatenate %58, %60 in 1 : vector<4x324xf32>, vector<4x324xf32> -> vector<4x648xf32>
    %62 = vector.extract_strided_slice %1 {offsets = [6, 0, 0], sizes = [1, 8, 4], strides = [1, 1, 1]} : vector<9x8x4xf32> to vector<1x8x4xf32>
    %63 = vector.shape_cast %62 : vector<1x8x4xf32> to vector<8x4xf32>
    %cst_11 = arith.constant dense<0.000000e+00> : vector<8x648xf32>
    %64 = tpu.matmul %63, %61, %cst_11 {dimension_numbers = #tpu.dot_dimension_numbers<[1], [0], [0], [1], [0, 0, 1, 1], [], []>} : vector<8x4xf32>, vector<4x648xf32>, vector<8x648xf32> -> vector<8x648xf32>
    %65 = arith.addf %56, %64 : vector<8x648xf32>
    %66 = vector.extract_strided_slice %0 {offsets = [0, 0, 37], sizes = [1, 4, 324], strides = [1, 1, 1]} : vector<2x4x378xf32> to vector<1x4x324xf32>
    %67 = vector.shape_cast %66 : vector<1x4x324xf32> to vector<4x324xf32>
    %68 = vector.extract_strided_slice %0 {offsets = [1, 0, 37], sizes = [1, 4, 324], strides = [1, 1, 1]} : vector<2x4x378xf32> to vector<1x4x324xf32>
    %69 = vector.shape_cast %68 : vector<1x4x324xf32> to vector<4x324xf32>
    %70 = tpu.concatenate %67, %69 in 1 : vector<4x324xf32>, vector<4x324xf32> -> vector<4x648xf32>
    %71 = vector.extract_strided_slice %1 {offsets = [7, 0, 0], sizes = [1, 8, 4], strides = [1, 1, 1]} : vector<9x8x4xf32> to vector<1x8x4xf32>
    %72 = vector.shape_cast %71 : vector<1x8x4xf32> to vector<8x4xf32>
    %cst_12 = arith.constant dense<0.000000e+00> : vector<8x648xf32>
    %73 = tpu.matmul %72, %70, %cst_12 {dimension_numbers = #tpu.dot_dimension_numbers<[1], [0], [0], [1], [0, 0, 1, 1], [], []>} : vector<8x4xf32>, vector<4x648xf32>, vector<8x648xf32> -> vector<8x648xf32>
    %74 = arith.addf %65, %73 : vector<8x648xf32>
    %75 = vector.extract_strided_slice %0 {offsets = [0, 0, 38], sizes = [1, 4, 324], strides = [1, 1, 1]} : vector<2x4x378xf32> to vector<1x4x324xf32>
    %76 = vector.shape_cast %75 : vector<1x4x324xf32> to vector<4x324xf32>
    %77 = vector.extract_strided_slice %0 {offsets = [1, 0, 38], sizes = [1, 4, 324], strides = [1, 1, 1]} : vector<2x4x378xf32> to vector<1x4x324xf32>
    %78 = vector.shape_cast %77 : vector<1x4x324xf32> to vector<4x324xf32>
    %79 = tpu.concatenate %76, %78 in 1 : vector<4x324xf32>, vector<4x324xf32> -> vector<4x648xf32>
    %80 = vector.extract_strided_slice %1 {offsets = [8, 0, 0], sizes = [1, 8, 4], strides = [1, 1, 1]} : vector<9x8x4xf32> to vector<1x8x4xf32>
    %81 = vector.shape_cast %80 : vector<1x8x4xf32> to vector<8x4xf32>
    %cst_13 = arith.constant dense<0.000000e+00> : vector<8x648xf32>
    %82 = tpu.matmul %81, %79, %cst_13 {dimension_numbers = #tpu.dot_dimension_numbers<[1], [0], [0], [1], [0, 0, 1, 1], [], []>} : vector<8x4xf32>, vector<4x648xf32>, vector<8x648xf32> -> vector<8x648xf32>
    %83 = arith.addf %74, %82 : vector<8x648xf32>
    %c0_14 = arith.constant 0 : index
    %c0_15 = arith.constant 0 : index
    %84 = vector.load %arg2[%c0_14, %c0_15] : memref<8x1xf32, #tpu.memory_space<vmem>>, vector<8x1xf32>
    %85 = vector.broadcast %84 : vector<8x1xf32> to vector<8x648xf32>
    %86 = arith.addf %83, %85 : vector<8x648xf32>
    %87 = arith.negf %86 : vector<8x648xf32>
    %88 = math.exp %87 : vector<8x648xf32>
    %cst_16 = arith.constant 1.000000e+00 : f32
    %89 = vector.broadcast %cst_16 : f32 to vector<8x648xf32>
    %90 = arith.addf %89, %88 : vector<8x648xf32>
    %91 = arith.divf %89, %90 : vector<8x648xf32>
    %92 = vector.extract_strided_slice %91 {offsets = [0, 0], sizes = [1, 324], strides = [1, 1]} : vector<8x648xf32> to vector<1x324xf32>
    %c0_17 = arith.constant 0 : index
    %c0_18 = arith.constant 0 : index
    %93 = vector.load %arg8[%c0_17, %c0_18] : memref<2x2592xf32, #tpu.memory_space<vmem>>, vector<1x324xf32>
    tpu.vector_store %arg8[%c0_17, %c0_18], %92 {strides = array<i32>} : memref<2x2592xf32, #tpu.memory_space<vmem>>, vector<1x324xf32>,
    %94 = vector.extract_strided_slice %91 {offsets = [1, 0], sizes = [1, 324], strides = [1, 1]} : vector<8x648xf32> to vector<1x324xf32>
    %c0_19 = arith.constant 0 : index
    %c324 = arith.constant 324 : index
    %95 = vector.load %arg8[%c0_19, %c324] : memref<2x2592xf32, #tpu.memory_space<vmem>>, vector<1x324xf32>
    tpu.vector_store %arg8[%c0_19, %c324], %94 {strides = array<i32>} : memref<2x2592xf32, #tpu.memory_space<vmem>>, vector<1x324xf32>,
    %96 = vector.extract_strided_slice %91 {offsets = [2, 0], sizes = [1, 324], strides = [1, 1]} : vector<8x648xf32> to vector<1x324xf32>
    %c0_20 = arith.constant 0 : index
    %c648 = arith.constant 648 : index
    %97 = vector.load %arg8[%c0_20, %c648] : memref<2x2592xf32, #tpu.memory_space<vmem>>, vector<1x324xf32>
    tpu.vector_store %arg8[%c0_20, %c648], %96 {strides = array<i32>} : memref<2x2592xf32, #tpu.memory_space<vmem>>, vector<1x324xf32>,
    %98 = vector.extract_strided_slice %91 {offsets = [3, 0], sizes = [1, 324], strides = [1, 1]} : vector<8x648xf32> to vector<1x324xf32>
    %c0_21 = arith.constant 0 : index
    %c972 = arith.constant 972 : index
    %99 = vector.load %arg8[%c0_21, %c972] : memref<2x2592xf32, #tpu.memory_space<vmem>>, vector<1x324xf32>
    tpu.vector_store %arg8[%c0_21, %c972], %98 {strides = array<i32>} : memref<2x2592xf32, #tpu.memory_space<vmem>>, vector<1x324xf32>,
    %100 = vector.extract_strided_slice %91 {offsets = [4, 0], sizes = [1, 324], strides = [1, 1]} : vector<8x648xf32> to vector<1x324xf32>
    %c0_22 = arith.constant 0 : index
    %c1296 = arith.constant 1296 : index
    %101 = vector.load %arg8[%c0_22, %c1296] : memref<2x2592xf32, #tpu.memory_space<vmem>>, vector<1x324xf32>
    tpu.vector_store %arg8[%c0_22, %c1296], %100 {strides = array<i32>} : memref<2x2592xf32, #tpu.memory_space<vmem>>, vector<1x324xf32>,
    %102 = vector.extract_strided_slice %91 {offsets = [5, 0], sizes = [1, 324], strides = [1, 1]} : vector<8x648xf32> to vector<1x324xf32>
    %c0_23 = arith.constant 0 : index
    %c1620 = arith.constant 1620 : index
    %103 = vector.load %arg8[%c0_23, %c1620] : memref<2x2592xf32, #tpu.memory_space<vmem>>, vector<1x324xf32>
    tpu.vector_store %arg8[%c0_23, %c1620], %102 {strides = array<i32>} : memref<2x2592xf32, #tpu.memory_space<vmem>>, vector<1x324xf32>,
    %104 = vector.extract_strided_slice %91 {offsets = [6, 0], sizes = [1, 324], strides = [1, 1]} : vector<8x648xf32> to vector<1x324xf32>
    %c0_24 = arith.constant 0 : index
    %c1944 = arith.constant 1944 : index
    %105 = vector.load %arg8[%c0_24, %c1944] : memref<2x2592xf32, #tpu.memory_space<vmem>>, vector<1x324xf32>
    tpu.vector_store %arg8[%c0_24, %c1944], %104 {strides = array<i32>} : memref<2x2592xf32, #tpu.memory_space<vmem>>, vector<1x324xf32>,
    %106 = vector.extract_strided_slice %91 {offsets = [7, 0], sizes = [1, 324], strides = [1, 1]} : vector<8x648xf32> to vector<1x324xf32>
    %c0_25 = arith.constant 0 : index
    %c2268 = arith.constant 2268 : index
    %107 = vector.load %arg8[%c0_25, %c2268] : memref<2x2592xf32, #tpu.memory_space<vmem>>, vector<1x324xf32>
    tpu.vector_store %arg8[%c0_25, %c2268], %106 {strides = array<i32>} : memref<2x2592xf32, #tpu.memory_space<vmem>>, vector<1x324xf32>,
    %108 = vector.extract_strided_slice %91 {offsets = [0, 324], sizes = [1, 324], strides = [1, 1]} : vector<8x648xf32> to vector<1x324xf32>
    %c1 = arith.constant 1 : index
    %c0_26 = arith.constant 0 : index
    %109 = vector.load %arg8[%c1, %c0_26] : memref<2x2592xf32, #tpu.memory_space<vmem>>, vector<1x324xf32>
    tpu.vector_store %arg8[%c1, %c0_26], %108 {strides = array<i32>} : memref<2x2592xf32, #tpu.memory_space<vmem>>, vector<1x324xf32>,
    %110 = vector.extract_strided_slice %91 {offsets = [1, 324], sizes = [1, 324], strides = [1, 1]} : vector<8x648xf32> to vector<1x324xf32>
    %c1_27 = arith.constant 1 : index
    %c324_28 = arith.constant 324 : index
    %111 = vector.load %arg8[%c1_27, %c324_28] : memref<2x2592xf32, #tpu.memory_space<vmem>>, vector<1x324xf32>
    tpu.vector_store %arg8[%c1_27, %c324_28], %110 {strides = array<i32>} : memref<2x2592xf32, #tpu.memory_space<vmem>>, vector<1x324xf32>,
    %112 = vector.extract_strided_slice %91 {offsets = [2, 324], sizes = [1, 324], strides = [1, 1]} : vector<8x648xf32> to vector<1x324xf32>
    %c1_29 = arith.constant 1 : index
    %c648_30 = arith.constant 648 : index
    %113 = vector.load %arg8[%c1_29, %c648_30] : memref<2x2592xf32, #tpu.memory_space<vmem>>, vector<1x324xf32>
    tpu.vector_store %arg8[%c1_29, %c648_30], %112 {strides = array<i32>} : memref<2x2592xf32, #tpu.memory_space<vmem>>, vector<1x324xf32>,
    %114 = vector.extract_strided_slice %91 {offsets = [3, 324], sizes = [1, 324], strides = [1, 1]} : vector<8x648xf32> to vector<1x324xf32>
    %c1_31 = arith.constant 1 : index
    %c972_32 = arith.constant 972 : index
    %115 = vector.load %arg8[%c1_31, %c972_32] : memref<2x2592xf32, #tpu.memory_space<vmem>>, vector<1x324xf32>
    tpu.vector_store %arg8[%c1_31, %c972_32], %114 {strides = array<i32>} : memref<2x2592xf32, #tpu.memory_space<vmem>>, vector<1x324xf32>,
    %116 = vector.extract_strided_slice %91 {offsets = [4, 324], sizes = [1, 324], strides = [1, 1]} : vector<8x648xf32> to vector<1x324xf32>
    %c1_33 = arith.constant 1 : index
    %c1296_34 = arith.constant 1296 : index
    %117 = vector.load %arg8[%c1_33, %c1296_34] : memref<2x2592xf32, #tpu.memory_space<vmem>>, vector<1x324xf32>
    tpu.vector_store %arg8[%c1_33, %c1296_34], %116 {strides = array<i32>} : memref<2x2592xf32, #tpu.memory_space<vmem>>, vector<1x324xf32>,
    %118 = vector.extract_strided_slice %91 {offsets = [5, 324], sizes = [1, 324], strides = [1, 1]} : vector<8x648xf32> to vector<1x324xf32>
    %c1_35 = arith.constant 1 : index
    %c1620_36 = arith.constant 1620 : index
    %119 = vector.load %arg8[%c1_35, %c1620_36] : memref<2x2592xf32, #tpu.memory_space<vmem>>, vector<1x324xf32>
    tpu.vector_store %arg8[%c1_35, %c1620_36], %118 {strides = array<i32>} : memref<2x2592xf32, #tpu.memory_space<vmem>>, vector<1x324xf32>,
    %120 = vector.extract_strided_slice %91 {offsets = [6, 324], sizes = [1, 324], strides = [1, 1]} : vector<8x648xf32> to vector<1x324xf32>
    %c1_37 = arith.constant 1 : index
    %c1944_38 = arith.constant 1944 : index
    %121 = vector.load %arg8[%c1_37, %c1944_38] : memref<2x2592xf32, #tpu.memory_space<vmem>>, vector<1x324xf32>
    tpu.vector_store %arg8[%c1_37, %c1944_38], %120 {strides = array<i32>} : memref<2x2592xf32, #tpu.memory_space<vmem>>, vector<1x324xf32>,
    %122 = vector.extract_strided_slice %91 {offsets = [7, 324], sizes = [1, 324], strides = [1, 1]} : vector<8x648xf32> to vector<1x324xf32>
    %c1_39 = arith.constant 1 : index
    %c2268_40 = arith.constant 2268 : index
    %123 = vector.load %arg8[%c1_39, %c2268_40] : memref<2x2592xf32, #tpu.memory_space<vmem>>, vector<1x324xf32>
    tpu.vector_store %arg8[%c1_39, %c2268_40], %122 {strides = array<i32>} : memref<2x2592xf32, #tpu.memory_space<vmem>>, vector<1x324xf32>,
    %c0_41 = arith.constant 0 : index
    %c0_42 = arith.constant 0 : index
    %124 = vector.load %arg8[%c0_41, %c0_42] : memref<2x2592xf32, #tpu.memory_space<vmem>>, vector<2x2592xf32>
    %c0_43 = arith.constant 0 : index
    %c0_44 = arith.constant 0 : index
    %125 = vector.load %arg3[%c0_43, %c0_44] : memref<2592x32xf32, #tpu.memory_space<vmem>>, vector<2592x32xf32>
    %cst_45 = arith.constant dense<0.000000e+00> : vector<2x32xf32>
    %126 = tpu.matmul %124, %125, %cst_45 {dimension_numbers = #tpu.dot_dimension_numbers<[1], [0], [0], [1], [0, 0, 1, 1], [], []>} : vector<2x2592xf32>, vector<2592x32xf32>, vector<2x32xf32> -> vector<2x32xf32>
    %c0_46 = arith.constant 0 : index
    %c0_47 = arith.constant 0 : index
    %127 = vector.load %arg4[%c0_46, %c0_47] : memref<1x32xf32, #tpu.memory_space<vmem>>, vector<1x32xf32>
    %128 = vector.broadcast %127 : vector<1x32xf32> to vector<2x32xf32>
    %129 = arith.addf %126, %128 : vector<2x32xf32>
    %130 = arith.negf %129 : vector<2x32xf32>
    %131 = math.exp %130 : vector<2x32xf32>
    %cst_48 = arith.constant 1.000000e+00 : f32
    %132 = vector.broadcast %cst_48 : f32 to vector<2x32xf32>
    %133 = arith.addf %132, %131 : vector<2x32xf32>
    %134 = arith.divf %132, %133 : vector<2x32xf32>
    %c0_49 = arith.constant 0 : index
    %c0_50 = arith.constant 0 : index
    %135 = vector.load %arg5[%c0_49, %c0_50] : memref<32x10xf32, #tpu.memory_space<vmem>>, vector<32x10xf32>
    %cst_51 = arith.constant dense<0.000000e+00> : vector<2x10xf32>
    %136 = tpu.matmul %134, %135, %cst_51 {dimension_numbers = #tpu.dot_dimension_numbers<[1], [0], [0], [1], [0, 0, 1, 1], [], []>} : vector<2x32xf32>, vector<32x10xf32>, vector<2x10xf32> -> vector<2x10xf32>
    %c0_52 = arith.constant 0 : index
    %c0_53 = arith.constant 0 : index
    %137 = vector.load %arg6[%c0_52, %c0_53] : memref<1x10xf32, #tpu.memory_space<vmem>>, vector<1x10xf32>
    %138 = vector.broadcast %137 : vector<1x10xf32> to vector<2x10xf32>
    %139 = arith.addf %136, %138 : vector<2x10xf32>
    %c0_54 = arith.constant 0 : index
    %c0_55 = arith.constant 0 : index
    %140 = vector.load %arg7[%c0_54, %c0_55] : memref<2x10xf32, #tpu.memory_space<vmem>>, vector<2x10xf32>
    tpu.vector_store %arg7[%c0_54, %c0_55], %139 {strides = array<i32>} : memref<2x10xf32, #tpu.memory_space<vmem>>, vector<2x10xf32>,
    return
  }
}

</mosaic_0001>

<llo_original>
// kernel: cnn_forward.1
$region0: #{cnn_forward.1}
  #allocation0 [shape = 'u32[]', space=smem, size = 0x4, offset = 0x4, fixed_abs, tag = 'smem constant byte address 0x4 - core index']
  #allocation1 [shape = 'u32[144,128]{1,0:T(1,128)}', space=vmem, size = 0x12000, scoped, tag = 'internal scratch']
  #allocation2 [shape = 'f32[2,2592]{1,0:T(2,128)}', space=vmem, size = 0x5400, scoped, tag = 'scratch operand']
  %s0 = inlined_call_operand.vmem [shape: f32[2,4,378], index: 0, kind: input, shape index: {}]
  %s1 = inlined_call_operand.vmem [shape: f32[9,8,4], index: 1, kind: input, shape index: {}]
  %s2 = inlined_call_operand.vmem [shape: f32[8,1], index: 2, kind: input, shape index: {}]
  %s3 = inlined_call_operand.vmem [shape: f32[2592,32], index: 3, kind: input, shape index: {}]
  %s4 = inlined_call_operand.vmem [shape: f32[1,32], index: 4, kind: input, shape index: {}]
  %s5 = inlined_call_operand.vmem [shape: f32[32,10], index: 5, kind: input, shape index: {}]
  %s6 = inlined_call_operand.vmem [shape: f32[1,10], index: 6, kind: input, shape index: {}]
  %s7 = inlined_call_operand.hbm [shape: f32[2,10], index: 7, kind: output, shape index: {}]
  %s8 = sld [smem:[#allocation0]]
  $region38: #{cnn_forward.1} parent=0
    _
  %s10 = ssub.s32 1, %s8
  %s11 = scalar_select 0, %s10, %s8
  $region1: #{cnn_forward.1} parent=0
    #allocation3 [shape = 'u8[1024]{0}', space=vmem, size = 0x400, scoped, tag = 'output window, operand 0, single buffered']
    #allocation4 [shape = 's32[1]{0}', space=sflag, size = 0x4, scoped, tag = 'scoped memory for cnn_forward.1']
    %12 = vsyncpa [#allocation4], 0
    // Predicated region
    $region2: #{cnn_forward.1} parent=1 // pred_check
      _
    $region3: #{cnn_forward.1} parent=1 // pred_check_branch
      %14 = sbr.rel (0) target = $region5
    $region4: #{cnn_forward.1} parent=1 // pred_region
      _
    $region5: #{cnn_forward.1} parent=1 // pred_fallthru
      _
    // Predicated region
    $region6: #{cnn_forward.1} parent=1 // pred_check
      _
    $region7: #{cnn_forward.1} parent=1 // pred_check_branch
      %16 = sbr.rel (0) target = $region9
    $region8: #{cnn_forward.1} parent=1 // pred_region
      _
    $region9: #{cnn_forward.1} parent=1 // pred_fallthru
      _
    // Predicated region
    $region10: #{cnn_forward.1} parent=1 // pred_check
      _
    $region11: #{cnn_forward.1} parent=1 // pred_check_branch
      %18 = sbr.rel (0) target = $region13
    $region12: #{cnn_forward.1} parent=1 // pred_region
      _
    $region13: #{cnn_forward.1} parent=1 // pred_fallthru
      _
    // Predicated region
    $region14: #{cnn_forward.1} parent=1 // pred_check
      _
    $region15: #{cnn_forward.1} parent=1 // pred_check_branch
      %20 = sbr.rel (0) target = $region17
    $region16: #{cnn_forward.1} parent=1 // pred_region
      _
    $region17: #{cnn_forward.1} parent=1 // pred_fallthru
      _
    // Predicated region
    $region18: #{cnn_forward.1} parent=1 // pred_check
      _
    $region19: #{cnn_forward.1} parent=1 // pred_check_branch
      %22 = sbr.rel (0) target = $region21
    $region20: #{cnn_forward.1} parent=1 // pred_region
      _
    $region21: #{cnn_forward.1} parent=1 // pred_fallthru
      _
    // Predicated region
    $region22: #{cnn_forward.1} parent=1 // pred_check
      _
    $region23: #{cnn_forward.1} parent=1 // pred_check_branch
      %24 = sbr.rel (0) target = $region25
    $region24: #{cnn_forward.1} parent=1 // pred_region
      _
    $region25: #{cnn_forward.1} parent=1 // pred_fallthru
      _
    // Predicated region
    $region26: #{cnn_forward.1} parent=1 // pred_check
      _
    $region27: #{cnn_forward.1} parent=1 // pred_check_branch
      %26 = sbr.rel (0) target = $region29
    $region28: #{cnn_forward.1} parent=1 // pred_region
      _
    $region29: #{cnn_forward.1} parent=1 // pred_fallthru
      _
    %v27 = vld [vmem:[%s0] sm:$0xff]
    %v28 = vld [vmem:[%s0 + $0x8] sm:$0xf]
    %v29 = vld [vmem:[%s0 + $0xc] sm:$0xff]
    %v30 = vld [vmem:[%s0 + $0x14] sm:$0xf]
    %v31 = vld [vmem:[%s1] sm:$0xff]
    %v32 = vld [vmem:[%s1 + $0x8] sm:$0xff]
    %v33 = vld [vmem:[%s1 + $0x10] sm:$0xff]
    %v34 = vld [vmem:[%s1 + $0x18] sm:$0xff]
    %v35 = vld [vmem:[%s1 + $0x20] sm:$0xff]
    %v36 = vld [vmem:[%s1 + $0x28] sm:$0xff]
    %v37 = vld [vmem:[%s1 + $0x30] sm:$0xff]
    %v38 = vld [vmem:[%s1 + $0x38] sm:$0xff]
    %v39 = vld [vmem:[%s1 + $0x40] sm:$0xff]
    %v42 = vcombine.high %v27, %v27
    %v45 = vcombine.high %v29, %v29
    %46 = vrot.lane.b32.xlu0 %v29, 68
    %v47 = vpop.permute.xlu0 %46
    %48 = vrot.lane.b32.xlu0 %v45, 68
    %v49 = vpop.permute.xlu0 %48
    %50 = vrot.lane.b32.xlu0 %v30, 68
    %v51 = vpop.permute.xlu0 %50
    %vm52 = vcmask 556032
    %v53 = vsel %vm52, %v47, %v49
    %v54 = vsel %vm52, %v49, %v51
    %v56 = vsel %vm52, %v28, %v47
    %57 = vrot.lane.b32.xlu0 %v27, 127
    %v58 = vpop.permute.xlu0 %57
    %59 = vrot.lane.b32.xlu0 %v42, 127
    %v60 = vpop.permute.xlu0 %59
    %61 = vrot.lane.b32.xlu0 %v28, 127
    %v62 = vpop.permute.xlu0 %61
    %vm63 = vcmask 1039360
    %v64 = vsel %vm63, %v58, %v60
    %v65 = vsel %vm63, %v60, %v62
    %67 = vrot.lane.b32.xlu0 %v29, 67
    %v68 = vpop.permute.xlu0 %67
    %69 = vrot.lane.b32.xlu0 %v45, 67
    %v70 = vpop.permute.xlu0 %69
    %71 = vrot.lane.b32.xlu0 %v30, 67
    %v72 = vpop.permute.xlu0 %71
    %vm73 = vcmask 547840
    %v74 = vsel %vm73, %v68, %v70
    %v75 = vsel %vm73, %v70, %v72
    %v77 = vsel %vm52, %v62, %v68
    %vm78 = vcmask 31744
    %v80 = vsel %vm78, %v32, 0
    %vm82 = vcmask 1043456
    %v83 = vsel %vm82, %v64, 0
    %v85 = vsel %vm82, %v65, 0
    %v88 = vsel %vm82, %v77, 0
    %v90 = vsel %vm82, %v74, 0
    %v92 = vsel %vm82, %v75, 0
    %v94 = vsel %vm82, %v72, 0
    %96 = vmatprep.subr.mxu0 %v85
    %97 = vmatpush1.msra.mxu0 %v83
    %98 = vmatprep.subr.mxu0 0.0
    %99 = vmatpush1.msra.mxu0 0.0
    %100 = vmatprep.subr.mxu0 0.0
    %101 = vmatpush1.msra.mxu0 0.0
    %102 = vmatprep.subr.mxu0 0.0
    %103 = vmatpush1.msra.mxu0 0.0
    %104 = vmatprep.subr.mxu0 0.0
    %105 = vmatpush1.msra.mxu0 0.0
    %106 = vmatprep.subr.mxu0 0.0
    %107 = vmatpush1.msra.mxu0 0.0
    %108 = vmatprep.subr.mxu0 0.0
    %109 = vmatpush1.msra.mxu0 0.0
    %110 = vmatprep.subr.mxu0 0.0
    %111 = vmatpush1.msra.mxu0 0.0
    %112 = vmatprep.subr.mxu0 0.0
    %113 = vmatpush1.msra.mxu0 0.0
    %114 = vmatprep.subr.mxu0 0.0
    %115 = vmatpush1.msra.mxu0 0.0
    %116 = vmatprep.subr.mxu0 0.0
    %117 = vmatpush1.msra.mxu0 0.0
    %118 = vmatprep.subr.mxu0 0.0
    %119 = vmatpush1.msra.mxu0 0.0
    %120 = vmatprep.subr.mxu0 0.0
    %121 = vmatpush1.msra.mxu0 0.0
    %122 = vmatprep.subr.mxu0 0.0
    %123 = vmatpush1.msra.mxu0 0.0
    %124 = vmatprep.subr.mxu0 0.0
    %125 = vmatpush1.msra.mxu0 0.0
    %126 = vmatprep.subr.mxu0 0.0
    %127 = vmatpush1.msra.mxu0 0.0
    %128 = vmatprep.subr.mxu0 0.0
    %129 = vmatpush1.msra.mxu0 0.0
    %130 = vmatprep.subr.mxu0 0.0
    %131 = vmatpush1.msra.mxu0 0.0
    %132 = vmatprep.subr.mxu0 0.0
    %133 = vmatpush1.msra.mxu0 0.0
    %134 = vmatprep.subr.mxu0 0.0
    %135 = vmatpush1.msra.mxu0 0.0
    %136 = vmatprep.subr.mxu0 0.0
    %137 = vmatpush1.msra.mxu0 0.0
    %138 = vmatprep.subr.mxu0 0.0
    %139 = vmatpush1.msra.mxu0 0.0
    %140 = vmatprep.subr.mxu0 0.0
    %141 = vmatpush1.msra.mxu0 0.0
    %142 = vmatprep.subr.mxu0 0.0
    %143 = vmatpush1.msra.mxu0 0.0
    %144 = vmatprep.subr.mxu0 0.0
    %145 = vmatpush1.msra.mxu0 0.0
    %146 = vmatprep.subr.mxu0 0.0
    %147 = vmatpush1.msra.mxu0 0.0
    %148 = vmatprep.subr.mxu0 0.0
    %149 = vmatpush1.msra.mxu0 0.0
    %150 = vmatprep.subr.mxu0 0.0
    %151 = vmatpush1.msra.mxu0 0.0
    %152 = vmatprep.subr.mxu0 0.0
    %153 = vmatpush1.msra.mxu0 0.0
    %154 = vmatprep.subr.mxu0 0.0
    %155 = vmatpush1.msra.mxu0 0.0
    %156 = vmatprep.subr.mxu0 0.0
    %157 = vmatpush1.msra.mxu0 0.0
    %158 = vmatprep.subr.mxu0 0.0
    %159 = vmatpush1.msra.mxu0 0.0
    %160 = vmatprep.mubr.f32.mxu0 0.0
    %161 = vmatmul.mubr.f32.gmra.mrb[0].mxu0 %v80
    %v162 = vpop.f32.mrb[0].mxu0
    %v163 = vadd.f32 0.0, %v162
    %v164 = vpop.f32.mrb[0].mxu0
    %v165 = vadd.f32 0.0, %v164
    %166 = vdwg.mxu0
    %167 = vmatprep.subr.mxu0 %v90
    %168 = vmatpush1.msra.mxu0 %v88
    %169 = vmatprep.subr.mxu0 0.0
    %170 = vmatpush1.msra.mxu0 0.0
    %171 = vmatprep.subr.mxu0 0.0
    %172 = vmatpush1.msra.mxu0 0.0
    %173 = vmatprep.subr.mxu0 0.0
    %174 = vmatpush1.msra.mxu0 0.0
    %175 = vmatprep.subr.mxu0 0.0
    %176 = vmatpush1.msra.mxu0 0.0
    %177 = vmatprep.subr.mxu0 0.0
    %178 = vmatpush1.msra.mxu0 0.0
    %179 = vmatprep.subr.mxu0 0.0
    %180 = vmatpush1.msra.mxu0 0.0
    %181 = vmatprep.subr.mxu0 0.0
    %182 = vmatpush1.msra.mxu0 0.0
    %183 = vmatprep.subr.mxu0 0.0
    %184 = vmatpush1.msra.mxu0 0.0
    %185 = vmatprep.subr.mxu0 0.0
    %186 = vmatpush1.msra.mxu0 0.0
    %187 = vmatprep.subr.mxu0 0.0
    %188 = vmatpush1.msra.mxu0 0.0
    %189 = vmatprep.subr.mxu0 0.0
    %190 = vmatpush1.msra.mxu0 0.0
    %191 = vmatprep.subr.mxu0 0.0
    %192 = vmatpush1.msra.mxu0 0.0
    %193 = vmatprep.subr.mxu0 0.0
    %194 = vmatpush1.msra.mxu0 0.0
    %195 = vmatprep.subr.mxu0 0.0
    %196 = vmatpush1.msra.mxu0 0.0
    %197 = vmatprep.subr.mxu0 0.0
    %198 = vmatpush1.msra.mxu0 0.0
    %199 = vmatprep.subr.mxu0 0.0
    %200 = vmatpush1.msra.mxu0 0.0
    %201 = vmatprep.subr.mxu0 0.0
    %202 = vmatpush1.msra.mxu0 0.0
    %203 = vmatprep.subr.mxu0 0.0
    %204 = vmatpush1.msra.mxu0 0.0
    %205 = vmatprep.subr.mxu0 0.0
    %206 = vmatpush1.msra.mxu0 0.0
    %207 = vmatprep.subr.mxu0 0.0
    %208 = vmatpush1.msra.mxu0 0.0
    %209 = vmatprep.subr.mxu0 0.0
    %210 = vmatpush1.msra.mxu0 0.0
    %211 = vmatprep.subr.mxu0 0.0
    %212 = vmatpush1.msra.mxu0 0.0
    %213 = vmatprep.subr.mxu0 0.0
    %214 = vmatpush1.msra.mxu0 0.0
    %215 = vmatprep.subr.mxu0 0.0
    %216 = vmatpush1.msra.mxu0 0.0
    %217 = vmatprep.subr.mxu0 0.0
    %218 = vmatpush1.msra.mxu0 0.0
    %219 = vmatprep.subr.mxu0 0.0
    %220 = vmatpush1.msra.mxu0 0.0
    %221 = vmatprep.subr.mxu0 0.0
    %222 = vmatpush1.msra.mxu0 0.0
    %223 = vmatprep.subr.mxu0 0.0
    %224 = vmatpush1.msra.mxu0 0.0
    %225 = vmatprep.subr.mxu0 0.0
    %226 = vmatpush1.msra.mxu0 0.0
    %227 = vmatprep.subr.mxu0 0.0
    %228 = vmatpush1.msra.mxu0 0.0
    %229 = vmatprep.subr.mxu0 0.0
    %230 = vmatpush1.msra.mxu0 0.0
    %231 = vmatprep.mubr.f32.mxu0 0.0
    %232 = vmatmul.mubr.f32.gmra.mrb[0].mxu0 %v80
    %v233 = vpop.f32.mrb[0].mxu0
    %v234 = vadd.f32 0.0, %v233
    %v235 = vpop.f32.mrb[0].mxu0
    %v236 = vadd.f32 0.0, %v235
    %237 = vdwg.mxu0
    %238 = vmatprep.subr.mxu0 %v94
    %239 = vmatpush1.msra.mxu0 %v92
    %240 = vmatprep.subr.mxu0 0.0
    %241 = vmatpush1.msra.mxu0 0.0
    %242 = vmatprep.subr.mxu0 0.0
    %243 = vmatpush1.msra.mxu0 0.0
    %244 = vmatprep.subr.mxu0 0.0
    %245 = vmatpush1.msra.mxu0 0.0
    %246 = vmatprep.subr.mxu0 0.0
    %247 = vmatpush1.msra.mxu0 0.0
    %248 = vmatprep.subr.mxu0 0.0
    %249 = vmatpush1.msra.mxu0 0.0
    %250 = vmatprep.subr.mxu0 0.0
    %251 = vmatpush1.msra.mxu0 0.0
    %252 = vmatprep.subr.mxu0 0.0
    %253 = vmatpush1.msra.mxu0 0.0
    %254 = vmatprep.subr.mxu0 0.0
    %255 = vmatpush1.msra.mxu0 0.0
    %256 = vmatprep.subr.mxu0 0.0
    %257 = vmatpush1.msra.mxu0 0.0
    %258 = vmatprep.subr.mxu0 0.0
    %259 = vmatpush1.msra.mxu0 0.0
    %260 = vmatprep.subr.mxu0 0.0
    %261 = vmatpush1.msra.mxu0 0.0
    %262 = vmatprep.subr.mxu0 0.0
    %263 = vmatpush1.msra.mxu0 0.0
    %264 = vmatprep.subr.mxu0 0.0
    %265 = vmatpush1.msra.mxu0 0.0
    %266 = vmatprep.subr.mxu0 0.0
    %267 = vmatpush1.msra.mxu0 0.0
    %268 = vmatprep.subr.mxu0 0.0
    %269 = vmatpush1.msra.mxu0 0.0
    %270 = vmatprep.subr.mxu0 0.0
    %271 = vmatpush1.msra.mxu0 0.0
    %272 = vmatprep.subr.mxu0 0.0
    %273 = vmatpush1.msra.mxu0 0.0
    %274 = vmatprep.subr.mxu0 0.0
    %275 = vmatpush1.msra.mxu0 0.0
    %276 = vmatprep.subr.mxu0 0.0
    %277 = vmatpush1.msra.mxu0 0.0
    %278 = vmatprep.subr.mxu0 0.0
    %279 = vmatpush1.msra.mxu0 0.0
    %280 = vmatprep.subr.mxu0 0.0
    %281 = vmatpush1.msra.mxu0 0.0
    %282 = vmatprep.subr.mxu0 0.0
    %283 = vmatpush1.msra.mxu0 0.0
    %284 = vmatprep.subr.mxu0 0.0
    %285 = vmatpush1.msra.mxu0 0.0
    %286 = vmatprep.subr.mxu0 0.0
    %287 = vmatpush1.msra.mxu0 0.0
    %288 = vmatprep.subr.mxu0 0.0
    %289 = vmatpush1.msra.mxu0 0.0
    %290 = vmatprep.subr.mxu0 0.0
    %291 = vmatpush1.msra.mxu0 0.0
    %292 = vmatprep.subr.mxu0 0.0
    %293 = vmatpush1.msra.mxu0 0.0
    %294 = vmatprep.subr.mxu0 0.0
    %295 = vmatpush1.msra.mxu0 0.0
    %296 = vmatprep.subr.mxu0 0.0
    %297 = vmatpush1.msra.mxu0 0.0
    %298 = vmatprep.subr.mxu0 0.0
    %299 = vmatpush1.msra.mxu0 0.0
    %300 = vmatprep.subr.mxu0 0.0
    %301 = vmatpush1.msra.mxu0 0.0
    %302 = vmatprep.mubr.f32.mxu0 0.0
    %303 = vmatmul.mubr.f32.gmra.mrb[0].mxu0 %v80
    %v304 = vpop.f32.mrb[0].mxu0
    %v305 = vadd.f32 0.0, %v304
    %v306 = vpop.f32.mrb[0].mxu0
    %v307 = vadd.f32 0.0, %v306
    %308 = vdwg.mxu0
    %v310 = vsel %vm78, %v31, 0
    %v312 = vsel %vm82, %v27, 0
    %v314 = vsel %vm82, %v42, 0
    %v317 = vsel %vm82, %v56, 0
    %v319 = vsel %vm82, %v53, 0
    %v321 = vsel %vm82, %v54, 0
    %v323 = vsel %vm82, %v51, 0
    %325 = vmatprep.subr.mxu0 %v314
    %326 = vmatpush1.msra.mxu0 %v312
    %327 = vmatprep.subr.mxu0 0.0
    %328 = vmatpush1.msra.mxu0 0.0
    %329 = vmatprep.subr.mxu0 0.0
    %330 = vmatpush1.msra.mxu0 0.0
    %331 = vmatprep.subr.mxu0 0.0
    %332 = vmatpush1.msra.mxu0 0.0
    %333 = vmatprep.subr.mxu0 0.0
    %334 = vmatpush1.msra.mxu0 0.0
    %335 = vmatprep.subr.mxu0 0.0
    %336 = vmatpush1.msra.mxu0 0.0
    %337 = vmatprep.subr.mxu0 0.0
    %338 = vmatpush1.msra.mxu0 0.0
    %339 = vmatprep.subr.mxu0 0.0
    %340 = vmatpush1.msra.mxu0 0.0
    %341 = vmatprep.subr.mxu0 0.0
    %342 = vmatpush1.msra.mxu0 0.0
    %343 = vmatprep.subr.mxu0 0.0
    %344 = vmatpush1.msra.mxu0 0.0
    %345 = vmatprep.subr.mxu0 0.0
    %346 = vmatpush1.msra.mxu0 0.0
    %347 = vmatprep.subr.mxu0 0.0
    %348 = vmatpush1.msra.mxu0 0.0
    %349 = vmatprep.subr.mxu0 0.0
    %350 = vmatpush1.msra.mxu0 0.0
    %351 = vmatprep.subr.mxu0 0.0
    %352 = vmatpush1.msra.mxu0 0.0
    %353 = vmatprep.subr.mxu0 0.0
    %354 = vmatpush1.msra.mxu0 0.0
    %355 = vmatprep.subr.mxu0 0.0
    %356 = vmatpush1.msra.mxu0 0.0
    %357 = vmatprep.subr.mxu0 0.0
    %358 = vmatpush1.msra.mxu0 0.0
    %359 = vmatprep.subr.mxu0 0.0
    %360 = vmatpush1.msra.mxu0 0.0
    %361 = vmatprep.subr.mxu0 0.0
    %362 = vmatpush1.msra.mxu0 0.0
    %363 = vmatprep.subr.mxu0 0.0
    %364 = vmatpush1.msra.mxu0 0.0
    %365 = vmatprep.subr.mxu0 0.0
    %366 = vmatpush1.msra.mxu0 0.0
    %367 = vmatprep.subr.mxu0 0.0
    %368 = vmatpush1.msra.mxu0 0.0
    %369 = vmatprep.subr.mxu0 0.0
    %370 = vmatpush1.msra.mxu0 0.0
    %371 = vmatprep.subr.mxu0 0.0
    %372 = vmatpush1.msra.mxu0 0.0
    %373 = vmatprep.subr.mxu0 0.0
    %374 = vmatpush1.msra.mxu0 0.0
    %375 = vmatprep.subr.mxu0 0.0
    %376 = vmatpush1.msra.mxu0 0.0
    %377 = vmatprep.subr.mxu0 0.0
    %378 = vmatpush1.msra.mxu0 0.0
    %379 = vmatprep.subr.mxu0 0.0
    %380 = vmatpush1.msra.mxu0 0.0
    %381 = vmatprep.subr.mxu0 0.0
    %382 = vmatpush1.msra.mxu0 0.0
    %383 = vmatprep.subr.mxu0 0.0
    %384 = vmatpush1.msra.mxu0 0.0
    %385 = vmatprep.subr.mxu0 0.0
    %386 = vmatpush1.msra.mxu0 0.0
    %387 = vmatprep.subr.mxu0 0.0
    %388 = vmatpush1.msra.mxu0 0.0
    %389 = vmatprep.mubr.f32.mxu0 0.0
    %390 = vmatmul.mubr.f32.gmra.mrb[0].mxu0 %v310
    %v391 = vpop.f32.mrb[0].mxu0
    %v392 = vadd.f32 %v163, %v391
    %v393 = vpop.f32.mrb[0].mxu0
    %v394 = vadd.f32 %v165, %v393
    %395 = vdwg.mxu0
    %396 = vmatprep.subr.mxu0 %v319
    %397 = vmatpush1.msra.mxu0 %v317
    %398 = vmatprep.subr.mxu0 0.0
    %399 = vmatpush1.msra.mxu0 0.0
    %400 = vmatprep.subr.mxu0 0.0
    %401 = vmatpush1.msra.mxu0 0.0
    %402 = vmatprep.subr.mxu0 0.0
    %403 = vmatpush1.msra.mxu0 0.0
    %404 = vmatprep.subr.mxu0 0.0
    %405 = vmatpush1.msra.mxu0 0.0
    %406 = vmatprep.subr.mxu0 0.0
    %407 = vmatpush1.msra.mxu0 0.0
    %408 = vmatprep.subr.mxu0 0.0
    %409 = vmatpush1.msra.mxu0 0.0
    %410 = vmatprep.subr.mxu0 0.0
    %411 = vmatpush1.msra.mxu0 0.0
    %412 = vmatprep.subr.mxu0 0.0
    %413 = vmatpush1.msra.mxu0 0.0
    %414 = vmatprep.subr.mxu0 0.0
    %415 = vmatpush1.msra.mxu0 0.0
    %416 = vmatprep.subr.mxu0 0.0
    %417 = vmatpush1.msra.mxu0 0.0
    %418 = vmatprep.subr.mxu0 0.0
    %419 = vmatpush1.msra.mxu0 0.0
    %420 = vmatprep.subr.mxu0 0.0
    %421 = vmatpush1.msra.mxu0 0.0
    %422 = vmatprep.subr.mxu0 0.0
    %423 = vmatpush1.msra.mxu0 0.0
    %424 = vmatprep.subr.mxu0 0.0
    %425 = vmatpush1.msra.mxu0 0.0
    %426 = vmatprep.subr.mxu0 0.0
    %427 = vmatpush1.msra.mxu0 0.0
    %428 = vmatprep.subr.mxu0 0.0
    %429 = vmatpush1.msra.mxu0 0.0
    %430 = vmatprep.subr.mxu0 0.0
    %431 = vmatpush1.msra.mxu0 0.0
    %432 = vmatprep.subr.mxu0 0.0
    %433 = vmatpush1.msra.mxu0 0.0
    %434 = vmatprep.subr.mxu0 0.0
    %435 = vmatpush1.msra.mxu0 0.0
    %436 = vmatprep.subr.mxu0 0.0
    %437 = vmatpush1.msra.mxu0 0.0
    %438 = vmatprep.subr.mxu0 0.0
    %439 = vmatpush1.msra.mxu0 0.0
    %440 = vmatprep.subr.mxu0 0.0
    %441 = vmatpush1.msra.mxu0 0.0
    %442 = vmatprep.subr.mxu0 0.0
    %443 = vmatpush1.msra.mxu0 0.0
    %444 = vmatprep.subr.mxu0 0.0
    %445 = vmatpush1.msra.mxu0 0.0
    %446 = vmatprep.subr.mxu0 0.0
    %447 = vmatpush1.msra.mxu0 0.0
    %448 = vmatprep.subr.mxu0 0.0
    %449 = vmatpush1.msra.mxu0 0.0
    %450 = vmatprep.subr.mxu0 0.0
    %451 = vmatpush1.msra.mxu0 0.0
    %452 = vmatprep.subr.mxu0 0.0
    %453 = vmatpush1.msra.mxu0 0.0
    %454 = vmatprep.subr.mxu0 0.0
    %455 = vmatpush1.msra.mxu0 0.0
    %456 = vmatprep.subr.mxu0 0.0
    %457 = vmatpush1.msra.mxu0 0.0
    %458 = vmatprep.subr.mxu0 0.0
    %459 = vmatpush1.msra.mxu0 0.0
    %460 = vmatprep.mubr.f32.mxu0 0.0
    %461 = vmatmul.mubr.f32.gmra.mrb[0].mxu0 %v310
    %v462 = vpop.f32.mrb[0].mxu0
    %v463 = vadd.f32 %v234, %v462
    %v464 = vpop.f32.mrb[0].mxu0
    %v465 = vadd.f32 %v236, %v464
    %466 = vdwg.mxu0
    %467 = vmatprep.subr.mxu0 %v323
    %468 = vmatpush1.msra.mxu0 %v321
    %469 = vmatprep.subr.mxu0 0.0
    %470 = vmatpush1.msra.mxu0 0.0
    %471 = vmatprep.subr.mxu0 0.0
    %472 = vmatpush1.msra.mxu0 0.0
    %473 = vmatprep.subr.mxu0 0.0
    %474 = vmatpush1.msra.mxu0 0.0
    %475 = vmatprep.subr.mxu0 0.0
    %476 = vmatpush1.msra.mxu0 0.0
    %477 = vmatprep.subr.mxu0 0.0
    %478 = vmatpush1.msra.mxu0 0.0
    %479 = vmatprep.subr.mxu0 0.0
    %480 = vmatpush1.msra.mxu0 0.0
    %481 = vmatprep.subr.mxu0 0.0
    %482 = vmatpush1.msra.mxu0 0.0
    %483 = vmatprep.subr.mxu0 0.0
    %484 = vmatpush1.msra.mxu0 0.0
    %485 = vmatprep.subr.mxu0 0.0
    %486 = vmatpush1.msra.mxu0 0.0
    %487 = vmatprep.subr.mxu0 0.0
    %488 = vmatpush1.msra.mxu0 0.0
    %489 = vmatprep.subr.mxu0 0.0
    %490 = vmatpush1.msra.mxu0 0.0
    %491 = vmatprep.subr.mxu0 0.0
    %492 = vmatpush1.msra.mxu0 0.0
    %493 = vmatprep.subr.mxu0 0.0
    %494 = vmatpush1.msra.mxu0 0.0
    %495 = vmatprep.subr.mxu0 0.0
    %496 = vmatpush1.msra.mxu0 0.0
    %497 = vmatprep.subr.mxu0 0.0
    %498 = vmatpush1.msra.mxu0 0.0
    %499 = vmatprep.subr.mxu0 0.0
    %500 = vmatpush1.msra.mxu0 0.0
    %501 = vmatprep.subr.mxu0 0.0
    %502 = vmatpush1.msra.mxu0 0.0
    %503 = vmatprep.subr.mxu0 0.0
    %504 = vmatpush1.msra.mxu0 0.0
    %505 = vmatprep.subr.mxu0 0.0
    %506 = vmatpush1.msra.mxu0 0.0
    %507 = vmatprep.subr.mxu0 0.0
    %508 = vmatpush1.msra.mxu0 0.0
    %509 = vmatprep.subr.mxu0 0.0
    %510 = vmatpush1.msra.mxu0 0.0
    %511 = vmatprep.subr.mxu0 0.0
    %512 = vmatpush1.msra.mxu0 0.0
    %513 = vmatprep.subr.mxu0 0.0
    %514 = vmatpush1.msra.mxu0 0.0
    %515 = vmatprep.subr.mxu0 0.0
    %516 = vmatpush1.msra.mxu0 0.0
    %517 = vmatprep.subr.mxu0 0.0
    %518 = vmatpush1.msra.mxu0 0.0
    %519 = vmatprep.subr.mxu0 0.0
    %520 = vmatpush1.msra.mxu0 0.0
    %521 = vmatprep.subr.mxu0 0.0
    %522 = vmatpush1.msra.mxu0 0.0
    %523 = vmatprep.subr.mxu0 0.0
    %524 = vmatpush1.msra.mxu0 0.0
    %525 = vmatprep.subr.mxu0 0.0
    %526 = vmatpush1.msra.mxu0 0.0
    %527 = vmatprep.subr.mxu0 0.0
    %528 = vmatpush1.msra.mxu0 0.0
    %529 = vmatprep.subr.mxu0 0.0
    %530 = vmatpush1.msra.mxu0 0.0
    %531 = vmatprep.mubr.f32.mxu0 0.0
    %532 = vmatmul.mubr.f32.gmra.mrb[0].mxu0 %v310
    %v533 = vpop.f32.mrb[0].mxu0
    %v534 = vadd.f32 %v305, %v533
    %v535 = vpop.f32.mrb[0].mxu0
    %v536 = vadd.f32 %v307, %v535
    %537 = vdwg.mxu0
    %538 = vrot.lane.b32.xlu0 %v27, 126
    %v539 = vpop.permute.xlu0 %538
    %540 = vrot.lane.b32.xlu0 %v42, 126
    %v541 = vpop.permute.xlu0 %540
    %542 = vrot.lane.b32.xlu0 %v28, 126
    %v543 = vpop.permute.xlu0 %542
    %vm544 = vcmask 1031168
    %v545 = vsel %vm544, %v539, %v541
    %v546 = vsel %vm544, %v541, %v543
    %548 = vrot.lane.b32.xlu0 %v29, 66
    %v549 = vpop.permute.xlu0 %548
    %550 = vrot.lane.b32.xlu0 %v45, 66
    %v551 = vpop.permute.xlu0 %550
    %552 = vrot.lane.b32.xlu0 %v30, 66
    %v553 = vpop.permute.xlu0 %552
    %vm554 = vcmask 539648
    %v555 = vsel %vm554, %v549, %v551
    %v556 = vsel %vm554, %v551, %v553
    %v558 = vsel %vm52, %v543, %v549
    %v560 = vsel %vm78, %v33, 0
    %v562 = vsel %vm82, %v545, 0
    %v564 = vsel %vm82, %v546, 0
    %v567 = vsel %vm82, %v558, 0
    %v569 = vsel %vm82, %v555, 0
    %v571 = vsel %vm82, %v556, 0
    %v573 = vsel %vm82, %v553, 0
    %575 = vmatprep.subr.mxu0 %v564
    %576 = vmatpush1.msra.mxu0 %v562
    %577 = vmatprep.subr.mxu0 0.0
    %578 = vmatpush1.msra.mxu0 0.0
    %579 = vmatprep.subr.mxu0 0.0
    %580 = vmatpush1.msra.mxu0 0.0
    %581 = vmatprep.subr.mxu0 0.0
    %582 = vmatpush1.msra.mxu0 0.0
    %583 = vmatprep.subr.mxu0 0.0
    %584 = vmatpush1.msra.mxu0 0.0
    %585 = vmatprep.subr.mxu0 0.0
    %586 = vmatpush1.msra.mxu0 0.0
    %587 = vmatprep.subr.mxu0 0.0
    %588 = vmatpush1.msra.mxu0 0.0
    %589 = vmatprep.subr.mxu0 0.0
    %590 = vmatpush1.msra.mxu0 0.0
    %591 = vmatprep.subr.mxu0 0.0
    %592 = vmatpush1.msra.mxu0 0.0
    %593 = vmatprep.subr.mxu0 0.0
    %594 = vmatpush1.msra.mxu0 0.0
    %595 = vmatprep.subr.mxu0 0.0
    %596 = vmatpush1.msra.mxu0 0.0
    %597 = vmatprep.subr.mxu0 0.0
    %598 = vmatpush1.msra.mxu0 0.0
    %599 = vmatprep.subr.mxu0 0.0
    %600 = vmatpush1.msra.mxu0 0.0
    %601 = vmatprep.subr.mxu0 0.0
    %602 = vmatpush1.msra.mxu0 0.0
    %603 = vmatprep.subr.mxu0 0.0
    %604 = vmatpush1.msra.mxu0 0.0
    %605 = vmatprep.subr.mxu0 0.0
    %606 = vmatpush1.msra.mxu0 0.0
    %607 = vmatprep.subr.mxu0 0.0
    %608 = vmatpush1.msra.mxu0 0.0
    %609 = vmatprep.subr.mxu0 0.0
    %610 = vmatpush1.msra.mxu0 0.0
    %611 = vmatprep.subr.mxu0 0.0
    %612 = vmatpush1.msra.mxu0 0.0
    %613 = vmatprep.subr.mxu0 0.0
    %614 = vmatpush1.msra.mxu0 0.0
    %615 = vmatprep.subr.mxu0 0.0
    %616 = vmatpush1.msra.mxu0 0.0
    %617 = vmatprep.subr.mxu0 0.0
    %618 = vmatpush1.msra.mxu0 0.0
    %619 = vmatprep.subr.mxu0 0.0
    %620 = vmatpush1.msra.mxu0 0.0
    %621 = vmatprep.subr.mxu0 0.0
    %622 = vmatpush1.msra.mxu0 0.0
    %623 = vmatprep.subr.mxu0 0.0
    %624 = vmatpush1.msra.mxu0 0.0
    %625 = vmatprep.subr.mxu0 0.0
    %626 = vmatpush1.msra.mxu0 0.0
    %627 = vmatprep.subr.mxu0 0.0
    %628 = vmatpush1.msra.mxu0 0.0
    %629 = vmatprep.subr.mxu0 0.0
    %630 = vmatpush1.msra.mxu0 0.0
    %631 = vmatprep.subr.mxu0 0.0
    %632 = vmatpush1.msra.mxu0 0.0
    %633 = vmatprep.subr.mxu0 0.0
    %634 = vmatpush1.msra.mxu0 0.0
    %635 = vmatprep.subr.mxu0 0.0
    %636 = vmatpush1.msra.mxu0 0.0
    %637 = vmatprep.subr.mxu0 0.0
    %638 = vmatpush1.msra.mxu0 0.0
    %639 = vmatprep.mubr.f32.mxu0 0.0
    %640 = vmatmul.mubr.f32.gmra.mrb[0].mxu0 %v560
    %v641 = vpop.f32.mrb[0].mxu0
    %v642 = vadd.f32 0.0, %v641
    %v643 = vpop.f32.mrb[0].mxu0
    %v644 = vadd.f32 0.0, %v643
    %645 = vdwg.mxu0
    %646 = vmatprep.subr.mxu0 %v569
    %647 = vmatpush1.msra.mxu0 %v567
    %648 = vmatprep.subr.mxu0 0.0
    %649 = vmatpush1.msra.mxu0 0.0
    %650 = vmatprep.subr.mxu0 0.0
    %651 = vmatpush1.msra.mxu0 0.0
    %652 = vmatprep.subr.mxu0 0.0
    %653 = vmatpush1.msra.mxu0 0.0
    %654 = vmatprep.subr.mxu0 0.0
    %655 = vmatpush1.msra.mxu0 0.0
    %656 = vmatprep.subr.mxu0 0.0
    %657 = vmatpush1.msra.mxu0 0.0
    %658 = vmatprep.subr.mxu0 0.0
    %659 = vmatpush1.msra.mxu0 0.0
    %660 = vmatprep.subr.mxu0 0.0
    %661 = vmatpush1.msra.mxu0 0.0
    %662 = vmatprep.subr.mxu0 0.0
    %663 = vmatpush1.msra.mxu0 0.0
    %664 = vmatprep.subr.mxu0 0.0
    %665 = vmatpush1.msra.mxu0 0.0
    %666 = vmatprep.subr.mxu0 0.0
    %667 = vmatpush1.msra.mxu0 0.0
    %668 = vmatprep.subr.mxu0 0.0
    %669 = vmatpush1.msra.mxu0 0.0
    %670 = vmatprep.subr.mxu0 0.0
    %671 = vmatpush1.msra.mxu0 0.0
    %672 = vmatprep.subr.mxu0 0.0
    %673 = vmatpush1.msra.mxu0 0.0
    %674 = vmatprep.subr.mxu0 0.0
    %675 = vmatpush1.msra.mxu0 0.0
    %676 = vmatprep.subr.mxu0 0.0
    %677 = vmatpush1.msra.mxu0 0.0
    %678 = vmatprep.subr.mxu0 0.0
    %679 = vmatpush1.msra.mxu0 0.0
    %680 = vmatprep.subr.mxu0 0.0
    %681 = vmatpush1.msra.mxu0 0.0
    %682 = vmatprep.subr.mxu0 0.0
    %683 = vmatpush1.msra.mxu0 0.0
    %684 = vmatprep.subr.mxu0 0.0
    %685 = vmatpush1.msra.mxu0 0.0
    %686 = vmatprep.subr.mxu0 0.0
    %687 = vmatpush1.msra.mxu0 0.0
    %688 = vmatprep.subr.mxu0 0.0
    %689 = vmatpush1.msra.mxu0 0.0
    %690 = vmatprep.subr.mxu0 0.0
    %691 = vmatpush1.msra.mxu0 0.0
    %692 = vmatprep.subr.mxu0 0.0
    %693 = vmatpush1.msra.mxu0 0.0
    %694 = vmatprep.subr.mxu0 0.0
    %695 = vmatpush1.msra.mxu0 0.0
    %696 = vmatprep.subr.mxu0 0.0
    %697 = vmatpush1.msra.mxu0 0.0
    %698 = vmatprep.subr.mxu0 0.0
    %699 = vmatpush1.msra.mxu0 0.0
    %700 = vmatprep.subr.mxu0 0.0
    %701 = vmatpush1.msra.mxu0 0.0
    %702 = vmatprep.subr.mxu0 0.0
    %703 = vmatpush1.msra.mxu0 0.0
    %704 = vmatprep.subr.mxu0 0.0
    %705 = vmatpush1.msra.mxu0 0.0
    %706 = vmatprep.subr.mxu0 0.0
    %707 = vmatpush1.msra.mxu0 0.0
    %708 = vmatprep.subr.mxu0 0.0
    %709 = vmatpush1.msra.mxu0 0.0
    %710 = vmatprep.mubr.f32.mxu0 0.0
    %711 = vmatmul.mubr.f32.gmra.mrb[0].mxu0 %v560
    %v712 = vpop.f32.mrb[0].mxu0
    %v713 = vadd.f32 0.0, %v712
    %v714 = vpop.f32.mrb[0].mxu0
    %v715 = vadd.f32 0.0, %v714
    %716 = vdwg.mxu0
    %717 = vmatprep.subr.mxu0 %v573
    %718 = vmatpush1.msra.mxu0 %v571
    %719 = vmatprep.subr.mxu0 0.0
    %720 = vmatpush1.msra.mxu0 0.0
    %721 = vmatprep.subr.mxu0 0.0
    %722 = vmatpush1.msra.mxu0 0.0
    %723 = vmatprep.subr.mxu0 0.0
    %724 = vmatpush1.msra.mxu0 0.0
    %725 = vmatprep.subr.mxu0 0.0
    %726 = vmatpush1.msra.mxu0 0.0
    %727 = vmatprep.subr.mxu0 0.0
    %728 = vmatpush1.msra.mxu0 0.0
    %729 = vmatprep.subr.mxu0 0.0
    %730 = vmatpush1.msra.mxu0 0.0
    %731 = vmatprep.subr.mxu0 0.0
    %732 = vmatpush1.msra.mxu0 0.0
    %733 = vmatprep.subr.mxu0 0.0
    %734 = vmatpush1.msra.mxu0 0.0
    %735 = vmatprep.subr.mxu0 0.0
    %736 = vmatpush1.msra.mxu0 0.0
    %737 = vmatprep.subr.mxu0 0.0
    %738 = vmatpush1.msra.mxu0 0.0
    %739 = vmatprep.subr.mxu0 0.0
    %740 = vmatpush1.msra.mxu0 0.0
    %741 = vmatprep.subr.mxu0 0.0
    %742 = vmatpush1.msra.mxu0 0.0
    %743 = vmatprep.subr.mxu0 0.0
    %744 = vmatpush1.msra.mxu0 0.0
    %745 = vmatprep.subr.mxu0 0.0
    %746 = vmatpush1.msra.mxu0 0.0
    %747 = vmatprep.subr.mxu0 0.0
    %748 = vmatpush1.msra.mxu0 0.0
    %749 = vmatprep.subr.mxu0 0.0
    %750 = vmatpush1.msra.mxu0 0.0
    %751 = vmatprep.subr.mxu0 0.0
    %752 = vmatpush1.msra.mxu0 0.0
    %753 = vmatprep.subr.mxu0 0.0
    %754 = vmatpush1.msra.mxu0 0.0
    %755 = vmatprep.subr.mxu0 0.0
    %756 = vmatpush1.msra.mxu0 0.0
    %757 = vmatprep.subr.mxu0 0.0
    %758 = vmatpush1.msra.mxu0 0.0
    %759 = vmatprep.subr.mxu0 0.0
    %760 = vmatpush1.msra.mxu0 0.0
    %761 = vmatprep.subr.mxu0 0.0
    %762 = vmatpush1.msra.mxu0 0.0
    %763 = vmatprep.subr.mxu0 0.0
    %764 = vmatpush1.msra.mxu0 0.0
    %765 = vmatprep.subr.mxu0 0.0
    %766 = vmatpush1.msra.mxu0 0.0
    %767 = vmatprep.subr.mxu0 0.0
    %768 = vmatpush1.msra.mxu0 0.0
    %769 = vmatprep.subr.mxu0 0.0
    %770 = vmatpush1.msra.mxu0 0.0
    %771 = vmatprep.subr.mxu0 0.0
    %772 = vmatpush1.msra.mxu0 0.0
    %773 = vmatprep.subr.mxu0 0.0
    %774 = vmatpush1.msra.mxu0 0.0
    %775 = vmatprep.subr.mxu0 0.0
    %776 = vmatpush1.msra.mxu0 0.0
    %777 = vmatprep.subr.mxu0 0.0
    %778 = vmatpush1.msra.mxu0 0.0
    %779 = vmatprep.subr.mxu0 0.0
    %780 = vmatpush1.msra.mxu0 0.0
    %781 = vmatprep.mubr.f32.mxu0 0.0
    %782 = vmatmul.mubr.f32.gmra.mrb[0].mxu0 %v560
    %v783 = vpop.f32.mrb[0].mxu0
    %v784 = vadd.f32 0.0, %v783
    %v785 = vpop.f32.mrb[0].mxu0
    %v786 = vadd.f32 0.0, %v785
    %787 = vdwg.mxu0
    %v788 = vadd.f32 %v392, %v642
    %v789 = vadd.f32 %v394, %v644
    %v790 = vadd.f32 %v463, %v713
    %v791 = vadd.f32 %v465, %v715
    %v792 = vadd.f32 %v534, %v784
    %v793 = vadd.f32 %v536, %v786
    %794 = vrot.lane.b32.xlu0 %v27, 110
    %v795 = vpop.permute.xlu0 %794
    %796 = vrot.lane.b32.xlu0 %v42, 110
    %v797 = vpop.permute.xlu0 %796
    %798 = vrot.lane.b32.xlu0 %v28, 110
    %v799 = vpop.permute.xlu0 %798
    %vm800 = vcmask 900096
    %v801 = vsel %vm800, %v795, %v797
    %v802 = vsel %vm800, %v797, %v799
    %804 = vrot.lane.b32.xlu0 %v29, 50
    %v805 = vpop.permute.xlu0 %804
    %806 = vrot.lane.b32.xlu0 %v45, 50
    %v807 = vpop.permute.xlu0 %806
    %808 = vrot.lane.b32.xlu0 %v30, 50
    %v809 = vpop.permute.xlu0 %808
    %vm810 = vcmask 408576
    %v811 = vsel %vm810, %v805, %v807
    %v812 = vsel %vm810, %v807, %v809
    %v814 = vsel %vm52, %v799, %v805
    %v816 = vsel %vm78, %v34, 0
    %v818 = vsel %vm82, %v801, 0
    %v820 = vsel %vm82, %v802, 0
    %v823 = vsel %vm82, %v814, 0
    %v825 = vsel %vm82, %v811, 0
    %v827 = vsel %vm82, %v812, 0
    %v829 = vsel %vm82, %v809, 0
    %831 = vmatprep.subr.mxu0 %v820
    %832 = vmatpush1.msra.mxu0 %v818
    %833 = vmatprep.subr.mxu0 0.0
    %834 = vmatpush1.msra.mxu0 0.0
    %835 = vmatprep.subr.mxu0 0.0
    %836 = vmatpush1.msra.mxu0 0.0
    %837 = vmatprep.subr.mxu0 0.0
    %838 = vmatpush1.msra.mxu0 0.0
    %839 = vmatprep.subr.mxu0 0.0
    %840 = vmatpush1.msra.mxu0 0.0
    %841 = vmatprep.subr.mxu0 0.0
    %842 = vmatpush1.msra.mxu0 0.0
    %843 = vmatprep.subr.mxu0 0.0
    %844 = vmatpush1.msra.mxu0 0.0
    %845 = vmatprep.subr.mxu0 0.0
    %846 = vmatpush1.msra.mxu0 0.0
    %847 = vmatprep.subr.mxu0 0.0
    %848 = vmatpush1.msra.mxu0 0.0
    %849 = vmatprep.subr.mxu0 0.0
    %850 = vmatpush1.msra.mxu0 0.0
    %851 = vmatprep.subr.mxu0 0.0
    %852 = vmatpush1.msra.mxu0 0.0
    %853 = vmatprep.subr.mxu0 0.0
    %854 = vmatpush1.msra.mxu0 0.0
    %855 = vmatprep.subr.mxu0 0.0
    %856 = vmatpush1.msra.mxu0 0.0
    %857 = vmatprep.subr.mxu0 0.0
    %858 = vmatpush1.msra.mxu0 0.0
    %859 = vmatprep.subr.mxu0 0.0
    %860 = vmatpush1.msra.mxu0 0.0
    %861 = vmatprep.subr.mxu0 0.0
    %862 = vmatpush1.msra.mxu0 0.0
    %863 = vmatprep.subr.mxu0 0.0
    %864 = vmatpush1.msra.mxu0 0.0
    %865 = vmatprep.subr.mxu0 0.0
    %866 = vmatpush1.msra.mxu0 0.0
    %867 = vmatprep.subr.mxu0 0.0
    %868 = vmatpush1.msra.mxu0 0.0
    %869 = vmatprep.subr.mxu0 0.0
    %870 = vmatpush1.msra.mxu0 0.0
    %871 = vmatprep.subr.mxu0 0.0
    %872 = vmatpush1.msra.mxu0 0.0
    %873 = vmatprep.subr.mxu0 0.0
    %874 = vmatpush1.msra.mxu0 0.0
    %875 = vmatprep.subr.mxu0 0.0
    %876 = vmatpush1.msra.mxu0 0.0
    %877 = vmatprep.subr.mxu0 0.0
    %878 = vmatpush1.msra.mxu0 0.0
    %879 = vmatprep.subr.mxu0 0.0
    %880 = vmatpush1.msra.mxu0 0.0
    %881 = vmatprep.subr.mxu0 0.0
    %882 = vmatpush1.msra.mxu0 0.0
    %883 = vmatprep.subr.mxu0 0.0
    %884 = vmatpush1.msra.mxu0 0.0
    %885 = vmatprep.subr.mxu0 0.0
    %886 = vmatpush1.msra.mxu0 0.0
    %887 = vmatprep.subr.mxu0 0.0
    %888 = vmatpush1.msra.mxu0 0.0
    %889 = vmatprep.subr.mxu0 0.0
    %890 = vmatpush1.msra.mxu0 0.0
    %891 = vmatprep.subr.mxu0 0.0
    %892 = vmatpush1.msra.mxu0 0.0
    %893 = vmatprep.subr.mxu0 0.0
    %894 = vmatpush1.msra.mxu0 0.0
    %895 = vmatprep.mubr.f32.mxu0 0.0
    %896 = vmatmul.mubr.f32.gmra.mrb[0].mxu0 %v816
    %v897 = vpop.f32.mrb[0].mxu0
    %v898 = vadd.f32 0.0, %v897
    %v899 = vpop.f32.mrb[0].mxu0
    %v900 = vadd.f32 0.0, %v899
    %901 = vdwg.mxu0
    %902 = vmatprep.subr.mxu0 %v825
    %903 = vmatpush1.msra.mxu0 %v823
    %904 = vmatprep.subr.mxu0 0.0
    %905 = vmatpush1.msra.mxu0 0.0
    %906 = vmatprep.subr.mxu0 0.0
    %907 = vmatpush1.msra.mxu0 0.0
    %908 = vmatprep.subr.mxu0 0.0
    %909 = vmatpush1.msra.mxu0 0.0
    %910 = vmatprep.subr.mxu0 0.0
    %911 = vmatpush1.msra.mxu0 0.0
    %912 = vmatprep.subr.mxu0 0.0
    %913 = vmatpush1.msra.mxu0 0.0
    %914 = vmatprep.subr.mxu0 0.0
    %915 = vmatpush1.msra.mxu0 0.0
    %916 = vmatprep.subr.mxu0 0.0
    %917 = vmatpush1.msra.mxu0 0.0
    %918 = vmatprep.subr.mxu0 0.0
    %919 = vmatpush1.msra.mxu0 0.0
    %920 = vmatprep.subr.mxu0 0.0
    %921 = vmatpush1.msra.mxu0 0.0
    %922 = vmatprep.subr.mxu0 0.0
    %923 = vmatpush1.msra.mxu0 0.0
    %924 = vmatprep.subr.mxu0 0.0
    %925 = vmatpush1.msra.mxu0 0.0
    %926 = vmatprep.subr.mxu0 0.0
    %927 = vmatpush1.msra.mxu0 0.0
    %928 = vmatprep.subr.mxu0 0.0
    %929 = vmatpush1.msra.mxu0 0.0
    %930 = vmatprep.subr.mxu0 0.0
    %931 = vmatpush1.msra.mxu0 0.0
    %932 = vmatprep.subr.mxu0 0.0
    %933 = vmatpush1.msra.mxu0 0.0
    %934 = vmatprep.subr.mxu0 0.0
    %935 = vmatpush1.msra.mxu0 0.0
    %936 = vmatprep.subr.mxu0 0.0
    %937 = vmatpush1.msra.mxu0 0.0
    %938 = vmatprep.subr.mxu0 0.0
    %939 = vmatpush1.msra.mxu0 0.0
    %940 = vmatprep.subr.mxu0 0.0
    %941 = vmatpush1.msra.mxu0 0.0
    %942 = vmatprep.subr.mxu0 0.0
    %943 = vmatpush1.msra.mxu0 0.0
    %944 = vmatprep.subr.mxu0 0.0
    %945 = vmatpush1.msra.mxu0 0.0
    %946 = vmatprep.subr.mxu0 0.0
    %947 = vmatpush1.msra.mxu0 0.0
    %948 = vmatprep.subr.mxu0 0.0
    %949 = vmatpush1.msra.mxu0 0.0
    %950 = vmatprep.subr.mxu0 0.0
    %951 = vmatpush1.msra.mxu0 0.0
    %952 = vmatprep.subr.mxu0 0.0
    %953 = vmatpush1.msra.mxu0 0.0
    %954 = vmatprep.subr.mxu0 0.0
    %955 = vmatpush1.msra.mxu0 0.0
    %956 = vmatprep.subr.mxu0 0.0
    %957 = vmatpush1.msra.mxu0 0.0
    %958 = vmatprep.subr.mxu0 0.0
    %959 = vmatpush1.msra.mxu0 0.0
    %960 = vmatprep.subr.mxu0 0.0
    %961 = vmatpush1.msra.mxu0 0.0
    %962 = vmatprep.subr.mxu0 0.0
    %963 = vmatpush1.msra.mxu0 0.0
    %964 = vmatprep.subr.mxu0 0.0
    %965 = vmatpush1.msra.mxu0 0.0
    %966 = vmatprep.mubr.f32.mxu0 0.0
    %967 = vmatmul.mubr.f32.gmra.mrb[0].mxu0 %v816
    %v968 = vpop.f32.mrb[0].mxu0
    %v969 = vadd.f32 0.0, %v968
    %v970 = vpop.f32.mrb[0].mxu0
    %v971 = vadd.f32 0.0, %v970
    %972 = vdwg.mxu0
    %973 = vmatprep.subr.mxu0 %v829
    %974 = vmatpush1.msra.mxu0 %v827
    %975 = vmatprep.subr.mxu0 0.0
    %976 = vmatpush1.msra.mxu0 0.0
    %977 = vmatprep.subr.mxu0 0.0
    %978 = vmatpush1.msra.mxu0 0.0
    %979 = vmatprep.subr.mxu0 0.0
    %980 = vmatpush1.msra.mxu0 0.0
    %981 = vmatprep.subr.mxu0 0.0
    %982 = vmatpush1.msra.mxu0 0.0
    %983 = vmatprep.subr.mxu0 0.0
    %984 = vmatpush1.msra.mxu0 0.0
    %985 = vmatprep.subr.mxu0 0.0
    %986 = vmatpush1.msra.mxu0 0.0
    %987 = vmatprep.subr.mxu0 0.0
    %988 = vmatpush1.msra.mxu0 0.0
    %989 = vmatprep.subr.mxu0 0.0
    %990 = vmatpush1.msra.mxu0 0.0
    %991 = vmatprep.subr.mxu0 0.0
    %992 = vmatpush1.msra.mxu0 0.0
    %993 = vmatprep.subr.mxu0 0.0
    %994 = vmatpush1.msra.mxu0 0.0
    %995 = vmatprep.subr.mxu0 0.0
    %996 = vmatpush1.msra.mxu0 0.0
    %997 = vmatprep.subr.mxu0 0.0
    %998 = vmatpush1.msra.mxu0 0.0
    %999 = vmatprep.subr.mxu0 0.0
    %1000 = vmatpush1.msra.mxu0 0.0
    %1001 = vmatprep.subr.mxu0 0.0
    %1002 = vmatpush1.msra.mxu0 0.0
    %1003 = vmatprep.subr.mxu0 0.0
    %1004 = vmatpush1.msra.mxu0 0.0
    %1005 = vmatprep.subr.mxu0 0.0
    %1006 = vmatpush1.msra.mxu0 0.0
    %1007 = vmatprep.subr.mxu0 0.0
    %1008 = vmatpush1.msra.mxu0 0.0
    %1009 = vmatprep.subr.mxu0 0.0
    %1010 = vmatpush1.msra.mxu0 0.0
    %1011 = vmatprep.subr.mxu0 0.0
    %1012 = vmatpush1.msra.mxu0 0.0
    %1013 = vmatprep.subr.mxu0 0.0
    %1014 = vmatpush1.msra.mxu0 0.0
    %1015 = vmatprep.subr.mxu0 0.0
    %1016 = vmatpush1.msra.mxu0 0.0
    %1017 = vmatprep.subr.mxu0 0.0
    %1018 = vmatpush1.msra.mxu0 0.0
    %1019 = vmatprep.subr.mxu0 0.0
    %1020 = vmatpush1.msra.mxu0 0.0
    %1021 = vmatprep.subr.mxu0 0.0
    %1022 = vmatpush1.msra.mxu0 0.0
    %1023 = vmatprep.subr.mxu0 0.0
    %1024 = vmatpush1.msra.mxu0 0.0
    %1025 = vmatprep.subr.mxu0 0.0
    %1026 = vmatpush1.msra.mxu0 0.0
    %1027 = vmatprep.subr.mxu0 0.0
    %1028 = vmatpush1.msra.mxu0 0.0
    %1029 = vmatprep.subr.mxu0 0.0
    %1030 = vmatpush1.msra.mxu0 0.0
    %1031 = vmatprep.subr.mxu0 0.0
    %1032 = vmatpush1.msra.mxu0 0.0
    %1033 = vmatprep.subr.mxu0 0.0
    %1034 = vmatpush1.msra.mxu0 0.0
    %1035 = vmatprep.subr.mxu0 0.0
    %1036 = vmatpush1.msra.mxu0 0.0
    %1037 = vmatprep.mubr.f32.mxu0 0.0
    %1038 = vmatmul.mubr.f32.gmra.mrb[0].mxu0 %v816
    %v1039 = vpop.f32.mrb[0].mxu0
    %v1040 = vadd.f32 0.0, %v1039
    %v1041 = vpop.f32.mrb[0].mxu0
    %v1042 = vadd.f32 0.0, %v1041
    %1043 = vdwg.mxu0
    %v1044 = vadd.f32 %v788, %v898
    %v1045 = vadd.f32 %v789, %v900
    %v1046 = vadd.f32 %v790, %v969
    %v1047 = vadd.f32 %v791, %v971
    %v1048 = vadd.f32 %v792, %v1040
    %v1049 = vadd.f32 %v793, %v1042
    %1050 = vrot.lane.b32.xlu0 %v27, 109
    %v1051 = vpop.permute.xlu0 %1050
    %1052 = vrot.lane.b32.xlu0 %v42, 109
    %v1053 = vpop.permute.xlu0 %1052
    %1054 = vrot.lane.b32.xlu0 %v28, 109
    %v1055 = vpop.permute.xlu0 %1054
    %vm1056 = vcmask 891904
    %v1057 = vsel %vm1056, %v1051, %v1053
    %v1058 = vsel %vm1056, %v1053, %v1055
    %1060 = vrot.lane.b32.xlu0 %v29, 49
    %v1061 = vpop.permute.xlu0 %1060
    %1062 = vrot.lane.b32.xlu0 %v45, 49
    %v1063 = vpop.permute.xlu0 %1062
    %1064 = vrot.lane.b32.xlu0 %v30, 49
    %v1065 = vpop.permute.xlu0 %1064
    %vm1066 = vcmask 400384
    %v1067 = vsel %vm1066, %v1061, %v1063
    %v1068 = vsel %vm1066, %v1063, %v1065
    %v1070 = vsel %vm52, %v1055, %v1061
    %v1072 = vsel %vm78, %v35, 0
    %v1074 = vsel %vm82, %v1057, 0
    %v1076 = vsel %vm82, %v1058, 0
    %v1079 = vsel %vm82, %v1070, 0
    %v1081 = vsel %vm82, %v1067, 0
    %v1083 = vsel %vm82, %v1068, 0
    %v1085 = vsel %vm82, %v1065, 0
    %1087 = vmatprep.subr.mxu0 %v1076
    %1088 = vmatpush1.msra.mxu0 %v1074
    %1089 = vmatprep.subr.mxu0 0.0
    %1090 = vmatpush1.msra.mxu0 0.0
    %1091 = vmatprep.subr.mxu0 0.0
    %1092 = vmatpush1.msra.mxu0 0.0
    %1093 = vmatprep.subr.mxu0 0.0
    %1094 = vmatpush1.msra.mxu0 0.0
    %1095 = vmatprep.subr.mxu0 0.0
    %1096 = vmatpush1.msra.mxu0 0.0
    %1097 = vmatprep.subr.mxu0 0.0
    %1098 = vmatpush1.msra.mxu0 0.0
    %1099 = vmatprep.subr.mxu0 0.0
    %1100 = vmatpush1.msra.mxu0 0.0
    %1101 = vmatprep.subr.mxu0 0.0
    %1102 = vmatpush1.msra.mxu0 0.0
    %1103 = vmatprep.subr.mxu0 0.0
    %1104 = vmatpush1.msra.mxu0 0.0
    %1105 = vmatprep.subr.mxu0 0.0
    %1106 = vmatpush1.msra.mxu0 0.0
    %1107 = vmatprep.subr.mxu0 0.0
    %1108 = vmatpush1.msra.mxu0 0.0
    %1109 = vmatprep.subr.mxu0 0.0
    %1110 = vmatpush1.msra.mxu0 0.0
    %1111 = vmatprep.subr.mxu0 0.0
    %1112 = vmatpush1.msra.mxu0 0.0
    %1113 = vmatprep.subr.mxu0 0.0
    %1114 = vmatpush1.msra.mxu0 0.0
    %1115 = vmatprep.subr.mxu0 0.0
    %1116 = vmatpush1.msra.mxu0 0.0
    %1117 = vmatprep.subr.mxu0 0.0
    %1118 = vmatpush1.msra.mxu0 0.0
    %1119 = vmatprep.subr.mxu0 0.0
    %1120 = vmatpush1.msra.mxu0 0.0
    %1121 = vmatprep.subr.mxu0 0.0
    %1122 = vmatpush1.msra.mxu0 0.0
    %1123 = vmatprep.subr.mxu0 0.0
    %1124 = vmatpush1.msra.mxu0 0.0
    %1125 = vmatprep.subr.mxu0 0.0
    %1126 = vmatpush1.msra.mxu0 0.0
    %1127 = vmatprep.subr.mxu0 0.0
    %1128 = vmatpush1.msra.mxu0 0.0
    %1129 = vmatprep.subr.mxu0 0.0
    %1130 = vmatpush1.msra.mxu0 0.0
    %1131 = vmatprep.subr.mxu0 0.0
    %1132 = vmatpush1.msra.mxu0 0.0
    %1133 = vmatprep.subr.mxu0 0.0
    %1134 = vmatpush1.msra.mxu0 0.0
    %1135 = vmatprep.subr.mxu0 0.0
    %1136 = vmatpush1.msra.mxu0 0.0
    %1137 = vmatprep.subr.mxu0 0.0
    %1138 = vmatpush1.msra.mxu0 0.0
    %1139 = vmatprep.subr.mxu0 0.0
    %1140 = vmatpush1.msra.mxu0 0.0
    %1141 = vmatprep.subr.mxu0 0.0
    %1142 = vmatpush1.msra.mxu0 0.0
    %1143 = vmatprep.subr.mxu0 0.0
    %1144 = vmatpush1.msra.mxu0 0.0
    %1145 = vmatprep.subr.mxu0 0.0
    %1146 = vmatpush1.msra.mxu0 0.0
    %1147 = vmatprep.subr.mxu0 0.0
    %1148 = vmatpush1.msra.mxu0 0.0
    %1149 = vmatprep.subr.mxu0 0.0
    %1150 = vmatpush1.msra.mxu0 0.0
    %1151 = vmatprep.mubr.f32.mxu0 0.0
    %1152 = vmatmul.mubr.f32.gmra.mrb[0].mxu0 %v1072
    %v1153 = vpop.f32.mrb[0].mxu0
    %v1154 = vadd.f32 0.0, %v1153
    %v1155 = vpop.f32.mrb[0].mxu0
    %v1156 = vadd.f32 0.0, %v1155
    %1157 = vdwg.mxu0
    %1158 = vmatprep.subr.mxu0 %v1081
    %1159 = vmatpush1.msra.mxu0 %v1079
    %1160 = vmatprep.subr.mxu0 0.0
    %1161 = vmatpush1.msra.mxu0 0.0
    %1162 = vmatprep.subr.mxu0 0.0
    %1163 = vmatpush1.msra.mxu0 0.0
    %1164 = vmatprep.subr.mxu0 0.0
    %1165 = vmatpush1.msra.mxu0 0.0
    %1166 = vmatprep.subr.mxu0 0.0
    %1167 = vmatpush1.msra.mxu0 0.0
    %1168 = vmatprep.subr.mxu0 0.0
    %1169 = vmatpush1.msra.mxu0 0.0
    %1170 = vmatprep.subr.mxu0 0.0
    %1171 = vmatpush1.msra.mxu0 0.0
    %1172 = vmatprep.subr.mxu0 0.0
    %1173 = vmatpush1.msra.mxu0 0.0
    %1174 = vmatprep.subr.mxu0 0.0
    %1175 = vmatpush1.msra.mxu0 0.0
    %1176 = vmatprep.subr.mxu0 0.0
    %1177 = vmatpush1.msra.mxu0 0.0
    %1178 = vmatprep.subr.mxu0 0.0
    %1179 = vmatpush1.msra.mxu0 0.0
    %1180 = vmatprep.subr.mxu0 0.0
    %1181 = vmatpush1.msra.mxu0 0.0
    %1182 = vmatprep.subr.mxu0 0.0
    %1183 = vmatpush1.msra.mxu0 0.0
    %1184 = vmatprep.subr.mxu0 0.0
    %1185 = vmatpush1.msra.mxu0 0.0
    %1186 = vmatprep.subr.mxu0 0.0
    %1187 = vmatpush1.msra.mxu0 0.0
    %1188 = vmatprep.subr.mxu0 0.0
    %1189 = vmatpush1.msra.mxu0 0.0
    %1190 = vmatprep.subr.mxu0 0.0
    %1191 = vmatpush1.msra.mxu0 0.0
    %1192 = vmatprep.subr.mxu0 0.0
    %1193 = vmatpush1.msra.mxu0 0.0
    %1194 = vmatprep.subr.mxu0 0.0
    %1195 = vmatpush1.msra.mxu0 0.0
    %1196 = vmatprep.subr.mxu0 0.0
    %1197 = vmatpush1.msra.mxu0 0.0
    %1198 = vmatprep.subr.mxu0 0.0
    %1199 = vmatpush1.msra.mxu0 0.0
    %1200 = vmatprep.subr.mxu0 0.0
    %1201 = vmatpush1.msra.mxu0 0.0
    %1202 = vmatprep.subr.mxu0 0.0
    %1203 = vmatpush1.msra.mxu0 0.0
    %1204 = vmatprep.subr.mxu0 0.0
    %1205 = vmatpush1.msra.mxu0 0.0
    %1206 = vmatprep.subr.mxu0 0.0
    %1207 = vmatpush1.msra.mxu0 0.0
    %1208 = vmatprep.subr.mxu0 0.0
    %1209 = vmatpush1.msra.mxu0 0.0
    %1210 = vmatprep.subr.mxu0 0.0
    %1211 = vmatpush1.msra.mxu0 0.0
    %1212 = vmatprep.subr.mxu0 0.0
    %1213 = vmatpush1.msra.mxu0 0.0
    %1214 = vmatprep.subr.mxu0 0.0
    %1215 = vmatpush1.msra.mxu0 0.0
    %1216 = vmatprep.subr.mxu0 0.0
    %1217 = vmatpush1.msra.mxu0 0.0
    %1218 = vmatprep.subr.mxu0 0.0
    %1219 = vmatpush1.msra.mxu0 0.0
    %1220 = vmatprep.subr.mxu0 0.0
    %1221 = vmatpush1.msra.mxu0 0.0
    %1222 = vmatprep.mubr.f32.mxu0 0.0
    %1223 = vmatmul.mubr.f32.gmra.mrb[0].mxu0 %v1072
    %v1224 = vpop.f32.mrb[0].mxu0
    %v1225 = vadd.f32 0.0, %v1224
    %v1226 = vpop.f32.mrb[0].mxu0
    %v1227 = vadd.f32 0.0, %v1226
    %1228 = vdwg.mxu0
    %1229 = vmatprep.subr.mxu0 %v1085
    %1230 = vmatpush1.msra.mxu0 %v1083
    %1231 = vmatprep.subr.mxu0 0.0
    %1232 = vmatpush1.msra.mxu0 0.0
    %1233 = vmatprep.subr.mxu0 0.0
    %1234 = vmatpush1.msra.mxu0 0.0
    %1235 = vmatprep.subr.mxu0 0.0
    %1236 = vmatpush1.msra.mxu0 0.0
    %1237 = vmatprep.subr.mxu0 0.0
    %1238 = vmatpush1.msra.mxu0 0.0
    %1239 = vmatprep.subr.mxu0 0.0
    %1240 = vmatpush1.msra.mxu0 0.0
    %1241 = vmatprep.subr.mxu0 0.0
    %1242 = vmatpush1.msra.mxu0 0.0
    %1243 = vmatprep.subr.mxu0 0.0
    %1244 = vmatpush1.msra.mxu0 0.0
    %1245 = vmatprep.subr.mxu0 0.0
    %1246 = vmatpush1.msra.mxu0 0.0
    %1247 = vmatprep.subr.mxu0 0.0
    %1248 = vmatpush1.msra.mxu0 0.0
    %1249 = vmatprep.subr.mxu0 0.0
    %1250 = vmatpush1.msra.mxu0 0.0
    %1251 = vmatprep.subr.mxu0 0.0
    %1252 = vmatpush1.msra.mxu0 0.0
    %1253 = vmatprep.subr.mxu0 0.0
    %1254 = vmatpush1.msra.mxu0 0.0
    %1255 = vmatprep.subr.mxu0 0.0
    %1256 = vmatpush1.msra.mxu0 0.0
    %1257 = vmatprep.subr.mxu0 0.0
    %1258 = vmatpush1.msra.mxu0 0.0
    %1259 = vmatprep.subr.mxu0 0.0
    %1260 = vmatpush1.msra.mxu0 0.0
    %1261 = vmatprep.subr.mxu0 0.0
    %1262 = vmatpush1.msra.mxu0 0.0
    %1263 = vmatprep.subr.mxu0 0.0
    %1264 = vmatpush1.msra.mxu0 0.0
    %1265 = vmatprep.subr.mxu0 0.0
    %1266 = vmatpush1.msra.mxu0 0.0
    %1267 = vmatprep.subr.mxu0 0.0
    %1268 = vmatpush1.msra.mxu0 0.0
    %1269 = vmatprep.subr.mxu0 0.0
    %1270 = vmatpush1.msra.mxu0 0.0
    %1271 = vmatprep.subr.mxu0 0.0
    %1272 = vmatpush1.msra.mxu0 0.0
    %1273 = vmatprep.subr.mxu0 0.0
    %1274 = vmatpush1.msra.mxu0 0.0
    %1275 = vmatprep.subr.mxu0 0.0
    %1276 = vmatpush1.msra.mxu0 0.0
    %1277 = vmatprep.subr.mxu0 0.0
    %1278 = vmatpush1.msra.mxu0 0.0
    %1279 = vmatprep.subr.mxu0 0.0
    %1280 = vmatpush1.msra.mxu0 0.0
    %1281 = vmatprep.subr.mxu0 0.0
    %1282 = vmatpush1.msra.mxu0 0.0
    %1283 = vmatprep.subr.mxu0 0.0
    %1284 = vmatpush1.msra.mxu0 0.0
    %1285 = vmatprep.subr.mxu0 0.0
    %1286 = vmatpush1.msra.mxu0 0.0
    %1287 = vmatprep.subr.mxu0 0.0
    %1288 = vmatpush1.msra.mxu0 0.0
    %1289 = vmatprep.subr.mxu0 0.0
    %1290 = vmatpush1.msra.mxu0 0.0
    %1291 = vmatprep.subr.mxu0 0.0
    %1292 = vmatpush1.msra.mxu0 0.0
    %1293 = vmatprep.mubr.f32.mxu0 0.0
    %1294 = vmatmul.mubr.f32.gmra.mrb[0].mxu0 %v1072
    %v1295 = vpop.f32.mrb[0].mxu0
    %v1296 = vadd.f32 0.0, %v1295
    %v1297 = vpop.f32.mrb[0].mxu0
    %v1298 = vadd.f32 0.0, %v1297
    %1299 = vdwg.mxu0
    %v1300 = vadd.f32 %v1044, %v1154
    %v1301 = vadd.f32 %v1045, %v1156
    %v1302 = vadd.f32 %v1046, %v1225
    %v1303 = vadd.f32 %v1047, %v1227
    %v1304 = vadd.f32 %v1048, %v1296
    %v1305 = vadd.f32 %v1049, %v1298
    %1306 = vrot.lane.b32.xlu0 %v27, 108
    %v1307 = vpop.permute.xlu0 %1306
    %1308 = vrot.lane.b32.xlu0 %v42, 108
    %v1309 = vpop.permute.xlu0 %1308
    %1310 = vrot.lane.b32.xlu0 %v28, 108
    %v1311 = vpop.permute.xlu0 %1310
    %vm1312 = vcmask 883712
    %v1313 = vsel %vm1312, %v1307, %v1309
    %v1314 = vsel %vm1312, %v1309, %v1311
    %1316 = vrot.lane.b32.xlu0 %v29, 48
    %v1317 = vpop.permute.xlu0 %1316
    %1318 = vrot.lane.b32.xlu0 %v45, 48
    %v1319 = vpop.permute.xlu0 %1318
    %1320 = vrot.lane.b32.xlu0 %v30, 48
    %v1321 = vpop.permute.xlu0 %1320
    %vm1322 = vcmask 392192
    %v1323 = vsel %vm1322, %v1317, %v1319
    %v1324 = vsel %vm1322, %v1319, %v1321
    %v1326 = vsel %vm52, %v1311, %v1317
    %v1328 = vsel %vm78, %v36, 0
    %v1330 = vsel %vm82, %v1313, 0
    %v1332 = vsel %vm82, %v1314, 0
    %v1335 = vsel %vm82, %v1326, 0
    %v1337 = vsel %vm82, %v1323, 0
    %v1339 = vsel %vm82, %v1324, 0
    %v1341 = vsel %vm82, %v1321, 0
    %1343 = vmatprep.subr.mxu0 %v1332
    %1344 = vmatpush1.msra.mxu0 %v1330
    %1345 = vmatprep.subr.mxu0 0.0
    %1346 = vmatpush1.msra.mxu0 0.0
    %1347 = vmatprep.subr.mxu0 0.0
    %1348 = vmatpush1.msra.mxu0 0.0
    %1349 = vmatprep.subr.mxu0 0.0
    %1350 = vmatpush1.msra.mxu0 0.0
    %1351 = vmatprep.subr.mxu0 0.0
    %1352 = vmatpush1.msra.mxu0 0.0
    %1353 = vmatprep.subr.mxu0 0.0
    %1354 = vmatpush1.msra.mxu0 0.0
    %1355 = vmatprep.subr.mxu0 0.0
    %1356 = vmatpush1.msra.mxu0 0.0
    %1357 = vmatprep.subr.mxu0 0.0
    %1358 = vmatpush1.msra.mxu0 0.0
    %1359 = vmatprep.subr.mxu0 0.0
    %1360 = vmatpush1.msra.mxu0 0.0
    %1361 = vmatprep.subr.mxu0 0.0
    %1362 = vmatpush1.msra.mxu0 0.0
    %1363 = vmatprep.subr.mxu0 0.0
    %1364 = vmatpush1.msra.mxu0 0.0
    %1365 = vmatprep.subr.mxu0 0.0
    %1366 = vmatpush1.msra.mxu0 0.0
    %1367 = vmatprep.subr.mxu0 0.0
    %1368 = vmatpush1.msra.mxu0 0.0
    %1369 = vmatprep.subr.mxu0 0.0
    %1370 = vmatpush1.msra.mxu0 0.0
    %1371 = vmatprep.subr.mxu0 0.0
    %1372 = vmatpush1.msra.mxu0 0.0
    %1373 = vmatprep.subr.mxu0 0.0
    %1374 = vmatpush1.msra.mxu0 0.0
    %1375 = vmatprep.subr.mxu0 0.0
    %1376 = vmatpush1.msra.mxu0 0.0
    %1377 = vmatprep.subr.mxu0 0.0
    %1378 = vmatpush1.msra.mxu0 0.0
    %1379 = vmatprep.subr.mxu0 0.0
    %1380 = vmatpush1.msra.mxu0 0.0
    %1381 = vmatprep.subr.mxu0 0.0
    %1382 = vmatpush1.msra.mxu0 0.0
    %1383 = vmatprep.subr.mxu0 0.0
    %1384 = vmatpush1.msra.mxu0 0.0
    %1385 = vmatprep.subr.mxu0 0.0
    %1386 = vmatpush1.msra.mxu0 0.0
    %1387 = vmatprep.subr.mxu0 0.0
    %1388 = vmatpush1.msra.mxu0 0.0
    %1389 = vmatprep.subr.mxu0 0.0
    %1390 = vmatpush1.msra.mxu0 0.0
    %1391 = vmatprep.subr.mxu0 0.0
    %1392 = vmatpush1.msra.mxu0 0.0
    %1393 = vmatprep.subr.mxu0 0.0
    %1394 = vmatpush1.msra.mxu0 0.0
    %1395 = vmatprep.subr.mxu0 0.0
    %1396 = vmatpush1.msra.mxu0 0.0
    %1397 = vmatprep.subr.mxu0 0.0
    %1398 = vmatpush1.msra.mxu0 0.0
    %1399 = vmatprep.subr.mxu0 0.0
    %1400 = vmatpush1.msra.mxu0 0.0
    %1401 = vmatprep.subr.mxu0 0.0
    %1402 = vmatpush1.msra.mxu0 0.0
    %1403 = vmatprep.subr.mxu0 0.0
    %1404 = vmatpush1.msra.mxu0 0.0
    %1405 = vmatprep.subr.mxu0 0.0
    %1406 = vmatpush1.msra.mxu0 0.0
    %1407 = vmatprep.mubr.f32.mxu0 0.0
    %1408 = vmatmul.mubr.f32.gmra.mrb[0].mxu0 %v1328
    %v1409 = vpop.f32.mrb[0].mxu0
    %v1410 = vadd.f32 0.0, %v1409
    %v1411 = vpop.f32.mrb[0].mxu0
    %v1412 = vadd.f32 0.0, %v1411
    %1413 = vdwg.mxu0
    %1414 = vmatprep.subr.mxu0 %v1337
    %1415 = vmatpush1.msra.mxu0 %v1335
    %1416 = vmatprep.subr.mxu0 0.0
    %1417 = vmatpush1.msra.mxu0 0.0
    %1418 = vmatprep.subr.mxu0 0.0
    %1419 = vmatpush1.msra.mxu0 0.0
    %1420 = vmatprep.subr.mxu0 0.0
    %1421 = vmatpush1.msra.mxu0 0.0
    %1422 = vmatprep.subr.mxu0 0.0
    %1423 = vmatpush1.msra.mxu0 0.0
    %1424 = vmatprep.subr.mxu0 0.0
    %1425 = vmatpush1.msra.mxu0 0.0
    %1426 = vmatprep.subr.mxu0 0.0
    %1427 = vmatpush1.msra.mxu0 0.0
    %1428 = vmatprep.subr.mxu0 0.0
    %1429 = vmatpush1.msra.mxu0 0.0
    %1430 = vmatprep.subr.mxu0 0.0
    %1431 = vmatpush1.msra.mxu0 0.0
    %1432 = vmatprep.subr.mxu0 0.0
    %1433 = vmatpush1.msra.mxu0 0.0
    %1434 = vmatprep.subr.mxu0 0.0
    %1435 = vmatpush1.msra.mxu0 0.0
    %1436 = vmatprep.subr.mxu0 0.0
    %1437 = vmatpush1.msra.mxu0 0.0
    %1438 = vmatprep.subr.mxu0 0.0
    %1439 = vmatpush1.msra.mxu0 0.0
    %1440 = vmatprep.subr.mxu0 0.0
    %1441 = vmatpush1.msra.mxu0 0.0
    %1442 = vmatprep.subr.mxu0 0.0
    %1443 = vmatpush1.msra.mxu0 0.0
    %1444 = vmatprep.subr.mxu0 0.0
    %1445 = vmatpush1.msra.mxu0 0.0
    %1446 = vmatprep.subr.mxu0 0.0
    %1447 = vmatpush1.msra.mxu0 0.0
    %1448 = vmatprep.subr.mxu0 0.0
    %1449 = vmatpush1.msra.mxu0 0.0
    %1450 = vmatprep.subr.mxu0 0.0
    %1451 = vmatpush1.msra.mxu0 0.0
    %1452 = vmatprep.subr.mxu0 0.0
    %1453 = vmatpush1.msra.mxu0 0.0
    %1454 = vmatprep.subr.mxu0 0.0
    %1455 = vmatpush1.msra.mxu0 0.0
    %1456 = vmatprep.subr.mxu0 0.0
    %1457 = vmatpush1.msra.mxu0 0.0
    %1458 = vmatprep.subr.mxu0 0.0
    %1459 = vmatpush1.msra.mxu0 0.0
    %1460 = vmatprep.subr.mxu0 0.0
    %1461 = vmatpush1.msra.mxu0 0.0
    %1462 = vmatprep.subr.mxu0 0.0
    %1463 = vmatpush1.msra.mxu0 0.0
    %1464 = vmatprep.subr.mxu0 0.0
    %1465 = vmatpush1.msra.mxu0 0.0
    %1466 = vmatprep.subr.mxu0 0.0
    %1467 = vmatpush1.msra.mxu0 0.0
    %1468 = vmatprep.subr.mxu0 0.0
    %1469 = vmatpush1.msra.mxu0 0.0
    %1470 = vmatprep.subr.mxu0 0.0
    %1471 = vmatpush1.msra.mxu0 0.0
    %1472 = vmatprep.subr.mxu0 0.0
    %1473 = vmatpush1.msra.mxu0 0.0
    %1474 = vmatprep.subr.mxu0 0.0
    %1475 = vmatpush1.msra.mxu0 0.0
    %1476 = vmatprep.subr.mxu0 0.0
    %1477 = vmatpush1.msra.mxu0 0.0
    %1478 = vmatprep.mubr.f32.mxu0 0.0
    %1479 = vmatmul.mubr.f32.gmra.mrb[0].mxu0 %v1328
    %v1480 = vpop.f32.mrb[0].mxu0
    %v1481 = vadd.f32 0.0, %v1480
    %v1482 = vpop.f32.mrb[0].mxu0
    %v1483 = vadd.f32 0.0, %v1482
    %1484 = vdwg.mxu0
    %1485 = vmatprep.subr.mxu0 %v1341
    %1486 = vmatpush1.msra.mxu0 %v1339
    %1487 = vmatprep.subr.mxu0 0.0
    %1488 = vmatpush1.msra.mxu0 0.0
    %1489 = vmatprep.subr.mxu0 0.0
    %1490 = vmatpush1.msra.mxu0 0.0
    %1491 = vmatprep.subr.mxu0 0.0
    %1492 = vmatpush1.msra.mxu0 0.0
    %1493 = vmatprep.subr.mxu0 0.0
    %1494 = vmatpush1.msra.mxu0 0.0
    %1495 = vmatprep.subr.mxu0 0.0
    %1496 = vmatpush1.msra.mxu0 0.0
    %1497 = vmatprep.subr.mxu0 0.0
    %1498 = vmatpush1.msra.mxu0 0.0
    %1499 = vmatprep.subr.mxu0 0.0
    %1500 = vmatpush1.msra.mxu0 0.0
    %1501 = vmatprep.subr.mxu0 0.0
    %1502 = vmatpush1.msra.mxu0 0.0
    %1503 = vmatprep.subr.mxu0 0.0
    %1504 = vmatpush1.msra.mxu0 0.0
    %1505 = vmatprep.subr.mxu0 0.0
    %1506 = vmatpush1.msra.mxu0 0.0
    %1507 = vmatprep.subr.mxu0 0.0
    %1508 = vmatpush1.msra.mxu0 0.0
    %1509 = vmatprep.subr.mxu0 0.0
    %1510 = vmatpush1.msra.mxu0 0.0
    %1511 = vmatprep.subr.mxu0 0.0
    %1512 = vmatpush1.msra.mxu0 0.0
    %1513 = vmatprep.subr.mxu0 0.0
    %1514 = vmatpush1.msra.mxu0 0.0
    %1515 = vmatprep.subr.mxu0 0.0
    %1516 = vmatpush1.msra.mxu0 0.0
    %1517 = vmatprep.subr.mxu0 0.0
    %1518 = vmatpush1.msra.mxu0 0.0
    %1519 = vmatprep.subr.mxu0 0.0
    %1520 = vmatpush1.msra.mxu0 0.0
    %1521 = vmatprep.subr.mxu0 0.0
    %1522 = vmatpush1.msra.mxu0 0.0
    %1523 = vmatprep.subr.mxu0 0.0
    %1524 = vmatpush1.msra.mxu0 0.0
    %1525 = vmatprep.subr.mxu0 0.0
    %1526 = vmatpush1.msra.mxu0 0.0
    %1527 = vmatprep.subr.mxu0 0.0
    %1528 = vmatpush1.msra.mxu0 0.0
    %1529 = vmatprep.subr.mxu0 0.0
    %1530 = vmatpush1.msra.mxu0 0.0
    %1531 = vmatprep.subr.mxu0 0.0
    %1532 = vmatpush1.msra.mxu0 0.0
    %1533 = vmatprep.subr.mxu0 0.0
    %1534 = vmatpush1.msra.mxu0 0.0
    %1535 = vmatprep.subr.mxu0 0.0
    %1536 = vmatpush1.msra.mxu0 0.0
    %1537 = vmatprep.subr.mxu0 0.0
    %1538 = vmatpush1.msra.mxu0 0.0
    %1539 = vmatprep.subr.mxu0 0.0
    %1540 = vmatpush1.msra.mxu0 0.0
    %1541 = vmatprep.subr.mxu0 0.0
    %1542 = vmatpush1.msra.mxu0 0.0
    %1543 = vmatprep.subr.mxu0 0.0
    %1544 = vmatpush1.msra.mxu0 0.0
    %1545 = vmatprep.subr.mxu0 0.0
    %1546 = vmatpush1.msra.mxu0 0.0
    %1547 = vmatprep.subr.mxu0 0.0
    %1548 = vmatpush1.msra.mxu0 0.0
    %1549 = vmatprep.mubr.f32.mxu0 0.0
    %1550 = vmatmul.mubr.f32.gmra.mrb[0].mxu0 %v1328
    %v1551 = vpop.f32.mrb[0].mxu0
    %v1552 = vadd.f32 0.0, %v1551
    %v1553 = vpop.f32.mrb[0].mxu0
    %v1554 = vadd.f32 0.0, %v1553
    %1555 = vdwg.mxu0
    %v1556 = vadd.f32 %v1300, %v1410
    %v1557 = vadd.f32 %v1301, %v1412
    %v1558 = vadd.f32 %v1302, %v1481
    %v1559 = vadd.f32 %v1303, %v1483
    %v1560 = vadd.f32 %v1304, %v1552
    %v1561 = vadd.f32 %v1305, %v1554
    %1562 = vrot.lane.b32.xlu0 %v27, 92
    %v1563 = vpop.permute.xlu0 %1562
    %1564 = vrot.lane.b32.xlu0 %v42, 92
    %v1565 = vpop.permute.xlu0 %1564
    %1566 = vrot.lane.b32.xlu0 %v28, 92
    %v1567 = vpop.permute.xlu0 %1566
    %vm1568 = vcmask 752640
    %v1569 = vsel %vm1568, %v1563, %v1565
    %v1570 = vsel %vm1568, %v1565, %v1567
    %1572 = vrot.lane.b32.xlu0 %v29, 32
    %v1573 = vpop.permute.xlu0 %1572
    %1574 = vrot.lane.b32.xlu0 %v45, 32
    %v1575 = vpop.permute.xlu0 %1574
    %1576 = vrot.lane.b32.xlu0 %v30, 32
    %v1577 = vpop.permute.xlu0 %1576
    %vm1578 = vcmask 261120
    %v1579 = vsel %vm1578, %v1573, %v1575
    %v1580 = vsel %vm1578, %v1575, %v1577
    %v1582 = vsel %vm52, %v1567, %v1573
    %v1584 = vsel %vm78, %v37, 0
    %v1586 = vsel %vm82, %v1569, 0
    %v1588 = vsel %vm82, %v1570, 0
    %v1591 = vsel %vm82, %v1582, 0
    %v1593 = vsel %vm82, %v1579, 0
    %v1595 = vsel %vm82, %v1580, 0
    %v1597 = vsel %vm82, %v1577, 0
    %1599 = vmatprep.subr.mxu0 %v1588
    %1600 = vmatpush1.msra.mxu0 %v1586
    %1601 = vmatprep.subr.mxu0 0.0
    %1602 = vmatpush1.msra.mxu0 0.0
    %1603 = vmatprep.subr.mxu0 0.0
    %1604 = vmatpush1.msra.mxu0 0.0
    %1605 = vmatprep.subr.mxu0 0.0
    %1606 = vmatpush1.msra.mxu0 0.0
    %1607 = vmatprep.subr.mxu0 0.0
    %1608 = vmatpush1.msra.mxu0 0.0
    %1609 = vmatprep.subr.mxu0 0.0
    %1610 = vmatpush1.msra.mxu0 0.0
    %1611 = vmatprep.subr.mxu0 0.0
    %1612 = vmatpush1.msra.mxu0 0.0
    %1613 = vmatprep.subr.mxu0 0.0
    %1614 = vmatpush1.msra.mxu0 0.0
    %1615 = vmatprep.subr.mxu0 0.0
    %1616 = vmatpush1.msra.mxu0 0.0
    %1617 = vmatprep.subr.mxu0 0.0
    %1618 = vmatpush1.msra.mxu0 0.0
    %1619 = vmatprep.subr.mxu0 0.0
    %1620 = vmatpush1.msra.mxu0 0.0
    %1621 = vmatprep.subr.mxu0 0.0
    %1622 = vmatpush1.msra.mxu0 0.0
    %1623 = vmatprep.subr.mxu0 0.0
    %1624 = vmatpush1.msra.mxu0 0.0
    %1625 = vmatprep.subr.mxu0 0.0
    %1626 = vmatpush1.msra.mxu0 0.0
    %1627 = vmatprep.subr.mxu0 0.0
    %1628 = vmatpush1.msra.mxu0 0.0
    %1629 = vmatprep.subr.mxu0 0.0
    %1630 = vmatpush1.msra.mxu0 0.0
    %1631 = vmatprep.subr.mxu0 0.0
    %1632 = vmatpush1.msra.mxu0 0.0
    %1633 = vmatprep.subr.mxu0 0.0
    %1634 = vmatpush1.msra.mxu0 0.0
    %1635 = vmatprep.subr.mxu0 0.0
    %1636 = vmatpush1.msra.mxu0 0.0
    %1637 = vmatprep.subr.mxu0 0.0
    %1638 = vmatpush1.msra.mxu0 0.0
    %1639 = vmatprep.subr.mxu0 0.0
    %1640 = vmatpush1.msra.mxu0 0.0
    %1641 = vmatprep.subr.mxu0 0.0
    %1642 = vmatpush1.msra.mxu0 0.0
    %1643 = vmatprep.subr.mxu0 0.0
    %1644 = vmatpush1.msra.mxu0 0.0
    %1645 = vmatprep.subr.mxu0 0.0
    %1646 = vmatpush1.msra.mxu0 0.0
    %1647 = vmatprep.subr.mxu0 0.0
    %1648 = vmatpush1.msra.mxu0 0.0
    %1649 = vmatprep.subr.mxu0 0.0
    %1650 = vmatpush1.msra.mxu0 0.0
    %1651 = vmatprep.subr.mxu0 0.0
    %1652 = vmatpush1.msra.mxu0 0.0
    %1653 = vmatprep.subr.mxu0 0.0
    %1654 = vmatpush1.msra.mxu0 0.0
    %1655 = vmatprep.subr.mxu0 0.0
    %1656 = vmatpush1.msra.mxu0 0.0
    %1657 = vmatprep.subr.mxu0 0.0
    %1658 = vmatpush1.msra.mxu0 0.0
    %1659 = vmatprep.subr.mxu0 0.0
    %1660 = vmatpush1.msra.mxu0 0.0
    %1661 = vmatprep.subr.mxu0 0.0
    %1662 = vmatpush1.msra.mxu0 0.0
    %1663 = vmatprep.mubr.f32.mxu0 0.0
    %1664 = vmatmul.mubr.f32.gmra.mrb[0].mxu0 %v1584
    %v1665 = vpop.f32.mrb[0].mxu0
    %v1666 = vadd.f32 0.0, %v1665
    %v1667 = vpop.f32.mrb[0].mxu0
    %v1668 = vadd.f32 0.0, %v1667
    %1669 = vdwg.mxu0
    %1670 = vmatprep.subr.mxu0 %v1593
    %1671 = vmatpush1.msra.mxu0 %v1591
    %1672 = vmatprep.subr.mxu0 0.0
    %1673 = vmatpush1.msra.mxu0 0.0
    %1674 = vmatprep.subr.mxu0 0.0
    %1675 = vmatpush1.msra.mxu0 0.0
    %1676 = vmatprep.subr.mxu0 0.0
    %1677 = vmatpush1.msra.mxu0 0.0
    %1678 = vmatprep.subr.mxu0 0.0
    %1679 = vmatpush1.msra.mxu0 0.0
    %1680 = vmatprep.subr.mxu0 0.0
    %1681 = vmatpush1.msra.mxu0 0.0
    %1682 = vmatprep.subr.mxu0 0.0
    %1683 = vmatpush1.msra.mxu0 0.0
    %1684 = vmatprep.subr.mxu0 0.0
    %1685 = vmatpush1.msra.mxu0 0.0
    %1686 = vmatprep.subr.mxu0 0.0
    %1687 = vmatpush1.msra.mxu0 0.0
    %1688 = vmatprep.subr.mxu0 0.0
    %1689 = vmatpush1.msra.mxu0 0.0
    %1690 = vmatprep.subr.mxu0 0.0
    %1691 = vmatpush1.msra.mxu0 0.0
    %1692 = vmatprep.subr.mxu0 0.0
    %1693 = vmatpush1.msra.mxu0 0.0
    %1694 = vmatprep.subr.mxu0 0.0
    %1695 = vmatpush1.msra.mxu0 0.0
    %1696 = vmatprep.subr.mxu0 0.0
    %1697 = vmatpush1.msra.mxu0 0.0
    %1698 = vmatprep.subr.mxu0 0.0
    %1699 = vmatpush1.msra.mxu0 0.0
    %1700 = vmatprep.subr.mxu0 0.0
    %1701 = vmatpush1.msra.mxu0 0.0
    %1702 = vmatprep.subr.mxu0 0.0
    %1703 = vmatpush1.msra.mxu0 0.0
    %1704 = vmatprep.subr.mxu0 0.0
    %1705 = vmatpush1.msra.mxu0 0.0
    %1706 = vmatprep.subr.mxu0 0.0
    %1707 = vmatpush1.msra.mxu0 0.0
    %1708 = vmatprep.subr.mxu0 0.0
    %1709 = vmatpush1.msra.mxu0 0.0
    %1710 = vmatprep.subr.mxu0 0.0
    %1711 = vmatpush1.msra.mxu0 0.0
    %1712 = vmatprep.subr.mxu0 0.0
    %1713 = vmatpush1.msra.mxu0 0.0
    %1714 = vmatprep.subr.mxu0 0.0
    %1715 = vmatpush1.msra.mxu0 0.0
    %1716 = vmatprep.subr.mxu0 0.0
    %1717 = vmatpush1.msra.mxu0 0.0
    %1718 = vmatprep.subr.mxu0 0.0
    %1719 = vmatpush1.msra.mxu0 0.0
    %1720 = vmatprep.subr.mxu0 0.0
    %1721 = vmatpush1.msra.mxu0 0.0
    %1722 = vmatprep.subr.mxu0 0.0
    %1723 = vmatpush1.msra.mxu0 0.0
    %1724 = vmatprep.subr.mxu0 0.0
    %1725 = vmatpush1.msra.mxu0 0.0
    %1726 = vmatprep.subr.mxu0 0.0
    %1727 = vmatpush1.msra.mxu0 0.0
    %1728 = vmatprep.subr.mxu0 0.0
    %1729 = vmatpush1.msra.mxu0 0.0
    %1730 = vmatprep.subr.mxu0 0.0
    %1731 = vmatpush1.msra.mxu0 0.0
    %1732 = vmatprep.subr.mxu0 0.0
    %1733 = vmatpush1.msra.mxu0 0.0
    %1734 = vmatprep.mubr.f32.mxu0 0.0
    %1735 = vmatmul.mubr.f32.gmra.mrb[0].mxu0 %v1584
    %v1736 = vpop.f32.mrb[0].mxu0
    %v1737 = vadd.f32 0.0, %v1736
    %v1738 = vpop.f32.mrb[0].mxu0
    %v1739 = vadd.f32 0.0, %v1738
    %1740 = vdwg.mxu0
    %1741 = vmatprep.subr.mxu0 %v1597
    %1742 = vmatpush1.msra.mxu0 %v1595
    %1743 = vmatprep.subr.mxu0 0.0
    %1744 = vmatpush1.msra.mxu0 0.0
    %1745 = vmatprep.subr.mxu0 0.0
    %1746 = vmatpush1.msra.mxu0 0.0
    %1747 = vmatprep.subr.mxu0 0.0
    %1748 = vmatpush1.msra.mxu0 0.0
    %1749 = vmatprep.subr.mxu0 0.0
    %1750 = vmatpush1.msra.mxu0 0.0
    %1751 = vmatprep.subr.mxu0 0.0
    %1752 = vmatpush1.msra.mxu0 0.0
    %1753 = vmatprep.subr.mxu0 0.0
    %1754 = vmatpush1.msra.mxu0 0.0
    %1755 = vmatprep.subr.mxu0 0.0
    %1756 = vmatpush1.msra.mxu0 0.0
    %1757 = vmatprep.subr.mxu0 0.0
    %1758 = vmatpush1.msra.mxu0 0.0
    %1759 = vmatprep.subr.mxu0 0.0
    %1760 = vmatpush1.msra.mxu0 0.0
    %1761 = vmatprep.subr.mxu0 0.0
    %1762 = vmatpush1.msra.mxu0 0.0
    %1763 = vmatprep.subr.mxu0 0.0
    %1764 = vmatpush1.msra.mxu0 0.0
    %1765 = vmatprep.subr.mxu0 0.0
    %1766 = vmatpush1.msra.mxu0 0.0
    %1767 = vmatprep.subr.mxu0 0.0
    %1768 = vmatpush1.msra.mxu0 0.0
    %1769 = vmatprep.subr.mxu0 0.0
    %1770 = vmatpush1.msra.mxu0 0.0
    %1771 = vmatprep.subr.mxu0 0.0
    %1772 = vmatpush1.msra.mxu0 0.0
    %1773 = vmatprep.subr.mxu0 0.0
    %1774 = vmatpush1.msra.mxu0 0.0
    %1775 = vmatprep.subr.mxu0 0.0
    %1776 = vmatpush1.msra.mxu0 0.0
    %1777 = vmatprep.subr.mxu0 0.0
    %1778 = vmatpush1.msra.mxu0 0.0
    %1779 = vmatprep.subr.mxu0 0.0
    %1780 = vmatpush1.msra.mxu0 0.0
    %1781 = vmatprep.subr.mxu0 0.0
    %1782 = vmatpush1.msra.mxu0 0.0
    %1783 = vmatprep.subr.mxu0 0.0
    %1784 = vmatpush1.msra.mxu0 0.0
    %1785 = vmatprep.subr.mxu0 0.0
    %1786 = vmatpush1.msra.mxu0 0.0
    %1787 = vmatprep.subr.mxu0 0.0
    %1788 = vmatpush1.msra.mxu0 0.0
    %1789 = vmatprep.subr.mxu0 0.0
    %1790 = vmatpush1.msra.mxu0 0.0
    %1791 = vmatprep.subr.mxu0 0.0
    %1792 = vmatpush1.msra.mxu0 0.0
    %1793 = vmatprep.subr.mxu0 0.0
    %1794 = vmatpush1.msra.mxu0 0.0
    %1795 = vmatprep.subr.mxu0 0.0
    %1796 = vmatpush1.msra.mxu0 0.0
    %1797 = vmatprep.subr.mxu0 0.0
    %1798 = vmatpush1.msra.mxu0 0.0
    %1799 = vmatprep.subr.mxu0 0.0
    %1800 = vmatpush1.msra.mxu0 0.0
    %1801 = vmatprep.subr.mxu0 0.0
    %1802 = vmatpush1.msra.mxu0 0.0
    %1803 = vmatprep.subr.mxu0 0.0
    %1804 = vmatpush1.msra.mxu0 0.0
    %1805 = vmatprep.mubr.f32.mxu0 0.0
    %1806 = vmatmul.mubr.f32.gmra.mrb[0].mxu0 %v1584
    %v1807 = vpop.f32.mrb[0].mxu0
    %v1808 = vadd.f32 0.0, %v1807
    %v1809 = vpop.f32.mrb[0].mxu0
    %v1810 = vadd.f32 0.0, %v1809
    %1811 = vdwg.mxu0
    %v1812 = vadd.f32 %v1556, %v1666
    %v1813 = vadd.f32 %v1557, %v1668
    %v1814 = vadd.f32 %v1558, %v1737
    %v1815 = vadd.f32 %v1559, %v1739
    %v1816 = vadd.f32 %v1560, %v1808
    %v1817 = vadd.f32 %v1561, %v1810
    %1818 = vrot.lane.b32.xlu0 %v27, 91
    %v1819 = vpop.permute.xlu0 %1818
    %1820 = vrot.lane.b32.xlu0 %v42, 91
    %v1821 = vpop.permute.xlu0 %1820
    %1822 = vrot.lane.b32.xlu0 %v28, 91
    %v1823 = vpop.permute.xlu0 %1822
    %vm1824 = vcmask 744448
    %v1825 = vsel %vm1824, %v1819, %v1821
    %v1826 = vsel %vm1824, %v1821, %v1823
    %1828 = vrot.lane.b32.xlu0 %v29, 31
    %v1829 = vpop.permute.xlu0 %1828
    %1830 = vrot.lane.b32.xlu0 %v45, 31
    %v1831 = vpop.permute.xlu0 %1830
    %1832 = vrot.lane.b32.xlu0 %v30, 31
    %v1833 = vpop.permute.xlu0 %1832
    %vm1834 = vcmask 252928
    %v1835 = vsel %vm1834, %v1829, %v1831
    %v1836 = vsel %vm1834, %v1831, %v1833
    %v1838 = vsel %vm52, %v1823, %v1829
    %v1840 = vsel %vm78, %v38, 0
    %v1842 = vsel %vm82, %v1825, 0
    %v1844 = vsel %vm82, %v1826, 0
    %v1847 = vsel %vm82, %v1838, 0
    %v1849 = vsel %vm82, %v1835, 0
    %v1851 = vsel %vm82, %v1836, 0
    %v1853 = vsel %vm82, %v1833, 0
    %1855 = vmatprep.subr.mxu0 %v1844
    %1856 = vmatpush1.msra.mxu0 %v1842
    %1857 = vmatprep.subr.mxu0 0.0
    %1858 = vmatpush1.msra.mxu0 0.0
    %1859 = vmatprep.subr.mxu0 0.0
    %1860 = vmatpush1.msra.mxu0 0.0
    %1861 = vmatprep.subr.mxu0 0.0
    %1862 = vmatpush1.msra.mxu0 0.0
    %1863 = vmatprep.subr.mxu0 0.0
    %1864 = vmatpush1.msra.mxu0 0.0
    %1865 = vmatprep.subr.mxu0 0.0
    %1866 = vmatpush1.msra.mxu0 0.0
    %1867 = vmatprep.subr.mxu0 0.0
    %1868 = vmatpush1.msra.mxu0 0.0
    %1869 = vmatprep.subr.mxu0 0.0
    %1870 = vmatpush1.msra.mxu0 0.0
    %1871 = vmatprep.subr.mxu0 0.0
    %1872 = vmatpush1.msra.mxu0 0.0
    %1873 = vmatprep.subr.mxu0 0.0
    %1874 = vmatpush1.msra.mxu0 0.0
    %1875 = vmatprep.subr.mxu0 0.0
    %1876 = vmatpush1.msra.mxu0 0.0
    %1877 = vmatprep.subr.mxu0 0.0
    %1878 = vmatpush1.msra.mxu0 0.0
    %1879 = vmatprep.subr.mxu0 0.0
    %1880 = vmatpush1.msra.mxu0 0.0
    %1881 = vmatprep.subr.mxu0 0.0
    %1882 = vmatpush1.msra.mxu0 0.0
    %1883 = vmatprep.subr.mxu0 0.0
    %1884 = vmatpush1.msra.mxu0 0.0
    %1885 = vmatprep.subr.mxu0 0.0
    %1886 = vmatpush1.msra.mxu0 0.0
    %1887 = vmatprep.subr.mxu0 0.0
    %1888 = vmatpush1.msra.mxu0 0.0
    %1889 = vmatprep.subr.mxu0 0.0
    %1890 = vmatpush1.msra.mxu0 0.0
    %1891 = vmatprep.subr.mxu0 0.0
    %1892 = vmatpush1.msra.mxu0 0.0
    %1893 = vmatprep.subr.mxu0 0.0
    %1894 = vmatpush1.msra.mxu0 0.0
    %1895 = vmatprep.subr.mxu0 0.0
    %1896 = vmatpush1.msra.mxu0 0.0
    %1897 = vmatprep.subr.mxu0 0.0
    %1898 = vmatpush1.msra.mxu0 0.0
    %1899 = vmatprep.subr.mxu0 0.0
    %1900 = vmatpush1.msra.mxu0 0.0
    %1901 = vmatprep.subr.mxu0 0.0
    %1902 = vmatpush1.msra.mxu0 0.0
    %1903 = vmatprep.subr.mxu0 0.0
    %1904 = vmatpush1.msra.mxu0 0.0
    %1905 = vmatprep.subr.mxu0 0.0
    %1906 = vmatpush1.msra.mxu0 0.0
    %1907 = vmatprep.subr.mxu0 0.0
    %1908 = vmatpush1.msra.mxu0 0.0
    %1909 = vmatprep.subr.mxu0 0.0
    %1910 = vmatpush1.msra.mxu0 0.0
    %1911 = vmatprep.subr.mxu0 0.0
    %1912 = vmatpush1.msra.mxu0 0.0
    %1913 = vmatprep.subr.mxu0 0.0
    %1914 = vmatpush1.msra.mxu0 0.0
    %1915 = vmatprep.subr.mxu0 0.0
    %1916 = vmatpush1.msra.mxu0 0.0
    %1917 = vmatprep.subr.mxu0 0.0
    %1918 = vmatpush1.msra.mxu0 0.0
    %1919 = vmatprep.mubr.f32.mxu0 0.0
    %1920 = vmatmul.mubr.f32.gmra.mrb[0].mxu0 %v1840
    %v1921 = vpop.f32.mrb[0].mxu0
    %v1922 = vadd.f32 0.0, %v1921
    %v1923 = vpop.f32.mrb[0].mxu0
    %v1924 = vadd.f32 0.0, %v1923
    %1925 = vdwg.mxu0
    %1926 = vmatprep.subr.mxu0 %v1849
    %1927 = vmatpush1.msra.mxu0 %v1847
    %1928 = vmatprep.subr.mxu0 0.0
    %1929 = vmatpush1.msra.mxu0 0.0
    %1930 = vmatprep.subr.mxu0 0.0
    %1931 = vmatpush1.msra.mxu0 0.0
    %1932 = vmatprep.subr.mxu0 0.0
    %1933 = vmatpush1.msra.mxu0 0.0
    %1934 = vmatprep.subr.mxu0 0.0
    %1935 = vmatpush1.msra.mxu0 0.0
    %1936 = vmatprep.subr.mxu0 0.0
    %1937 = vmatpush1.msra.mxu0 0.0
    %1938 = vmatprep.subr.mxu0 0.0
    %1939 = vmatpush1.msra.mxu0 0.0
    %1940 = vmatprep.subr.mxu0 0.0
    %1941 = vmatpush1.msra.mxu0 0.0
    %1942 = vmatprep.subr.mxu0 0.0
    %1943 = vmatpush1.msra.mxu0 0.0
    %1944 = vmatprep.subr.mxu0 0.0
    %1945 = vmatpush1.msra.mxu0 0.0
    %1946 = vmatprep.subr.mxu0 0.0
    %1947 = vmatpush1.msra.mxu0 0.0
    %1948 = vmatprep.subr.mxu0 0.0
    %1949 = vmatpush1.msra.mxu0 0.0
    %1950 = vmatprep.subr.mxu0 0.0
    %1951 = vmatpush1.msra.mxu0 0.0
    %1952 = vmatprep.subr.mxu0 0.0
    %1953 = vmatpush1.msra.mxu0 0.0
    %1954 = vmatprep.subr.mxu0 0.0
    %1955 = vmatpush1.msra.mxu0 0.0
    %1956 = vmatprep.subr.mxu0 0.0
    %1957 = vmatpush1.msra.mxu0 0.0
    %1958 = vmatprep.subr.mxu0 0.0
    %1959 = vmatpush1.msra.mxu0 0.0
    %1960 = vmatprep.subr.mxu0 0.0
    %1961 = vmatpush1.msra.mxu0 0.0
    %1962 = vmatprep.subr.mxu0 0.0
    %1963 = vmatpush1.msra.mxu0 0.0
    %1964 = vmatprep.subr.mxu0 0.0
    %1965 = vmatpush1.msra.mxu0 0.0
    %1966 = vmatprep.subr.mxu0 0.0
    %1967 = vmatpush1.msra.mxu0 0.0
    %1968 = vmatprep.subr.mxu0 0.0
    %1969 = vmatpush1.msra.mxu0 0.0
    %1970 = vmatprep.subr.mxu0 0.0
    %1971 = vmatpush1.msra.mxu0 0.0
    %1972 = vmatprep.subr.mxu0 0.0
    %1973 = vmatpush1.msra.mxu0 0.0
    %1974 = vmatprep.subr.mxu0 0.0
    %1975 = vmatpush1.msra.mxu0 0.0
    %1976 = vmatprep.subr.mxu0 0.0
    %1977 = vmatpush1.msra.mxu0 0.0
    %1978 = vmatprep.subr.mxu0 0.0
    %1979 = vmatpush1.msra.mxu0 0.0
    %1980 = vmatprep.subr.mxu0 0.0
    %1981 = vmatpush1.msra.mxu0 0.0
    %1982 = vmatprep.subr.mxu0 0.0
    %1983 = vmatpush1.msra.mxu0 0.0
    %1984 = vmatprep.subr.mxu0 0.0
    %1985 = vmatpush1.msra.mxu0 0.0
    %1986 = vmatprep.subr.mxu0 0.0
    %1987 = vmatpush1.msra.mxu0 0.0
    %1988 = vmatprep.subr.mxu0 0.0
    %1989 = vmatpush1.msra.mxu0 0.0
    %1990 = vmatprep.mubr.f32.mxu0 0.0
    %1991 = vmatmul.mubr.f32.gmra.mrb[0].mxu0 %v1840
    %v1992 = vpop.f32.mrb[0].mxu0
    %v1993 = vadd.f32 0.0, %v1992
    %v1994 = vpop.f32.mrb[0].mxu0
    %v1995 = vadd.f32 0.0, %v1994
    %1996 = vdwg.mxu0
    %1997 = vmatprep.subr.mxu0 %v1853
    %1998 = vmatpush1.msra.mxu0 %v1851
    %1999 = vmatprep.subr.mxu0 0.0
    %2000 = vmatpush1.msra.mxu0 0.0
    %2001 = vmatprep.subr.mxu0 0.0
    %2002 = vmatpush1.msra.mxu0 0.0
    %2003 = vmatprep.subr.mxu0 0.0
    %2004 = vmatpush1.msra.mxu0 0.0
    %2005 = vmatprep.subr.mxu0 0.0
    %2006 = vmatpush1.msra.mxu0 0.0
    %2007 = vmatprep.subr.mxu0 0.0
    %2008 = vmatpush1.msra.mxu0 0.0
    %2009 = vmatprep.subr.mxu0 0.0
    %2010 = vmatpush1.msra.mxu0 0.0
    %2011 = vmatprep.subr.mxu0 0.0
    %2012 = vmatpush1.msra.mxu0 0.0
    %2013 = vmatprep.subr.mxu0 0.0
    %2014 = vmatpush1.msra.mxu0 0.0
    %2015 = vmatprep.subr.mxu0 0.0
    %2016 = vmatpush1.msra.mxu0 0.0
    %2017 = vmatprep.subr.mxu0 0.0
    %2018 = vmatpush1.msra.mxu0 0.0
    %2019 = vmatprep.subr.mxu0 0.0
    %2020 = vmatpush1.msra.mxu0 0.0
    %2021 = vmatprep.subr.mxu0 0.0
    %2022 = vmatpush1.msra.mxu0 0.0
    %2023 = vmatprep.subr.mxu0 0.0
    %2024 = vmatpush1.msra.mxu0 0.0
    %2025 = vmatprep.subr.mxu0 0.0
    %2026 = vmatpush1.msra.mxu0 0.0
    %2027 = vmatprep.subr.mxu0 0.0
    %2028 = vmatpush1.msra.mxu0 0.0
    %2029 = vmatprep.subr.mxu0 0.0
    %2030 = vmatpush1.msra.mxu0 0.0
    %2031 = vmatprep.subr.mxu0 0.0
    %2032 = vmatpush1.msra.mxu0 0.0
    %2033 = vmatprep.subr.mxu0 0.0
    %2034 = vmatpush1.msra.mxu0 0.0
    %2035 = vmatprep.subr.mxu0 0.0
    %2036 = vmatpush1.msra.mxu0 0.0
    %2037 = vmatprep.subr.mxu0 0.0
    %2038 = vmatpush1.msra.mxu0 0.0
    %2039 = vmatprep.subr.mxu0 0.0
    %2040 = vmatpush1.msra.mxu0 0.0
    %2041 = vmatprep.subr.mxu0 0.0
    %2042 = vmatpush1.msra.mxu0 0.0
    %2043 = vmatprep.subr.mxu0 0.0
    %2044 = vmatpush1.msra.mxu0 0.0
    %2045 = vmatprep.subr.mxu0 0.0
    %2046 = vmatpush1.msra.mxu0 0.0
    %2047 = vmatprep.subr.mxu0 0.0
    %2048 = vmatpush1.msra.mxu0 0.0
    %2049 = vmatprep.subr.mxu0 0.0
    %2050 = vmatpush1.msra.mxu0 0.0
    %2051 = vmatprep.subr.mxu0 0.0
    %2052 = vmatpush1.msra.mxu0 0.0
    %2053 = vmatprep.subr.mxu0 0.0
    %2054 = vmatpush1.msra.mxu0 0.0
    %2055 = vmatprep.subr.mxu0 0.0
    %2056 = vmatpush1.msra.mxu0 0.0
    %2057 = vmatprep.subr.mxu0 0.0
    %2058 = vmatpush1.msra.mxu0 0.0
    %2059 = vmatprep.subr.mxu0 0.0
    %2060 = vmatpush1.msra.mxu0 0.0
    %2061 = vmatprep.mubr.f32.mxu0 0.0
    %2062 = vmatmul.mubr.f32.gmra.mrb[0].mxu0 %v1840
    %v2063 = vpop.f32.mrb[0].mxu0
    %v2064 = vadd.f32 0.0, %v2063
    %v2065 = vpop.f32.mrb[0].mxu0
    %v2066 = vadd.f32 0.0, %v2065
    %2067 = vdwg.mxu0
    %v2068 = vadd.f32 %v1812, %v1922
    %v2069 = vadd.f32 %v1813, %v1924
    %v2070 = vadd.f32 %v1814, %v1993
    %v2071 = vadd.f32 %v1815, %v1995
    %v2072 = vadd.f32 %v1816, %v2064
    %v2073 = vadd.f32 %v1817, %v2066
    %2074 = vrot.lane.b32.xlu0 %v27, 90
    %v2075 = vpop.permute.xlu0 %2074
    %2076 = vrot.lane.b32.xlu0 %v42, 90
    %v2077 = vpop.permute.xlu0 %2076
    %2078 = vrot.lane.b32.xlu0 %v28, 90
    %v2079 = vpop.permute.xlu0 %2078
    %vm2080 = vcmask 736256
    %v2081 = vsel %vm2080, %v2075, %v2077
    %v2082 = vsel %vm2080, %v2077, %v2079
    %2084 = vrot.lane.b32.xlu0 %v29, 30
    %v2085 = vpop.permute.xlu0 %2084
    %2086 = vrot.lane.b32.xlu0 %v45, 30
    %v2087 = vpop.permute.xlu0 %2086
    %2088 = vrot.lane.b32.xlu0 %v30, 30
    %v2089 = vpop.permute.xlu0 %2088
    %vm2090 = vcmask 244736
    %v2091 = vsel %vm2090, %v2085, %v2087
    %v2092 = vsel %vm2090, %v2087, %v2089
    %v2094 = vsel %vm52, %v2079, %v2085
    %v2096 = vsel %vm78, %v39, 0
    %v2098 = vsel %vm82, %v2081, 0
    %v2100 = vsel %vm82, %v2082, 0
    %v2103 = vsel %vm82, %v2094, 0
    %v2105 = vsel %vm82, %v2091, 0
    %v2107 = vsel %vm82, %v2092, 0
    %v2109 = vsel %vm82, %v2089, 0
    %2111 = vmatprep.subr.mxu0 %v2100
    %2112 = vmatpush1.msra.mxu0 %v2098
    %2113 = vmatprep.subr.mxu0 0.0
    %2114 = vmatpush1.msra.mxu0 0.0
    %2115 = vmatprep.subr.mxu0 0.0
    %2116 = vmatpush1.msra.mxu0 0.0
    %2117 = vmatprep.subr.mxu0 0.0
    %2118 = vmatpush1.msra.mxu0 0.0
    %2119 = vmatprep.subr.mxu0 0.0
    %2120 = vmatpush1.msra.mxu0 0.0
    %2121 = vmatprep.subr.mxu0 0.0
    %2122 = vmatpush1.msra.mxu0 0.0
    %2123 = vmatprep.subr.mxu0 0.0
    %2124 = vmatpush1.msra.mxu0 0.0
    %2125 = vmatprep.subr.mxu0 0.0
    %2126 = vmatpush1.msra.mxu0 0.0
    %2127 = vmatprep.subr.mxu0 0.0
    %2128 = vmatpush1.msra.mxu0 0.0
    %2129 = vmatprep.subr.mxu0 0.0
    %2130 = vmatpush1.msra.mxu0 0.0
    %2131 = vmatprep.subr.mxu0 0.0
    %2132 = vmatpush1.msra.mxu0 0.0
    %2133 = vmatprep.subr.mxu0 0.0
    %2134 = vmatpush1.msra.mxu0 0.0
    %2135 = vmatprep.subr.mxu0 0.0
    %2136 = vmatpush1.msra.mxu0 0.0
    %2137 = vmatprep.subr.mxu0 0.0
    %2138 = vmatpush1.msra.mxu0 0.0
    %2139 = vmatprep.subr.mxu0 0.0
    %2140 = vmatpush1.msra.mxu0 0.0
    %2141 = vmatprep.subr.mxu0 0.0
    %2142 = vmatpush1.msra.mxu0 0.0
    %2143 = vmatprep.subr.mxu0 0.0
    %2144 = vmatpush1.msra.mxu0 0.0
    %2145 = vmatprep.subr.mxu0 0.0
    %2146 = vmatpush1.msra.mxu0 0.0
    %2147 = vmatprep.subr.mxu0 0.0
    %2148 = vmatpush1.msra.mxu0 0.0
    %2149 = vmatprep.subr.mxu0 0.0
    %2150 = vmatpush1.msra.mxu0 0.0
    %2151 = vmatprep.subr.mxu0 0.0
    %2152 = vmatpush1.msra.mxu0 0.0
    %2153 = vmatprep.subr.mxu0 0.0
    %2154 = vmatpush1.msra.mxu0 0.0
    %2155 = vmatprep.subr.mxu0 0.0
    %2156 = vmatpush1.msra.mxu0 0.0
    %2157 = vmatprep.subr.mxu0 0.0
    %2158 = vmatpush1.msra.mxu0 0.0
    %2159 = vmatprep.subr.mxu0 0.0
    %2160 = vmatpush1.msra.mxu0 0.0
    %2161 = vmatprep.subr.mxu0 0.0
    %2162 = vmatpush1.msra.mxu0 0.0
    %2163 = vmatprep.subr.mxu0 0.0
    %2164 = vmatpush1.msra.mxu0 0.0
    %2165 = vmatprep.subr.mxu0 0.0
    %2166 = vmatpush1.msra.mxu0 0.0
    %2167 = vmatprep.subr.mxu0 0.0
    %2168 = vmatpush1.msra.mxu0 0.0
    %2169 = vmatprep.subr.mxu0 0.0
    %2170 = vmatpush1.msra.mxu0 0.0
    %2171 = vmatprep.subr.mxu0 0.0
    %2172 = vmatpush1.msra.mxu0 0.0
    %2173 = vmatprep.subr.mxu0 0.0
    %2174 = vmatpush1.msra.mxu0 0.0
    %2175 = vmatprep.mubr.f32.mxu0 0.0
    %2176 = vmatmul.mubr.f32.gmra.mrb[0].mxu0 %v2096
    %v2177 = vpop.f32.mrb[0].mxu0
    %v2178 = vadd.f32 0.0, %v2177
    %v2179 = vpop.f32.mrb[0].mxu0
    %v2180 = vadd.f32 0.0, %v2179
    %2181 = vdwg.mxu0
    %2182 = vmatprep.subr.mxu0 %v2105
    %2183 = vmatpush1.msra.mxu0 %v2103
    %2184 = vmatprep.subr.mxu0 0.0
    %2185 = vmatpush1.msra.mxu0 0.0
    %2186 = vmatprep.subr.mxu0 0.0
    %2187 = vmatpush1.msra.mxu0 0.0
    %2188 = vmatprep.subr.mxu0 0.0
    %2189 = vmatpush1.msra.mxu0 0.0
    %2190 = vmatprep.subr.mxu0 0.0
    %2191 = vmatpush1.msra.mxu0 0.0
    %2192 = vmatprep.subr.mxu0 0.0
    %2193 = vmatpush1.msra.mxu0 0.0
    %2194 = vmatprep.subr.mxu0 0.0
    %2195 = vmatpush1.msra.mxu0 0.0
    %2196 = vmatprep.subr.mxu0 0.0
    %2197 = vmatpush1.msra.mxu0 0.0
    %2198 = vmatprep.subr.mxu0 0.0
    %2199 = vmatpush1.msra.mxu0 0.0
    %2200 = vmatprep.subr.mxu0 0.0
    %2201 = vmatpush1.msra.mxu0 0.0
    %2202 = vmatprep.subr.mxu0 0.0
    %2203 = vmatpush1.msra.mxu0 0.0
    %2204 = vmatprep.subr.mxu0 0.0
    %2205 = vmatpush1.msra.mxu0 0.0
    %2206 = vmatprep.subr.mxu0 0.0
    %2207 = vmatpush1.msra.mxu0 0.0
    %2208 = vmatprep.subr.mxu0 0.0
    %2209 = vmatpush1.msra.mxu0 0.0
    %2210 = vmatprep.subr.mxu0 0.0
    %2211 = vmatpush1.msra.mxu0 0.0
    %2212 = vmatprep.subr.mxu0 0.0
    %2213 = vmatpush1.msra.mxu0 0.0
    %2214 = vmatprep.subr.mxu0 0.0
    %2215 = vmatpush1.msra.mxu0 0.0
    %2216 = vmatprep.subr.mxu0 0.0
    %2217 = vmatpush1.msra.mxu0 0.0
    %2218 = vmatprep.subr.mxu0 0.0
    %2219 = vmatpush1.msra.mxu0 0.0
    %2220 = vmatprep.subr.mxu0 0.0
    %2221 = vmatpush1.msra.mxu0 0.0
    %2222 = vmatprep.subr.mxu0 0.0
    %2223 = vmatpush1.msra.mxu0 0.0
    %2224 = vmatprep.subr.mxu0 0.0
    %2225 = vmatpush1.msra.mxu0 0.0
    %2226 = vmatprep.subr.mxu0 0.0
    %2227 = vmatpush1.msra.mxu0 0.0
    %2228 = vmatprep.subr.mxu0 0.0
    %2229 = vmatpush1.msra.mxu0 0.0
    %2230 = vmatprep.subr.mxu0 0.0
    %2231 = vmatpush1.msra.mxu0 0.0
    %2232 = vmatprep.subr.mxu0 0.0
    %2233 = vmatpush1.msra.mxu0 0.0
    %2234 = vmatprep.subr.mxu0 0.0
    %2235 = vmatpush1.msra.mxu0 0.0
    %2236 = vmatprep.subr.mxu0 0.0
    %2237 = vmatpush1.msra.mxu0 0.0
    %2238 = vmatprep.subr.mxu0 0.0
    %2239 = vmatpush1.msra.mxu0 0.0
    %2240 = vmatprep.subr.mxu0 0.0
    %2241 = vmatpush1.msra.mxu0 0.0
    %2242 = vmatprep.subr.mxu0 0.0
    %2243 = vmatpush1.msra.mxu0 0.0
    %2244 = vmatprep.subr.mxu0 0.0
    %2245 = vmatpush1.msra.mxu0 0.0
    %2246 = vmatprep.mubr.f32.mxu0 0.0
    %2247 = vmatmul.mubr.f32.gmra.mrb[0].mxu0 %v2096
    %v2248 = vpop.f32.mrb[0].mxu0
    %v2249 = vadd.f32 0.0, %v2248
    %v2250 = vpop.f32.mrb[0].mxu0
    %v2251 = vadd.f32 0.0, %v2250
    %2252 = vdwg.mxu0
    %2253 = vmatprep.subr.mxu0 %v2109
    %2254 = vmatpush1.msra.mxu0 %v2107
    %2255 = vmatprep.subr.mxu0 0.0
    %2256 = vmatpush1.msra.mxu0 0.0
    %2257 = vmatprep.subr.mxu0 0.0
    %2258 = vmatpush1.msra.mxu0 0.0
    %2259 = vmatprep.subr.mxu0 0.0
    %2260 = vmatpush1.msra.mxu0 0.0
    %2261 = vmatprep.subr.mxu0 0.0
    %2262 = vmatpush1.msra.mxu0 0.0
    %2263 = vmatprep.subr.mxu0 0.0
    %2264 = vmatpush1.msra.mxu0 0.0
    %2265 = vmatprep.subr.mxu0 0.0
    %2266 = vmatpush1.msra.mxu0 0.0
    %2267 = vmatprep.subr.mxu0 0.0
    %2268 = vmatpush1.msra.mxu0 0.0
    %2269 = vmatprep.subr.mxu0 0.0
    %2270 = vmatpush1.msra.mxu0 0.0
    %2271 = vmatprep.subr.mxu0 0.0
    %2272 = vmatpush1.msra.mxu0 0.0
    %2273 = vmatprep.subr.mxu0 0.0
    %2274 = vmatpush1.msra.mxu0 0.0
    %2275 = vmatprep.subr.mxu0 0.0
    %2276 = vmatpush1.msra.mxu0 0.0
    %2277 = vmatprep.subr.mxu0 0.0
    %2278 = vmatpush1.msra.mxu0 0.0
    %2279 = vmatprep.subr.mxu0 0.0
    %2280 = vmatpush1.msra.mxu0 0.0
    %2281 = vmatprep.subr.mxu0 0.0
    %2282 = vmatpush1.msra.mxu0 0.0
    %2283 = vmatprep.subr.mxu0 0.0
    %2284 = vmatpush1.msra.mxu0 0.0
    %2285 = vmatprep.subr.mxu0 0.0
    %2286 = vmatpush1.msra.mxu0 0.0
    %2287 = vmatprep.subr.mxu0 0.0
    %2288 = vmatpush1.msra.mxu0 0.0
    %2289 = vmatprep.subr.mxu0 0.0
    %2290 = vmatpush1.msra.mxu0 0.0
    %2291 = vmatprep.subr.mxu0 0.0
    %2292 = vmatpush1.msra.mxu0 0.0
    %2293 = vmatprep.subr.mxu0 0.0
    %2294 = vmatpush1.msra.mxu0 0.0
    %2295 = vmatprep.subr.mxu0 0.0
    %2296 = vmatpush1.msra.mxu0 0.0
    %2297 = vmatprep.subr.mxu0 0.0
    %2298 = vmatpush1.msra.mxu0 0.0
    %2299 = vmatprep.subr.mxu0 0.0
    %2300 = vmatpush1.msra.mxu0 0.0
    %2301 = vmatprep.subr.mxu0 0.0
    %2302 = vmatpush1.msra.mxu0 0.0
    %2303 = vmatprep.subr.mxu0 0.0
    %2304 = vmatpush1.msra.mxu0 0.0
    %2305 = vmatprep.subr.mxu0 0.0
    %2306 = vmatpush1.msra.mxu0 0.0
    %2307 = vmatprep.subr.mxu0 0.0
    %2308 = vmatpush1.msra.mxu0 0.0
    %2309 = vmatprep.subr.mxu0 0.0
    %2310 = vmatpush1.msra.mxu0 0.0
    %2311 = vmatprep.subr.mxu0 0.0
    %2312 = vmatpush1.msra.mxu0 0.0
    %2313 = vmatprep.subr.mxu0 0.0
    %2314 = vmatpush1.msra.mxu0 0.0
    %2315 = vmatprep.subr.mxu0 0.0
    %2316 = vmatpush1.msra.mxu0 0.0
    %2317 = vmatprep.mubr.f32.mxu0 0.0
    %2318 = vmatmul.mubr.f32.gmra.mrb[0].mxu0 %v2096
    %v2319 = vpop.f32.mrb[0].mxu0
    %v2320 = vadd.f32 0.0, %v2319
    %v2321 = vpop.f32.mrb[0].mxu0
    %v2322 = vadd.f32 0.0, %v2321
    %2323 = vdwg.mxu0
    %v2324 = vadd.f32 %v2068, %v2178
    %v2325 = vadd.f32 %v2069, %v2180
    %v2326 = vadd.f32 %v2070, %v2249
    %v2327 = vadd.f32 %v2071, %v2251
    %v2328 = vadd.f32 %v2072, %v2320
    %v2329 = vadd.f32 %v2073, %v2322
    %v2330 = vld [vmem:[%s2] sm:$0xff]
    %2332 = vset.pattern.permute.xlu0 0
    %2333 = vperm.xlu0 %2332, %v2330
    %v2334 = vpop.permute.xlu0 %2333
    %v2336 = vadd.f32 %v2324, %v2334
    %v2337 = vadd.f32 %v2325, %v2334
    %v2338 = vadd.f32 %v2326, %v2334
    %v2339 = vadd.f32 %v2327, %v2334
    %v2340 = vadd.f32 %v2328, %v2334
    %v2341 = vadd.f32 %v2329, %v2334
    %v2342 = vxor.u32 %v2336, 2147483648
    %v2343 = vxor.u32 %v2337, 2147483648
    %v2344 = vxor.u32 %v2338, 2147483648
    %v2345 = vxor.u32 %v2339, 2147483648
    %v2346 = vxor.u32 %v2340, 2147483648
    %v2347 = vxor.u32 %v2341, 2147483648
    %v2348 = vmul.f32 %v2342, 1.442695
    %v2349 = vpow.pop %v2348
    %v2350 = vmul.f32 %v2343, 1.442695
    %v2351 = vpow.pop %v2350
    %v2352 = vmul.f32 %v2344, 1.442695
    %v2353 = vpow.pop %v2352
    %v2354 = vmul.f32 %v2345, 1.442695
    %v2355 = vpow.pop %v2354
    %v2356 = vmul.f32 %v2346, 1.442695
    %v2357 = vpow.pop %v2356
    %v2358 = vmul.f32 %v2347, 1.442695
    %v2359 = vpow.pop %v2358
    %v2360 = vadd.f32 %v2349, 1.0
    %v2361 = vadd.f32 %v2351, 1.0
    %v2362 = vadd.f32 %v2353, 1.0
    %v2363 = vadd.f32 %v2355, 1.0
    %v2364 = vadd.f32 %v2357, 1.0
    %v2365 = vadd.f32 %v2359, 1.0
    %v2366 = vrcp.pop %v2360
    %v2367 = vmul.f32 1.0, %v2366
    %v2368 = vrcp.pop %v2361
    %v2369 = vmul.f32 1.0, %v2368
    %v2370 = vrcp.pop %v2362
    %v2371 = vmul.f32 1.0, %v2370
    %v2372 = vrcp.pop %v2363
    %v2373 = vmul.f32 1.0, %v2372
    %v2374 = vrcp.pop %v2364
    %v2375 = vmul.f32 1.0, %v2374
    %v2376 = vrcp.pop %v2365
    %v2377 = vmul.f32 1.0, %v2376
    %v2381 = vcombine.low %v2367, %v2369
    %v2383 = vunpack.c.l.s4 1966171168
    %v2384 = vunpack.c.0.s8 %v2383
    %v2385 = vlaneseq
    %v2386 = vshrl.u32 %v2385, 7
    %v2387 = vsub.s32 %v2384, %v2386
    %v2388 = vrot.slane %v2381, %v2387
    %v2390 = vunpack.c.l.s4 1966171168
    %v2391 = vunpack.c.0.s8 %v2390
    %v2392 = vlaneseq
    %v2393 = vshrl.u32 %v2392, 7
    %v2394 = vsub.s32 %v2391, %v2393
    %v2395 = vrot.slane %v2371, %v2394
    %v2396 = vcombine.low %v2388, %v2395
    %v2398 = vunpack.c.l.s4 1966171168
    %v2399 = vunpack.c.0.s8 %v2398
    %v2400 = vlaneseq
    %v2401 = vshrl.u32 %v2400, 7
    %v2402 = vsub.s32 %v2399, %v2401
    %v2403 = vrot.slane %v2396, %v2402
    %v2405 = vlaneseq
    %vm2406 = vcmp.ge.s32.totalorder %v2405, 0
    %vm2407 = vcmp.lt.s32.totalorder %v2405, 324
    %vm2408 = vmand %vm2406, %vm2407
    %2409 = vst.msk [vmem:[#allocation2] ss:$2 sm:$0x7] %vm2408, %v2403
    %v2410 = vcombine.high %v2388, %v2395
    %v2412 = vunpack.c.l.s4 1966171168
    %v2413 = vunpack.c.0.s8 %v2412
    %v2414 = vlaneseq
    %v2415 = vshrl.u32 %v2414, 7
    %v2416 = vsub.s32 %v2413, %v2415
    %v2417 = vrot.slane %v2410, %v2416
    %2418 = vrot.lane.b32.xlu0 %v2417, 68
    %v2419 = vpop.permute.xlu0 %2418
    %v2420 = vrot.slane %v2419, 7
    %v2421 = vsel %vm52, %v2420, %v2419
    %vm2423 = vcmp.ge.s32.totalorder %v2405, 68
    %vm2424 = vcmp.lt.s32.totalorder %v2405, 392
    %vm2425 = vmand %vm2423, %vm2424
    %s2426 = scalar_lea.vmem [#allocation2], 4
    %2427 = vst.msk [vmem:[%s2426] ss:$2 sm:$0xf] %vm2425, %v2421
    %v2428 = vcombine.high %v2403, %v2403
    %2429 = vrot.lane.b32.xlu0 %v2428, 8
    %v2430 = vpop.permute.xlu0 %2429
    %v2431 = vrot.slane %v2430, 7
    %vm2432 = vcmask 64512
    %v2433 = vsel %vm2432, %v2431, %v2430
    %vm2435 = vcmp.ge.s32.totalorder %v2405, 8
    %vm2436 = vcmp.lt.s32.totalorder %v2405, 332
    %vm2437 = vmand %vm2435, %vm2436
    %s2438 = scalar_lea.vmem [#allocation2], 10
    %2439 = vst.msk [vmem:[%s2438] ss:$2 sm:$0x7] %vm2437, %v2433
    %v2440 = vcombine.high %v2417, %v2417
    %2441 = vrot.lane.b32.xlu0 %v2440, 76
    %v2442 = vpop.permute.xlu0 %2441
    %v2443 = vrot.slane %v2442, 7
    %vm2444 = vcmask 621568
    %v2445 = vsel %vm2444, %v2443, %v2442
    %vm2447 = vcmp.ge.s32.totalorder %v2405, 76
    %vm2448 = vcmp.lt.s32.totalorder %v2405, 400
    %vm2449 = vmand %vm2447, %vm2448
    %s2450 = scalar_lea.vmem [#allocation2], 14
    %2451 = vst.msk [vmem:[%s2450] ss:$2 sm:$0xf] %vm2449, %v2445
    %v2452 = vcombine.high %v2367, %v2369
    %v2453 = vcombine.high %v2371, %v2371
    %v2455 = vunpack.c.l.s4 1966171168
    %v2456 = vunpack.c.0.s8 %v2455
    %v2457 = vlaneseq
    %v2458 = vshrl.u32 %v2457, 7
    %v2459 = vsub.s32 %v2456, %v2458
    %v2460 = vrot.slane %v2452, %v2459
    %v2462 = vunpack.c.l.s4 1966171168
    %v2463 = vunpack.c.0.s8 %v2462
    %v2464 = vlaneseq
    %v2465 = vshrl.u32 %v2464, 7
    %v2466 = vsub.s32 %v2463, %v2465
    %v2467 = vrot.slane %v2453, %v2466
    %v2468 = vcombine.low %v2460, %v2467
    %v2470 = vunpack.c.l.s4 1966171168
    %v2471 = vunpack.c.0.s8 %v2470
    %v2472 = vlaneseq
    %v2473 = vshrl.u32 %v2472, 7
    %v2474 = vsub.s32 %v2471, %v2473
    %v2475 = vrot.slane %v2468, %v2474
    %2476 = vrot.lane.b32.xlu0 %v2475, 16
    %v2477 = vpop.permute.xlu0 %2476
    %v2478 = vrot.slane %v2477, 7
    %vm2479 = vcmask 130048
    %v2480 = vsel %vm2479, %v2478, %v2477
    %vm2482 = vcmp.ge.s32.totalorder %v2405, 16
    %vm2483 = vcmp.lt.s32.totalorder %v2405, 340
    %vm2484 = vmand %vm2482, %vm2483
    %s2485 = scalar_lea.vmem [#allocation2], 20
    %2486 = vst.msk [vmem:[%s2485] ss:$2 sm:$0x7] %vm2484, %v2480
    %v2487 = vcombine.high %v2460, %v2467
    %v2489 = vunpack.c.l.s4 1966171168
    %v2490 = vunpack.c.0.s8 %v2489
    %v2491 = vlaneseq
    %v2492 = vshrl.u32 %v2491, 7
    %v2493 = vsub.s32 %v2490, %v2492
    %v2494 = vrot.slane %v2487, %v2493
    %2495 = vrot.lane.b32.xlu0 %v2494, 84
    %v2496 = vpop.permute.xlu0 %2495
    %v2497 = vrot.slane %v2496, 7
    %vm2498 = vcmask 687104
    %v2499 = vsel %vm2498, %v2497, %v2496
    %vm2501 = vcmp.ge.s32.totalorder %v2405, 84
    %vm2502 = vcmp.lt.s32.totalorder %v2405, 408
    %vm2503 = vmand %vm2501, %vm2502
    %s2504 = scalar_lea.vmem [#allocation2], 24
    %2505 = vst.msk [vmem:[%s2504] ss:$2 sm:$0xf] %vm2503, %v2499
    %v2506 = vcombine.high %v2475, %v2475
    %2507 = vrot.lane.b32.xlu0 %v2506, 24
    %v2508 = vpop.permute.xlu0 %2507
    %v2509 = vrot.slane %v2508, 7
    %vm2510 = vcmask 195584
    %v2511 = vsel %vm2510, %v2509, %v2508
    %vm2513 = vcmp.ge.s32.totalorder %v2405, 24
    %vm2514 = vcmp.lt.s32.totalorder %v2405, 348
    %vm2515 = vmand %vm2513, %vm2514
    %s2516 = scalar_lea.vmem [#allocation2], 30
    %2517 = vst.msk [vmem:[%s2516] ss:$2 sm:$0x7] %vm2515, %v2511
    %v2518 = vcombine.high %v2494, %v2494
    %2519 = vrot.lane.b32.xlu0 %v2518, 92
    %v2520 = vpop.permute.xlu0 %2519
    %v2521 = vrot.slane %v2520, 7
    %v2522 = vsel %vm1568, %v2521, %v2520
    %vm2524 = vcmp.ge.s32.totalorder %v2405, 92
    %vm2525 = vcmp.lt.s32.totalorder %v2405, 416
    %vm2526 = vmand %vm2524, %vm2525
    %s2527 = scalar_lea.vmem [#allocation2], 34
    %2528 = vst.msk [vmem:[%s2527] ss:$2 sm:$0xf] %vm2526, %v2522
    %v2532 = vcombine.low %v2371, %v2373
    %v2533 = vcombine.low %v2375, %v2377
    %v2535 = vunpack.c.l.s4 1966171168
    %v2536 = vunpack.c.0.s8 %v2535
    %v2537 = vlaneseq
    %v2538 = vshrl.u32 %v2537, 7
    %v2539 = vsub.s32 %v2536, %v2538
    %v2540 = vrot.slane %v2532, %v2539
    %v2542 = vunpack.c.l.s4 1966171168
    %v2543 = vunpack.c.0.s8 %v2542
    %v2544 = vlaneseq
    %v2545 = vshrl.u32 %v2544, 7
    %v2546 = vsub.s32 %v2543, %v2545
    %v2547 = vrot.slane %v2533, %v2546
    %v2548 = vcombine.low %v2540, %v2547
    %v2550 = vunpack.c.l.s4 1966171168
    %v2551 = vunpack.c.0.s8 %v2550
    %v2552 = vlaneseq
    %v2553 = vshrl.u32 %v2552, 7
    %v2554 = vsub.s32 %v2551, %v2553
    %v2555 = vrot.slane %v2548, %v2554
    %2556 = vrot.lane.b32.xlu0 %v2555, 60
    %v2557 = vpop.permute.xlu0 %2556
    %v2558 = vrot.slane %v2557, 1
    %vm2559 = vcmask 490496
    %v2560 = vsel %vm2559, %v2557, %v2558
    %s2562 = scalar_lea.vmem [#allocation2], 1
    %2563 = vst.msk [vmem:[%s2562] ss:$2 sm:$0x7] %vm2408, %v2560
    %v2564 = vcombine.high %v2540, %v2547
    %v2566 = vunpack.c.l.s4 1966171168
    %v2567 = vunpack.c.0.s8 %v2566
    %v2568 = vlaneseq
    %v2569 = vshrl.u32 %v2568, 7
    %v2570 = vsub.s32 %v2567, %v2569
    %v2571 = vrot.slane %v2564, %v2570
    %s2573 = scalar_lea.vmem [#allocation2], 5
    %2574 = vst.msk [vmem:[%s2573] ss:$2 sm:$0xf] %vm2425, %v2571
    %v2575 = vcombine.high %v2555, %v2555
    %2576 = vrot.lane.b32.xlu0 %v2575, 68
    %v2577 = vpop.permute.xlu0 %2576
    %v2578 = vrot.slane %v2577, 1
    %v2579 = vsel %vm52, %v2577, %v2578
    %s2581 = scalar_lea.vmem [#allocation2], 11
    %2582 = vst.msk [vmem:[%s2581] ss:$2 sm:$0x7] %vm2437, %v2579
    %v2583 = vcombine.high %v2571, %v2571
    %2584 = vrot.lane.b32.xlu0 %v2583, 8
    %v2585 = vpop.permute.xlu0 %2584
    %v2586 = vrot.slane %v2585, 7
    %v2587 = vsel %vm2432, %v2586, %v2585
    %s2589 = scalar_lea.vmem [#allocation2], 15
    %2590 = vst.msk [vmem:[%s2589] ss:$2 sm:$0xf] %vm2449, %v2587
    %v2591 = vcombine.high %v2371, %v2373
    %v2592 = vcombine.high %v2375, %v2377
    %v2594 = vunpack.c.l.s4 1966171168
    %v2595 = vunpack.c.0.s8 %v2594
    %v2596 = vlaneseq
    %v2597 = vshrl.u32 %v2596, 7
    %v2598 = vsub.s32 %v2595, %v2597
    %v2599 = vrot.slane %v2591, %v2598
    %v2601 = vunpack.c.l.s4 1966171168
    %v2602 = vunpack.c.0.s8 %v2601
    %v2603 = vlaneseq
    %v2604 = vshrl.u32 %v2603, 7
    %v2605 = vsub.s32 %v2602, %v2604
    %v2606 = vrot.slane %v2592, %v2605
    %v2607 = vcombine.low %v2599, %v2606
    %v2609 = vunpack.c.l.s4 1966171168
    %v2610 = vunpack.c.0.s8 %v2609
    %v2611 = vlaneseq
    %v2612 = vshrl.u32 %v2611, 7
    %v2613 = vsub.s32 %v2610, %v2612
    %v2614 = vrot.slane %v2607, %v2613
    %2615 = vrot.lane.b32.xlu0 %v2614, 76
    %v2616 = vpop.permute.xlu0 %2615
    %v2617 = vrot.slane %v2616, 1
    %v2618 = vsel %vm2444, %v2616, %v2617
    %s2620 = scalar_lea.vmem [#allocation2], 21
    %2621 = vst.msk [vmem:[%s2620] ss:$2 sm:$0x7] %vm2484, %v2618
    %v2622 = vcombine.high %v2599, %v2606
    %v2624 = vunpack.c.l.s4 1966171168
    %v2625 = vunpack.c.0.s8 %v2624
    %v2626 = vlaneseq
    %v2627 = vshrl.u32 %v2626, 7
    %v2628 = vsub.s32 %v2625, %v2627
    %v2629 = vrot.slane %v2622, %v2628
    %2630 = vrot.lane.b32.xlu0 %v2629, 16
    %v2631 = vpop.permute.xlu0 %2630
    %v2632 = vrot.slane %v2631, 7
    %v2633 = vsel %vm2479, %v2632, %v2631
    %s2635 = scalar_lea.vmem [#allocation2], 25
    %2636 = vst.msk [vmem:[%s2635] ss:$2 sm:$0xf] %vm2503, %v2633
    %v2637 = vcombine.high %v2614, %v2614
    %2638 = vrot.lane.b32.xlu0 %v2637, 84
    %v2639 = vpop.permute.xlu0 %2638
    %v2640 = vrot.slane %v2639, 1
    %v2641 = vsel %vm2498, %v2639, %v2640
    %s2643 = scalar_lea.vmem [#allocation2], 31
    %2644 = vst.msk [vmem:[%s2643] ss:$2 sm:$0x7] %vm2515, %v2641
    %v2645 = vcombine.high %v2629, %v2629
    %2646 = vrot.lane.b32.xlu0 %v2645, 24
    %v2647 = vpop.permute.xlu0 %2646
    %v2648 = vrot.slane %v2647, 7
    %v2649 = vsel %vm2510, %v2648, %v2647
    %s2651 = scalar_lea.vmem [#allocation2], 35
    %2652 = vst.msk [vmem:[%s2651] ss:$2 sm:$0xf] %vm2526, %v2649
    %v2653 = vld [vmem:[#allocation2] sm:$0xff]
    %v2654 = vld [vmem:[#allocation2 + $0x8] sm:$0xff]
    %v2655 = vld [vmem:[#allocation2 + $0x10] sm:$0xff]
    %v2656 = vld [vmem:[#allocation2 + $0x18] sm:$0xff]
    %v2657 = vld [vmem:[#allocation2 + $0x20] sm:$0xff]
    %v2658 = vld [vmem:[#allocation2 + $0x28] sm:$0x3]
    %v2659 = vld [vmem:[%s3] sm:$0xff]
    %v2660 = vld [vmem:[%s3 + $0x8] sm:$0xff]
    %v2661 = vld [vmem:[%s3 + $0x10] sm:$0xff]
    %v2662 = vld [vmem:[%s3 + $0x18] sm:$0xff]
    %v2663 = vld [vmem:[%s3 + $0x20] sm:$0xff]
    %v2664 = vld [vmem:[%s3 + $0x28] sm:$0xff]
    %v2665 = vld [vmem:[%s3 + $0x30] sm:$0xff]
    %v2666 = vld [vmem:[%s3 + $0x38] sm:$0xff]
    %v2667 = vld [vmem:[%s3 + $0x40] sm:$0xff]
    %v2668 = vld [vmem:[%s3 + $0x48] sm:$0xff]
    %v2669 = vld [vmem:[%s3 + $0x50] sm:$0xff]
    %v2670 = vld [vmem:[%s3 + $0x58] sm:$0xff]
    %v2671 = vld [vmem:[%s3 + $0x60] sm:$0xff]
    %v2672 = vld [vmem:[%s3 + $0x68] sm:$0xff]
    %v2673 = vld [vmem:[%s3 + $0x70] sm:$0xff]
    %v2674 = vld [vmem:[%s3 + $0x78] sm:$0xff]
    %v2675 = vld [vmem:[%s3 + $0x80] sm:$0xff]
    %v2676 = vld [vmem:[%s3 + $0x88] sm:$0xff]
    %v2677 = vld [vmem:[%s3 + $0x90] sm:$0xff]
    %v2678 = vld [vmem:[%s3 + $0x98] sm:$0xff]
    %v2679 = vld [vmem:[%s3 + $0xa0] sm:$0xff]
    %v2680 = vld [vmem:[%s3 + $0xa8] sm:$0xff]
    %v2681 = vld [vmem:[%s3 + $0xb0] sm:$0xff]
    %v2682 = vld [vmem:[%s3 + $0xb8] sm:$0xff]
    %v2683 = vld [vmem:[%s3 + $0xc0] sm:$0xff]
    %v2684 = vld [vmem:[%s3 + $0xc8] sm:$0xff]
    %v2685 = vld [vmem:[%s3 + $0xd0] sm:$0xff]
    %v2686 = vld [vmem:[%s3 + $0xd8] sm:$0xff]
    %v2687 = vld [vmem:[%s3 + $0xe0] sm:$0xff]
    %v2688 = vld [vmem:[%s3 + $0xe8] sm:$0xff]
    %v2689 = vld [vmem:[%s3 + $0xf0] sm:$0xff]
    %v2690 = vld [vmem:[%s3 + $0xf8] sm:$0xff]
    %v2691 = vld [vmem:[%s3 + $0x100] sm:$0xff]
    %v2692 = vld [vmem:[%s3 + $0x108] sm:$0xff]
    %v2693 = vld [vmem:[%s3 + $0x110] sm:$0xff]
    %v2694 = vld [vmem:[%s3 + $0x118] sm:$0xff]
    %v2695 = vld [vmem:[%s3 + $0x120] sm:$0xff]
    %v2696 = vld [vmem:[%s3 + $0x128] sm:$0xff]
    %v2697 = vld [vmem:[%s3 + $0x130] sm:$0xff]
    %v2698 = vld [vmem:[%s3 + $0x138] sm:$0xff]
    %v2699 = vld [vmem:[%s3 + $0x140] sm:$0xff]
    %v2700 = vld [vmem:[%s3 + $0x148] sm:$0xff]
    %v2701 = vld [vmem:[%s3 + $0x150] sm:$0xff]
    %v2702 = vld [vmem:[%s3 + $0x158] sm:$0xff]
    %v2703 = vld [vmem:[%s3 + $0x160] sm:$0xff]
    %v2704 = vld [vmem:[%s3 + $0x168] sm:$0xff]
    %v2705 = vld [vmem:[%s3 + $0x170] sm:$0xff]
    %v2706 = vld [vmem:[%s3 + $0x178] sm:$0xff]
    %v2707 = vld [vmem:[%s3 + $0x180] sm:$0xff]
    %v2708 = vld [vmem:[%s3 + $0x188] sm:$0xff]
    %v2709 = vld [vmem:[%s3 + $0x190] sm:$0xff]
    %v2710 = vld [vmem:[%s3 + $0x198] sm:$0xff]
    %v2711 = vld [vmem:[%s3 + $0x1a0] sm:$0xff]
    %v2712 = vld [vmem:[%s3 + $0x1a8] sm:$0xff]
    %v2713 = vld [vmem:[%s3 + $0x1b0] sm:$0xff]
    %v2714 = vld [vmem:[%s3 + $0x1b8] sm:$0xff]
    %v2715 = vld [vmem:[%s3 + $0x1c0] sm:$0xff]
    %v2716 = vld [vmem:[%s3 + $0x1c8] sm:$0xff]
    %v2717 = vld [vmem:[%s3 + $0x1d0] sm:$0xff]
    %v2718 = vld [vmem:[%s3 + $0x1d8] sm:$0xff]
    %v2719 = vld [vmem:[%s3 + $0x1e0] sm:$0xff]
    %v2720 = vld [vmem:[%s3 + $0x1e8] sm:$0xff]
    %v2721 = vld [vmem:[%s3 + $0x1f0] sm:$0xff]
    %v2722 = vld [vmem:[%s3 + $0x1f8] sm:$0xff]
    %v2723 = vld [vmem:[%s3 + $0x200] sm:$0xff]
    %v2724 = vld [vmem:[%s3 + $0x208] sm:$0xff]
    %v2725 = vld [vmem:[%s3 + $0x210] sm:$0xff]
    %v2726 = vld [vmem:[%s3 + $0x218] sm:$0xff]
    %v2727 = vld [vmem:[%s3 + $0x220] sm:$0xff]
    %v2728 = vld [vmem:[%s3 + $0x228] sm:$0xff]
    %v2729 = vld [vmem:[%s3 + $0x230] sm:$0xff]
    %v2730 = vld [vmem:[%s3 + $0x238] sm:$0xff]
    %v2731 = vld [vmem:[%s3 + $0x240] sm:$0xff]
    %v2732 = vld [vmem:[%s3 + $0x248] sm:$0xff]
    %v2733 = vld [vmem:[%s3 + $0x250] sm:$0xff]
    %v2734 = vld [vmem:[%s3 + $0x258] sm:$0xff]
    %v2735 = vld [vmem:[%s3 + $0x260] sm:$0xff]
    %v2736 = vld [vmem:[%s3 + $0x268] sm:$0xff]
    %v2737 = vld [vmem:[%s3 + $0x270] sm:$0xff]
    %v2738 = vld [vmem:[%s3 + $0x278] sm:$0xff]
    %v2739 = vld [vmem:[%s3 + $0x280] sm:$0xff]
    %v2740 = vld [vmem:[%s3 + $0x288] sm:$0xff]
    %v2741 = vld [vmem:[%s3 + $0x290] sm:$0xff]
    %v2742 = vld [vmem:[%s3 + $0x298] sm:$0xff]
    %v2743 = vld [vmem:[%s3 + $0x2a0] sm:$0xff]
    %v2744 = vld [vmem:[%s3 + $0x2a8] sm:$0xff]
    %v2745 = vld [vmem:[%s3 + $0x2b0] sm:$0xff]
    %v2746 = vld [vmem:[%s3 + $0x2b8] sm:$0xff]
    %v2747 = vld [vmem:[%s3 + $0x2c0] sm:$0xff]
    %v2748 = vld [vmem:[%s3 + $0x2c8] sm:$0xff]
    %v2749 = vld [vmem:[%s3 + $0x2d0] sm:$0xff]
    %v2750 = vld [vmem:[%s3 + $0x2d8] sm:$0xff]
    %v2751 = vld [vmem:[%s3 + $0x2e0] sm:$0xff]
    %v2752 = vld [vmem:[%s3 + $0x2e8] sm:$0xff]
    %v2753 = vld [vmem:[%s3 + $0x2f0] sm:$0xff]
    %v2754 = vld [vmem:[%s3 + $0x2f8] sm:$0xff]
    %v2755 = vld [vmem:[%s3 + $0x300] sm:$0xff]
    %v2756 = vld [vmem:[%s3 + $0x308] sm:$0xff]
    %v2757 = vld [vmem:[%s3 + $0x310] sm:$0xff]
    %v2758 = vld [vmem:[%s3 + $0x318] sm:$0xff]
    %v2759 = vld [vmem:[%s3 + $0x320] sm:$0xff]
    %v2760 = vld [vmem:[%s3 + $0x328] sm:$0xff]
    %v2761 = vld [vmem:[%s3 + $0x330] sm:$0xff]
    %v2762 = vld [vmem:[%s3 + $0x338] sm:$0xff]
    %v2763 = vld [vmem:[%s3 + $0x340] sm:$0xff]
    %v2764 = vld [vmem:[%s3 + $0x348] sm:$0xff]
    %v2765 = vld [vmem:[%s3 + $0x350] sm:$0xff]
    %v2766 = vld [vmem:[%s3 + $0x358] sm:$0xff]
    %v2767 = vld [vmem:[%s3 + $0x360] sm:$0xff]
    %v2768 = vld [vmem:[%s3 + $0x368] sm:$0xff]
    %v2769 = vld [vmem:[%s3 + $0x370] sm:$0xff]
    %v2770 = vld [vmem:[%s3 + $0x378] sm:$0xff]
    %v2771 = vld [vmem:[%s3 + $0x380] sm:$0xff]
    %v2772 = vld [vmem:[%s3 + $0x388] sm:$0xff]
    %v2773 = vld [vmem:[%s3 + $0x390] sm:$0xff]
    %v2774 = vld [vmem:[%s3 + $0x398] sm:$0xff]
    %v2775 = vld [vmem:[%s3 + $0x3a0] sm:$0xff]
    %v2776 = vld [vmem:[%s3 + $0x3a8] sm:$0xff]
    %v2777 = vld [vmem:[%s3 + $0x3b0] sm:$0xff]
    %v2778 = vld [vmem:[%s3 + $0x3b8] sm:$0xff]
    %v2779 = vld [vmem:[%s3 + $0x3c0] sm:$0xff]
    %v2780 = vld [vmem:[%s3 + $0x3c8] sm:$0xff]
    %v2781 = vld [vmem:[%s3 + $0x3d0] sm:$0xff]
    %v2782 = vld [vmem:[%s3 + $0x3d8] sm:$0xff]
    %v2783 = vld [vmem:[%s3 + $0x3e0] sm:$0xff]
    %v2784 = vld [vmem:[%s3 + $0x3e8] sm:$0xff]
    %v2785 = vld [vmem:[%s3 + $0x3f0] sm:$0xff]
    %v2786 = vld [vmem:[%s3 + $0x3f8] sm:$0xff]
    %v2787 = vld [vmem:[%s3 + $0x400] sm:$0xff]
    %v2788 = vld [vmem:[%s3 + $0x408] sm:$0xff]
    %v2789 = vld [vmem:[%s3 + $0x410] sm:$0xff]
    %v2790 = vld [vmem:[%s3 + $0x418] sm:$0xff]
    %v2791 = vld [vmem:[%s3 + $0x420] sm:$0xff]
    %v2792 = vld [vmem:[%s3 + $0x428] sm:$0xff]
    %v2793 = vld [vmem:[%s3 + $0x430] sm:$0xff]
    %v2794 = vld [vmem:[%s3 + $0x438] sm:$0xff]
    %v2795 = vld [vmem:[%s3 + $0x440] sm:$0xff]
    %v2796 = vld [vmem:[%s3 + $0x448] sm:$0xff]
    %v2797 = vld [vmem:[%s3 + $0x450] sm:$0xff]
    %v2798 = vld [vmem:[%s3 + $0x458] sm:$0xff]
    %v2799 = vld [vmem:[%s3 + $0x460] sm:$0xff]
    %v2800 = vld [vmem:[%s3 + $0x468] sm:$0xff]
    %v2801 = vld [vmem:[%s3 + $0x470] sm:$0xff]
    %v2802 = vld [vmem:[%s3 + $0x478] sm:$0xff]
    %v2803 = vld [vmem:[%s3 + $0x480] sm:$0xff]
    %v2804 = vld [vmem:[%s3 + $0x488] sm:$0xff]
    %v2805 = vld [vmem:[%s3 + $0x490] sm:$0xff]
    %v2806 = vld [vmem:[%s3 + $0x498] sm:$0xff]
    %v2807 = vld [vmem:[%s3 + $0x4a0] sm:$0xff]
    %v2808 = vld [vmem:[%s3 + $0x4a8] sm:$0xff]
    %v2809 = vld [vmem:[%s3 + $0x4b0] sm:$0xff]
    %v2810 = vld [vmem:[%s3 + $0x4b8] sm:$0xff]
    %v2811 = vld [vmem:[%s3 + $0x4c0] sm:$0xff]
    %v2812 = vld [vmem:[%s3 + $0x4c8] sm:$0xff]
    %v2813 = vld [vmem:[%s3 + $0x4d0] sm:$0xff]
    %v2814 = vld [vmem:[%s3 + $0x4d8] sm:$0xff]
    %v2815 = vld [vmem:[%s3 + $0x4e0] sm:$0xff]
    %v2816 = vld [vmem:[%s3 + $0x4e8] sm:$0xff]
    %v2817 = vld [vmem:[%s3 + $0x4f0] sm:$0xff]
    %v2818 = vld [vmem:[%s3 + $0x4f8] sm:$0xff]
    %v2819 = vld [vmem:[%s3 + $0x500] sm:$0xff]
    %v2820 = vld [vmem:[%s3 + $0x508] sm:$0xff]
    %v2821 = vld [vmem:[%s3 + $0x510] sm:$0xff]
    %v2822 = vld [vmem:[%s3 + $0x518] sm:$0xff]
    %v2823 = vld [vmem:[%s3 + $0x520] sm:$0xff]
    %v2824 = vld [vmem:[%s3 + $0x528] sm:$0xff]
    %v2825 = vld [vmem:[%s3 + $0x530] sm:$0xff]
    %v2826 = vld [vmem:[%s3 + $0x538] sm:$0xff]
    %v2827 = vld [vmem:[%s3 + $0x540] sm:$0xff]
    %v2828 = vld [vmem:[%s3 + $0x548] sm:$0xff]
    %v2829 = vld [vmem:[%s3 + $0x550] sm:$0xff]
    %v2830 = vld [vmem:[%s3 + $0x558] sm:$0xff]
    %v2831 = vld [vmem:[%s3 + $0x560] sm:$0xff]
    %v2832 = vld [vmem:[%s3 + $0x568] sm:$0xff]
    %v2833 = vld [vmem:[%s3 + $0x570] sm:$0xff]
    %v2834 = vld [vmem:[%s3 + $0x578] sm:$0xff]
    %v2835 = vld [vmem:[%s3 + $0x580] sm:$0xff]
    %v2836 = vld [vmem:[%s3 + $0x588] sm:$0xff]
    %v2837 = vld [vmem:[%s3 + $0x590] sm:$0xff]
    %v2838 = vld [vmem:[%s3 + $0x598] sm:$0xff]
    %v2839 = vld [vmem:[%s3 + $0x5a0] sm:$0xff]
    %v2840 = vld [vmem:[%s3 + $0x5a8] sm:$0xff]
    %v2841 = vld [vmem:[%s3 + $0x5b0] sm:$0xff]
    %v2842 = vld [vmem:[%s3 + $0x5b8] sm:$0xff]
    %v2843 = vld [vmem:[%s3 + $0x5c0] sm:$0xff]
    %v2844 = vld [vmem:[%s3 + $0x5c8] sm:$0xff]
    %v2845 = vld [vmem:[%s3 + $0x5d0] sm:$0xff]
    %v2846 = vld [vmem:[%s3 + $0x5d8] sm:$0xff]
    %v2847 = vld [vmem:[%s3 + $0x5e0] sm:$0xff]
    %v2848 = vld [vmem:[%s3 + $0x5e8] sm:$0xff]
    %v2849 = vld [vmem:[%s3 + $0x5f0] sm:$0xff]
    %v2850 = vld [vmem:[%s3 + $0x5f8] sm:$0xff]
    %v2851 = vld [vmem:[%s3 + $0x600] sm:$0xff]
    %v2852 = vld [vmem:[%s3 + $0x608] sm:$0xff]
    %v2853 = vld [vmem:[%s3 + $0x610] sm:$0xff]
    %v2854 = vld [vmem:[%s3 + $0x618] sm:$0xff]
    %v2855 = vld [vmem:[%s3 + $0x620] sm:$0xff]
    %v2856 = vld [vmem:[%s3 + $0x628] sm:$0xff]
    %v2857 = vld [vmem:[%s3 + $0x630] sm:$0xff]
    %v2858 = vld [vmem:[%s3 + $0x638] sm:$0xff]
    %v2859 = vld [vmem:[%s3 + $0x640] sm:$0xff]
    %v2860 = vld [vmem:[%s3 + $0x648] sm:$0xff]
    %v2861 = vld [vmem:[%s3 + $0x650] sm:$0xff]
    %v2862 = vld [vmem:[%s3 + $0x658] sm:$0xff]
    %v2863 = vld [vmem:[%s3 + $0x660] sm:$0xff]
    %v2864 = vld [vmem:[%s3 + $0x668] sm:$0xff]
    %v2865 = vld [vmem:[%s3 + $0x670] sm:$0xff]
    %v2866 = vld [vmem:[%s3 + $0x678] sm:$0xff]
    %v2867 = vld [vmem:[%s3 + $0x680] sm:$0xff]
    %v2868 = vld [vmem:[%s3 + $0x688] sm:$0xff]
    %v2869 = vld [vmem:[%s3 + $0x690] sm:$0xff]
    %v2870 = vld [vmem:[%s3 + $0x698] sm:$0xff]
    %v2871 = vld [vmem:[%s3 + $0x6a0] sm:$0xff]
    %v2872 = vld [vmem:[%s3 + $0x6a8] sm:$0xff]
    %v2873 = vld [vmem:[%s3 + $0x6b0] sm:$0xff]
    %v2874 = vld [vmem:[%s3 + $0x6b8] sm:$0xff]
    %v2875 = vld [vmem:[%s3 + $0x6c0] sm:$0xff]
    %v2876 = vld [vmem:[%s3 + $0x6c8] sm:$0xff]
    %v2877 = vld [vmem:[%s3 + $0x6d0] sm:$0xff]
    %v2878 = vld [vmem:[%s3 + $0x6d8] sm:$0xff]
    %v2879 = vld [vmem:[%s3 + $0x6e0] sm:$0xff]
    %v2880 = vld [vmem:[%s3 + $0x6e8] sm:$0xff]
    %v2881 = vld [vmem:[%s3 + $0x6f0] sm:$0xff]
    %v2882 = vld [vmem:[%s3 + $0x6f8] sm:$0xff]
    %v2883 = vld [vmem:[%s3 + $0x700] sm:$0xff]
    %v2884 = vld [vmem:[%s3 + $0x708] sm:$0xff]
    %v2885 = vld [vmem:[%s3 + $0x710] sm:$0xff]
    %v2886 = vld [vmem:[%s3 + $0x718] sm:$0xff]
    %v2887 = vld [vmem:[%s3 + $0x720] sm:$0xff]
    %v2888 = vld [vmem:[%s3 + $0x728] sm:$0xff]
    %v2889 = vld [vmem:[%s3 + $0x730] sm:$0xff]
    %v2890 = vld [vmem:[%s3 + $0x738] sm:$0xff]
    %v2891 = vld [vmem:[%s3 + $0x740] sm:$0xff]
    %v2892 = vld [vmem:[%s3 + $0x748] sm:$0xff]
    %v2893 = vld [vmem:[%s3 + $0x750] sm:$0xff]
    %v2894 = vld [vmem:[%s3 + $0x758] sm:$0xff]
    %v2895 = vld [vmem:[%s3 + $0x760] sm:$0xff]
    %v2896 = vld [vmem:[%s3 + $0x768] sm:$0xff]
    %v2897 = vld [vmem:[%s3 + $0x770] sm:$0xff]
    %v2898 = vld [vmem:[%s3 + $0x778] sm:$0xff]
    %v2899 = vld [vmem:[%s3 + $0x780] sm:$0xff]
    %v2900 = vld [vmem:[%s3 + $0x788] sm:$0xff]
    %v2901 = vld [vmem:[%s3 + $0x790] sm:$0xff]
    %v2902 = vld [vmem:[%s3 + $0x798] sm:$0xff]
    %v2903 = vld [vmem:[%s3 + $0x7a0] sm:$0xff]
    %v2904 = vld [vmem:[%s3 + $0x7a8] sm:$0xff]
    %v2905 = vld [vmem:[%s3 + $0x7b0] sm:$0xff]
    %v2906 = vld [vmem:[%s3 + $0x7b8] sm:$0xff]
    %v2907 = vld [vmem:[%s3 + $0x7c0] sm:$0xff]
    %v2908 = vld [vmem:[%s3 + $0x7c8] sm:$0xff]
    %v2909 = vld [vmem:[%s3 + $0x7d0] sm:$0xff]
    %v2910 = vld [vmem:[%s3 + $0x7d8] sm:$0xff]
    %v2911 = vld [vmem:[%s3 + $0x7e0] sm:$0xff]
    %v2912 = vld [vmem:[%s3 + $0x7e8] sm:$0xff]
    %v2913 = vld [vmem:[%s3 + $0x7f0] sm:$0xff]
    %v2914 = vld [vmem:[%s3 + $0x7f8] sm:$0xff]
    %v2915 = vld [vmem:[%s3 + $0x800] sm:$0xff]
    %v2916 = vld [vmem:[%s3 + $0x808] sm:$0xff]
    %v2917 = vld [vmem:[%s3 + $0x810] sm:$0xff]
    %v2918 = vld [vmem:[%s3 + $0x818] sm:$0xff]
    %v2919 = vld [vmem:[%s3 + $0x820] sm:$0xff]
    %v2920 = vld [vmem:[%s3 + $0x828] sm:$0xff]
    %v2921 = vld [vmem:[%s3 + $0x830] sm:$0xff]
    %v2922 = vld [vmem:[%s3 + $0x838] sm:$0xff]
    %v2923 = vld [vmem:[%s3 + $0x840] sm:$0xff]
    %v2924 = vld [vmem:[%s3 + $0x848] sm:$0xff]
    %v2925 = vld [vmem:[%s3 + $0x850] sm:$0xff]
    %v2926 = vld [vmem:[%s3 + $0x858] sm:$0xff]
    %v2927 = vld [vmem:[%s3 + $0x860] sm:$0xff]
    %v2928 = vld [vmem:[%s3 + $0x868] sm:$0xff]
    %v2929 = vld [vmem:[%s3 + $0x870] sm:$0xff]
    %v2930 = vld [vmem:[%s3 + $0x878] sm:$0xff]
    %v2931 = vld [vmem:[%s3 + $0x880] sm:$0xff]
    %v2932 = vld [vmem:[%s3 + $0x888] sm:$0xff]
    %v2933 = vld [vmem:[%s3 + $0x890] sm:$0xff]
    %v2934 = vld [vmem:[%s3 + $0x898] sm:$0xff]
    %v2935 = vld [vmem:[%s3 + $0x8a0] sm:$0xff]
    %v2936 = vld [vmem:[%s3 + $0x8a8] sm:$0xff]
    %v2937 = vld [vmem:[%s3 + $0x8b0] sm:$0xff]
    %v2938 = vld [vmem:[%s3 + $0x8b8] sm:$0xff]
    %v2939 = vld [vmem:[%s3 + $0x8c0] sm:$0xff]
    %v2940 = vld [vmem:[%s3 + $0x8c8] sm:$0xff]
    %v2941 = vld [vmem:[%s3 + $0x8d0] sm:$0xff]
    %v2942 = vld [vmem:[%s3 + $0x8d8] sm:$0xff]
    %v2943 = vld [vmem:[%s3 + $0x8e0] sm:$0xff]
    %v2944 = vld [vmem:[%s3 + $0x8e8] sm:$0xff]
    %v2945 = vld [vmem:[%s3 + $0x8f0] sm:$0xff]
    %v2946 = vld [vmem:[%s3 + $0x8f8] sm:$0xff]
    %v2947 = vld [vmem:[%s3 + $0x900] sm:$0xff]
    %v2948 = vld [vmem:[%s3 + $0x908] sm:$0xff]
    %v2949 = vld [vmem:[%s3 + $0x910] sm:$0xff]
    %v2950 = vld [vmem:[%s3 + $0x918] sm:$0xff]
    %v2951 = vld [vmem:[%s3 + $0x920] sm:$0xff]
    %v2952 = vld [vmem:[%s3 + $0x928] sm:$0xff]
    %v2953 = vld [vmem:[%s3 + $0x930] sm:$0xff]
    %v2954 = vld [vmem:[%s3 + $0x938] sm:$0xff]
    %v2955 = vld [vmem:[%s3 + $0x940] sm:$0xff]
    %v2956 = vld [vmem:[%s3 + $0x948] sm:$0xff]
    %v2957 = vld [vmem:[%s3 + $0x950] sm:$0xff]
    %v2958 = vld [vmem:[%s3 + $0x958] sm:$0xff]
    %v2959 = vld [vmem:[%s3 + $0x960] sm:$0xff]
    %v2960 = vld [vmem:[%s3 + $0x968] sm:$0xff]
    %v2961 = vld [vmem:[%s3 + $0x970] sm:$0xff]
    %v2962 = vld [vmem:[%s3 + $0x978] sm:$0xff]
    %v2963 = vld [vmem:[%s3 + $0x980] sm:$0xff]
    %v2964 = vld [vmem:[%s3 + $0x988] sm:$0xff]
    %v2965 = vld [vmem:[%s3 + $0x990] sm:$0xff]
    %v2966 = vld [vmem:[%s3 + $0x998] sm:$0xff]
    %v2967 = vld [vmem:[%s3 + $0x9a0] sm:$0xff]
    %v2968 = vld [vmem:[%s3 + $0x9a8] sm:$0xff]
    %v2969 = vld [vmem:[%s3 + $0x9b0] sm:$0xff]
    %v2970 = vld [vmem:[%s3 + $0x9b8] sm:$0xff]
    %v2971 = vld [vmem:[%s3 + $0x9c0] sm:$0xff]
    %v2972 = vld [vmem:[%s3 + $0x9c8] sm:$0xff]
    %v2973 = vld [vmem:[%s3 + $0x9d0] sm:$0xff]
    %v2974 = vld [vmem:[%s3 + $0x9d8] sm:$0xff]
    %v2975 = vld [vmem:[%s3 + $0x9e0] sm:$0xff]
    %v2976 = vld [vmem:[%s3 + $0x9e8] sm:$0xff]
    %v2977 = vld [vmem:[%s3 + $0x9f0] sm:$0xff]
    %v2978 = vld [vmem:[%s3 + $0x9f8] sm:$0xff]
    %v2979 = vld [vmem:[%s3 + $0xa00] sm:$0xff]
    %v2980 = vld [vmem:[%s3 + $0xa08] sm:$0xff]
    %v2981 = vld [vmem:[%s3 + $0xa10] sm:$0xff]
    %v2982 = vld [vmem:[%s3 + $0xa18] sm:$0xff]
    %v2983 = vld [vmem:[%s4] sm:$0x1]
    %v2985 = vlaneseq
    %v2986 = vshrl.u32 %v2985, 7
    %v2987 = vsub.s32 0, %v2986
    %v2988 = vrot.slane %v2983, %v2987
    %v2996 = vcombine.high %v2653, %v2653
    %v2998 = vunpack.c.l.s4 1983009808
    %v2999 = vunpack.c.0.s8 %v2998
    %v3000 = vlaneseq
    %v3001 = vshrl.u32 %v3000, 7
    %v3002 = vsub.s32 %v2999, %v3001
    %v3003 = vrot.slane %v2653, %v3002
    %v3005 = vunpack.c.l.s4 1983009808
    %v3006 = vunpack.c.0.s8 %v3005
    %v3007 = vlaneseq
    %v3008 = vshrl.u32 %v3007, 7
    %v3009 = vsub.s32 %v3006, %v3008
    %v3010 = vrot.slane %v2996, %v3009
    %v3011 = vcombine.high %v3003, %v3003
    %v3012 = vcombine.high %v3010, %v3010
    %v3013 = vcombine.high %v2654, %v2654
    %v3015 = vunpack.c.l.s4 1983009808
    %v3016 = vunpack.c.0.s8 %v3015
    %v3017 = vlaneseq
    %v3018 = vshrl.u32 %v3017, 7
    %v3019 = vsub.s32 %v3016, %v3018
    %v3020 = vrot.slane %v2654, %v3019
    %v3022 = vunpack.c.l.s4 1983009808
    %v3023 = vunpack.c.0.s8 %v3022
    %v3024 = vlaneseq
    %v3025 = vshrl.u32 %v3024, 7
    %v3026 = vsub.s32 %v3023, %v3025
    %v3027 = vrot.slane %v3013, %v3026
    %v3028 = vcombine.high %v3020, %v3020
    %v3029 = vcombine.high %v3027, %v3027
    %v3030 = vcombine.high %v2655, %v2655
    %v3032 = vunpack.c.l.s4 1983009808
    %v3033 = vunpack.c.0.s8 %v3032
    %v3034 = vlaneseq
    %v3035 = vshrl.u32 %v3034, 7
    %v3036 = vsub.s32 %v3033, %v3035
    %v3037 = vrot.slane %v2655, %v3036
    %v3039 = vunpack.c.l.s4 1983009808
    %v3040 = vunpack.c.0.s8 %v3039
    %v3041 = vlaneseq
    %v3042 = vshrl.u32 %v3041, 7
    %v3043 = vsub.s32 %v3040, %v3042
    %v3044 = vrot.slane %v3030, %v3043
    %v3045 = vcombine.high %v3037, %v3037
    %v3046 = vcombine.high %v3044, %v3044
    %v3047 = vcombine.high %v2656, %v2656
    %v3049 = vunpack.c.l.s4 1983009808
    %v3050 = vunpack.c.0.s8 %v3049
    %v3051 = vlaneseq
    %v3052 = vshrl.u32 %v3051, 7
    %v3053 = vsub.s32 %v3050, %v3052
    %v3054 = vrot.slane %v2656, %v3053
    %v3056 = vunpack.c.l.s4 1983009808
    %v3057 = vunpack.c.0.s8 %v3056
    %v3058 = vlaneseq
    %v3059 = vshrl.u32 %v3058, 7
    %v3060 = vsub.s32 %v3057, %v3059
    %v3061 = vrot.slane %v3047, %v3060
    %v3062 = vcombine.high %v3054, %v3054
    %v3063 = vcombine.high %v3061, %v3061
    %v3064 = vcombine.high %v2657, %v2657
    %v3066 = vunpack.c.l.s4 1983009808
    %v3067 = vunpack.c.0.s8 %v3066
    %v3068 = vlaneseq
    %v3069 = vshrl.u32 %v3068, 7
    %v3070 = vsub.s32 %v3067, %v3069
    %v3071 = vrot.slane %v2657, %v3070
    %v3073 = vunpack.c.l.s4 1983009808
    %v3074 = vunpack.c.0.s8 %v3073
    %v3075 = vlaneseq
    %v3076 = vshrl.u32 %v3075, 7
    %v3077 = vsub.s32 %v3074, %v3076
    %v3078 = vrot.slane %v3064, %v3077
    %v3079 = vcombine.high %v3071, %v3071
    %v3080 = vcombine.high %v3078, %v3078
    %v3082 = vunpack.c.l.s4 1983009808
    %v3083 = vunpack.c.0.s8 %v3082
    %v3084 = vlaneseq
    %v3085 = vshrl.u32 %v3084, 7
    %v3086 = vsub.s32 %v3083, %v3085
    %v3087 = vrot.slane %v2658, %v3086
    %v3108 = vsel %vm1578, %v3087, 0
    %3110 = vmatprep.subr.mxu0 0.0
    %3111 = vmatpush1.msra.mxu0 %v2659
    %3112 = vmatprep.subr.mxu0 0.0
    %3113 = vmatpush1.msra.mxu0 %v2660
    %3114 = vmatprep.subr.mxu0 0.0
    %3115 = vmatpush1.msra.mxu0 %v2661
    %3116 = vmatprep.subr.mxu0 0.0
    %3117 = vmatpush1.msra.mxu0 %v2662
    %3118 = vmatprep.subr.mxu0 0.0
    %3119 = vmatpush1.msra.mxu0 %v2663
    %3120 = vmatprep.subr.mxu0 0.0
    %3121 = vmatpush1.msra.mxu0 %v2664
    %3122 = vmatprep.subr.mxu0 0.0
    %3123 = vmatpush1.msra.mxu0 %v2665
    %3124 = vmatprep.subr.mxu0 0.0
    %3125 = vmatpush1.msra.mxu0 %v2666
    %3126 = vmatprep.subr.mxu0 0.0
    %3127 = vmatpush1.msra.mxu0 %v2667
    %3128 = vmatprep.subr.mxu0 0.0
    %3129 = vmatpush1.msra.mxu0 %v2668
    %3130 = vmatprep.subr.mxu0 0.0
    %3131 = vmatpush1.msra.mxu0 %v2669
    %3132 = vmatprep.subr.mxu0 0.0
    %3133 = vmatpush1.msra.mxu0 %v2670
    %3134 = vmatprep.subr.mxu0 0.0
    %3135 = vmatpush1.msra.mxu0 %v2671
    %3136 = vmatprep.subr.mxu0 0.0
    %3137 = vmatpush1.msra.mxu0 %v2672
    %3138 = vmatprep.subr.mxu0 0.0
    %3139 = vmatpush1.msra.mxu0 %v2673
    %3140 = vmatprep.subr.mxu0 0.0
    %3141 = vmatpush1.msra.mxu0 %v2674
    %3142 = vmatprep.subr.mxu0 0.0
    %3143 = vmatpush1.msra.mxu0 %v2675
    %3144 = vmatprep.subr.mxu0 0.0
    %3145 = vmatpush1.msra.mxu0 %v2676
    %3146 = vmatprep.subr.mxu0 0.0
    %3147 = vmatpush1.msra.mxu0 %v2677
    %3148 = vmatprep.subr.mxu0 0.0
    %3149 = vmatpush1.msra.mxu0 %v2678
    %3150 = vmatprep.subr.mxu0 0.0
    %3151 = vmatpush1.msra.mxu0 %v2679
    %3152 = vmatprep.subr.mxu0 0.0
    %3153 = vmatpush1.msra.mxu0 %v2680
    %3154 = vmatprep.subr.mxu0 0.0
    %3155 = vmatpush1.msra.mxu0 %v2681
    %3156 = vmatprep.subr.mxu0 0.0
    %3157 = vmatpush1.msra.mxu0 %v2682
    %3158 = vmatprep.subr.mxu0 0.0
    %3159 = vmatpush1.msra.mxu0 %v2683
    %3160 = vmatprep.subr.mxu0 0.0
    %3161 = vmatpush1.msra.mxu0 %v2684
    %3162 = vmatprep.subr.mxu0 0.0
    %3163 = vmatpush1.msra.mxu0 %v2685
    %3164 = vmatprep.subr.mxu0 0.0
    %3165 = vmatpush1.msra.mxu0 %v2686
    %3166 = vmatprep.subr.mxu0 0.0
    %3167 = vmatpush1.msra.mxu0 %v2687
    %3168 = vmatprep.subr.mxu0 0.0
    %3169 = vmatpush1.msra.mxu0 %v2688
    %3170 = vmatprep.subr.mxu0 0.0
    %3171 = vmatpush1.msra.mxu0 %v2689
    %3172 = vmatprep.subr.mxu0 0.0
    %3173 = vmatpush1.msra.mxu0 %v2690
    %3174 = vmatprep.mubr.f32.mxu0 %v3011
    %3175 = vmatmul.mubr.f32.gmra.mrb[0].mxu0 %v3003
    %v3176 = vpop.f32.mrb[0].mxu0
    %v3177 = vadd.f32 %v2988, %v3176
    %v3178 = vpop.f32.mrb[0].mxu0
    %3179 = vdwg.mxu0
    %3180 = vmatprep.subr.mxu0 0.0
    %3181 = vmatpush1.msra.mxu0 %v2691
    %3182 = vmatprep.subr.mxu0 0.0
    %3183 = vmatpush1.msra.mxu0 %v2692
    %3184 = vmatprep.subr.mxu0 0.0
    %3185 = vmatpush1.msra.mxu0 %v2693
    %3186 = vmatprep.subr.mxu0 0.0
    %3187 = vmatpush1.msra.mxu0 %v2694
    %3188 = vmatprep.subr.mxu0 0.0
    %3189 = vmatpush1.msra.mxu0 %v2695
    %3190 = vmatprep.subr.mxu0 0.0
    %3191 = vmatpush1.msra.mxu0 %v2696
    %3192 = vmatprep.subr.mxu0 0.0
    %3193 = vmatpush1.msra.mxu0 %v2697
    %3194 = vmatprep.subr.mxu0 0.0
    %3195 = vmatpush1.msra.mxu0 %v2698
    %3196 = vmatprep.subr.mxu0 0.0
    %3197 = vmatpush1.msra.mxu0 %v2699
    %3198 = vmatprep.subr.mxu0 0.0
    %3199 = vmatpush1.msra.mxu0 %v2700
    %3200 = vmatprep.subr.mxu0 0.0
    %3201 = vmatpush1.msra.mxu0 %v2701
    %3202 = vmatprep.subr.mxu0 0.0
    %3203 = vmatpush1.msra.mxu0 %v2702
    %3204 = vmatprep.subr.mxu0 0.0
    %3205 = vmatpush1.msra.mxu0 %v2703
    %3206 = vmatprep.subr.mxu0 0.0
    %3207 = vmatpush1.msra.mxu0 %v2704
    %3208 = vmatprep.subr.mxu0 0.0
    %3209 = vmatpush1.msra.mxu0 %v2705
    %3210 = vmatprep.subr.mxu0 0.0
    %3211 = vmatpush1.msra.mxu0 %v2706
    %3212 = vmatprep.subr.mxu0 0.0
    %3213 = vmatpush1.msra.mxu0 %v2707
    %3214 = vmatprep.subr.mxu0 0.0
    %3215 = vmatpush1.msra.mxu0 %v2708
    %3216 = vmatprep.subr.mxu0 0.0
    %3217 = vmatpush1.msra.mxu0 %v2709
    %3218 = vmatprep.subr.mxu0 0.0
    %3219 = vmatpush1.msra.mxu0 %v2710
    %3220 = vmatprep.subr.mxu0 0.0
    %3221 = vmatpush1.msra.mxu0 %v2711
    %3222 = vmatprep.subr.mxu0 0.0
    %3223 = vmatpush1.msra.mxu0 %v2712
    %3224 = vmatprep.subr.mxu0 0.0
    %3225 = vmatpush1.msra.mxu0 %v2713
    %3226 = vmatprep.subr.mxu0 0.0
    %3227 = vmatpush1.msra.mxu0 %v2714
    %3228 = vmatprep.subr.mxu0 0.0
    %3229 = vmatpush1.msra.mxu0 %v2715
    %3230 = vmatprep.subr.mxu0 0.0
    %3231 = vmatpush1.msra.mxu0 %v2716
    %3232 = vmatprep.subr.mxu0 0.0
    %3233 = vmatpush1.msra.mxu0 %v2717
    %3234 = vmatprep.subr.mxu0 0.0
    %3235 = vmatpush1.msra.mxu0 %v2718
    %3236 = vmatprep.subr.mxu0 0.0
    %3237 = vmatpush1.msra.mxu0 %v2719
    %3238 = vmatprep.subr.mxu0 0.0
    %3239 = vmatpush1.msra.mxu0 %v2720
    %3240 = vmatprep.subr.mxu0 0.0
    %3241 = vmatpush1.msra.mxu0 %v2721
    %3242 = vmatprep.subr.mxu0 0.0
    %3243 = vmatpush1.msra.mxu0 %v2722
    %3244 = vmatprep.mubr.f32.mxu0 %v3012
    %3245 = vmatmul.mubr.f32.gmra.mrb[0].mxu0 %v3010
    %v3246 = vpop.f32.mrb[0].mxu0
    %v3247 = vadd.f32 %v3177, %v3246
    %v3248 = vpop.f32.mrb[0].mxu0
    %3249 = vdwg.mxu0
    %3250 = vmatprep.subr.mxu0 0.0
    %3251 = vmatpush1.msra.mxu0 %v2723
    %3252 = vmatprep.subr.mxu0 0.0
    %3253 = vmatpush1.msra.mxu0 %v2724
    %3254 = vmatprep.subr.mxu0 0.0
    %3255 = vmatpush1.msra.mxu0 %v2725
    %3256 = vmatprep.subr.mxu0 0.0
    %3257 = vmatpush1.msra.mxu0 %v2726
    %3258 = vmatprep.subr.mxu0 0.0
    %3259 = vmatpush1.msra.mxu0 %v2727
    %3260 = vmatprep.subr.mxu0 0.0
    %3261 = vmatpush1.msra.mxu0 %v2728
    %3262 = vmatprep.subr.mxu0 0.0
    %3263 = vmatpush1.msra.mxu0 %v2729
    %3264 = vmatprep.subr.mxu0 0.0
    %3265 = vmatpush1.msra.mxu0 %v2730
    %3266 = vmatprep.subr.mxu0 0.0
    %3267 = vmatpush1.msra.mxu0 %v2731
    %3268 = vmatprep.subr.mxu0 0.0
    %3269 = vmatpush1.msra.mxu0 %v2732
    %3270 = vmatprep.subr.mxu0 0.0
    %3271 = vmatpush1.msra.mxu0 %v2733
    %3272 = vmatprep.subr.mxu0 0.0
    %3273 = vmatpush1.msra.mxu0 %v2734
    %3274 = vmatprep.subr.mxu0 0.0
    %3275 = vmatpush1.msra.mxu0 %v2735
    %3276 = vmatprep.subr.mxu0 0.0
    %3277 = vmatpush1.msra.mxu0 %v2736
    %3278 = vmatprep.subr.mxu0 0.0
    %3279 = vmatpush1.msra.mxu0 %v2737
    %3280 = vmatprep.subr.mxu0 0.0
    %3281 = vmatpush1.msra.mxu0 %v2738
    %3282 = vmatprep.subr.mxu0 0.0
    %3283 = vmatpush1.msra.mxu0 %v2739
    %3284 = vmatprep.subr.mxu0 0.0
    %3285 = vmatpush1.msra.mxu0 %v2740
    %3286 = vmatprep.subr.mxu0 0.0
    %3287 = vmatpush1.msra.mxu0 %v2741
    %3288 = vmatprep.subr.mxu0 0.0
    %3289 = vmatpush1.msra.mxu0 %v2742
    %3290 = vmatprep.subr.mxu0 0.0
    %3291 = vmatpush1.msra.mxu0 %v2743
    %3292 = vmatprep.subr.mxu0 0.0
    %3293 = vmatpush1.msra.mxu0 %v2744
    %3294 = vmatprep.subr.mxu0 0.0
    %3295 = vmatpush1.msra.mxu0 %v2745
    %3296 = vmatprep.subr.mxu0 0.0
    %3297 = vmatpush1.msra.mxu0 %v2746
    %3298 = vmatprep.subr.mxu0 0.0
    %3299 = vmatpush1.msra.mxu0 %v2747
    %3300 = vmatprep.subr.mxu0 0.0
    %3301 = vmatpush1.msra.mxu0 %v2748
    %3302 = vmatprep.subr.mxu0 0.0
    %3303 = vmatpush1.msra.mxu0 %v2749
    %3304 = vmatprep.subr.mxu0 0.0
    %3305 = vmatpush1.msra.mxu0 %v2750
    %3306 = vmatprep.subr.mxu0 0.0
    %3307 = vmatpush1.msra.mxu0 %v2751
    %3308 = vmatprep.subr.mxu0 0.0
    %3309 = vmatpush1.msra.mxu0 %v2752
    %3310 = vmatprep.subr.mxu0 0.0
    %3311 = vmatpush1.msra.mxu0 %v2753
    %3312 = vmatprep.subr.mxu0 0.0
    %3313 = vmatpush1.msra.mxu0 %v2754
    %3314 = vmatprep.mubr.f32.mxu0 %v3028
    %3315 = vmatmul.mubr.f32.gmra.mrb[0].mxu0 %v3020
    %v3316 = vpop.f32.mrb[0].mxu0
    %v3317 = vadd.f32 %v3247, %v3316
    %v3318 = vpop.f32.mrb[0].mxu0
    %3319 = vdwg.mxu0
    %3320 = vmatprep.subr.mxu0 0.0
    %3321 = vmatpush1.msra.mxu0 %v2755
    %3322 = vmatprep.subr.mxu0 0.0
    %3323 = vmatpush1.msra.mxu0 %v2756
    %3324 = vmatprep.subr.mxu0 0.0
    %3325 = vmatpush1.msra.mxu0 %v2757
    %3326 = vmatprep.subr.mxu0 0.0
    %3327 = vmatpush1.msra.mxu0 %v2758
    %3328 = vmatprep.subr.mxu0 0.0
    %3329 = vmatpush1.msra.mxu0 %v2759
    %3330 = vmatprep.subr.mxu0 0.0
    %3331 = vmatpush1.msra.mxu0 %v2760
    %3332 = vmatprep.subr.mxu0 0.0
    %3333 = vmatpush1.msra.mxu0 %v2761
    %3334 = vmatprep.subr.mxu0 0.0
    %3335 = vmatpush1.msra.mxu0 %v2762
    %3336 = vmatprep.subr.mxu0 0.0
    %3337 = vmatpush1.msra.mxu0 %v2763
    %3338 = vmatprep.subr.mxu0 0.0
    %3339 = vmatpush1.msra.mxu0 %v2764
    %3340 = vmatprep.subr.mxu0 0.0
    %3341 = vmatpush1.msra.mxu0 %v2765
    %3342 = vmatprep.subr.mxu0 0.0
    %3343 = vmatpush1.msra.mxu0 %v2766
    %3344 = vmatprep.subr.mxu0 0.0
    %3345 = vmatpush1.msra.mxu0 %v2767
    %3346 = vmatprep.subr.mxu0 0.0
    %3347 = vmatpush1.msra.mxu0 %v2768
    %3348 = vmatprep.subr.mxu0 0.0
    %3349 = vmatpush1.msra.mxu0 %v2769
    %3350 = vmatprep.subr.mxu0 0.0
    %3351 = vmatpush1.msra.mxu0 %v2770
    %3352 = vmatprep.subr.mxu0 0.0
    %3353 = vmatpush1.msra.mxu0 %v2771
    %3354 = vmatprep.subr.mxu0 0.0
    %3355 = vmatpush1.msra.mxu0 %v2772
    %3356 = vmatprep.subr.mxu0 0.0
    %3357 = vmatpush1.msra.mxu0 %v2773
    %3358 = vmatprep.subr.mxu0 0.0
    %3359 = vmatpush1.msra.mxu0 %v2774
    %3360 = vmatprep.subr.mxu0 0.0
    %3361 = vmatpush1.msra.mxu0 %v2775
    %3362 = vmatprep.subr.mxu0 0.0
    %3363 = vmatpush1.msra.mxu0 %v2776
    %3364 = vmatprep.subr.mxu0 0.0
    %3365 = vmatpush1.msra.mxu0 %v2777
    %3366 = vmatprep.subr.mxu0 0.0
    %3367 = vmatpush1.msra.mxu0 %v2778
    %3368 = vmatprep.subr.mxu0 0.0
    %3369 = vmatpush1.msra.mxu0 %v2779
    %3370 = vmatprep.subr.mxu0 0.0
    %3371 = vmatpush1.msra.mxu0 %v2780
    %3372 = vmatprep.subr.mxu0 0.0
    %3373 = vmatpush1.msra.mxu0 %v2781
    %3374 = vmatprep.subr.mxu0 0.0
    %3375 = vmatpush1.msra.mxu0 %v2782
    %3376 = vmatprep.subr.mxu0 0.0
    %3377 = vmatpush1.msra.mxu0 %v2783
    %3378 = vmatprep.subr.mxu0 0.0
    %3379 = vmatpush1.msra.mxu0 %v2784
    %3380 = vmatprep.subr.mxu0 0.0
    %3381 = vmatpush1.msra.mxu0 %v2785
    %3382 = vmatprep.subr.mxu0 0.0
    %3383 = vmatpush1.msra.mxu0 %v2786
    %3384 = vmatprep.mubr.f32.mxu0 %v3029
    %3385 = vmatmul.mubr.f32.gmra.mrb[0].mxu0 %v3027
    %v3386 = vpop.f32.mrb[0].mxu0
    %v3387 = vadd.f32 %v3317, %v3386
    %v3388 = vpop.f32.mrb[0].mxu0
    %3389 = vdwg.mxu0
    %3390 = vmatprep.subr.mxu0 0.0
    %3391 = vmatpush1.msra.mxu0 %v2787
    %3392 = vmatprep.subr.mxu0 0.0
    %3393 = vmatpush1.msra.mxu0 %v2788
    %3394 = vmatprep.subr.mxu0 0.0
    %3395 = vmatpush1.msra.mxu0 %v2789
    %3396 = vmatprep.subr.mxu0 0.0
    %3397 = vmatpush1.msra.mxu0 %v2790
    %3398 = vmatprep.subr.mxu0 0.0
    %3399 = vmatpush1.msra.mxu0 %v2791
    %3400 = vmatprep.subr.mxu0 0.0
    %3401 = vmatpush1.msra.mxu0 %v2792
    %3402 = vmatprep.subr.mxu0 0.0
    %3403 = vmatpush1.msra.mxu0 %v2793
    %3404 = vmatprep.subr.mxu0 0.0
    %3405 = vmatpush1.msra.mxu0 %v2794
    %3406 = vmatprep.subr.mxu0 0.0
    %3407 = vmatpush1.msra.mxu0 %v2795
    %3408 = vmatprep.subr.mxu0 0.0
    %3409 = vmatpush1.msra.mxu0 %v2796
    %3410 = vmatprep.subr.mxu0 0.0
    %3411 = vmatpush1.msra.mxu0 %v2797
    %3412 = vmatprep.subr.mxu0 0.0
    %3413 = vmatpush1.msra.mxu0 %v2798
    %3414 = vmatprep.subr.mxu0 0.0
    %3415 = vmatpush1.msra.mxu0 %v2799
    %3416 = vmatprep.subr.mxu0 0.0
    %3417 = vmatpush1.msra.mxu0 %v2800
    %3418 = vmatprep.subr.mxu0 0.0
    %3419 = vmatpush1.msra.mxu0 %v2801
    %3420 = vmatprep.subr.mxu0 0.0
    %3421 = vmatpush1.msra.mxu0 %v2802
    %3422 = vmatprep.subr.mxu0 0.0
    %3423 = vmatpush1.msra.mxu0 %v2803
    %3424 = vmatprep.subr.mxu0 0.0
    %3425 = vmatpush1.msra.mxu0 %v2804
    %3426 = vmatprep.subr.mxu0 0.0
    %3427 = vmatpush1.msra.mxu0 %v2805
    %3428 = vmatprep.subr.mxu0 0.0
    %3429 = vmatpush1.msra.mxu0 %v2806
    %3430 = vmatprep.subr.mxu0 0.0
    %3431 = vmatpush1.msra.mxu0 %v2807
    %3432 = vmatprep.subr.mxu0 0.0
    %3433 = vmatpush1.msra.mxu0 %v2808
    %3434 = vmatprep.subr.mxu0 0.0
    %3435 = vmatpush1.msra.mxu0 %v2809
    %3436 = vmatprep.subr.mxu0 0.0
    %3437 = vmatpush1.msra.mxu0 %v2810
    %3438 = vmatprep.subr.mxu0 0.0
    %3439 = vmatpush1.msra.mxu0 %v2811
    %3440 = vmatprep.subr.mxu0 0.0
    %3441 = vmatpush1.msra.mxu0 %v2812
    %3442 = vmatprep.subr.mxu0 0.0
    %3443 = vmatpush1.msra.mxu0 %v2813
    %3444 = vmatprep.subr.mxu0 0.0
    %3445 = vmatpush1.msra.mxu0 %v2814
    %3446 = vmatprep.subr.mxu0 0.0
    %3447 = vmatpush1.msra.mxu0 %v2815
    %3448 = vmatprep.subr.mxu0 0.0
    %3449 = vmatpush1.msra.mxu0 %v2816
    %3450 = vmatprep.subr.mxu0 0.0
    %3451 = vmatpush1.msra.mxu0 %v2817
    %3452 = vmatprep.subr.mxu0 0.0
    %3453 = vmatpush1.msra.mxu0 %v2818
    %3454 = vmatprep.mubr.f32.mxu0 %v3045
    %3455 = vmatmul.mubr.f32.gmra.mrb[0].mxu0 %v3037
    %v3456 = vpop.f32.mrb[0].mxu0
    %v3457 = vadd.f32 %v3387, %v3456
    %v3458 = vpop.f32.mrb[0].mxu0
    %3459 = vdwg.mxu0
    %3460 = vmatprep.subr.mxu0 0.0
    %3461 = vmatpush1.msra.mxu0 %v2819
    %3462 = vmatprep.subr.mxu0 0.0
    %3463 = vmatpush1.msra.mxu0 %v2820
    %3464 = vmatprep.subr.mxu0 0.0
    %3465 = vmatpush1.msra.mxu0 %v2821
    %3466 = vmatprep.subr.mxu0 0.0
    %3467 = vmatpush1.msra.mxu0 %v2822
    %3468 = vmatprep.subr.mxu0 0.0
    %3469 = vmatpush1.msra.mxu0 %v2823
    %3470 = vmatprep.subr.mxu0 0.0
    %3471 = vmatpush1.msra.mxu0 %v2824
    %3472 = vmatprep.subr.mxu0 0.0
    %3473 = vmatpush1.msra.mxu0 %v2825
    %3474 = vmatprep.subr.mxu0 0.0
    %3475 = vmatpush1.msra.mxu0 %v2826
    %3476 = vmatprep.subr.mxu0 0.0
    %3477 = vmatpush1.msra.mxu0 %v2827
    %3478 = vmatprep.subr.mxu0 0.0
    %3479 = vmatpush1.msra.mxu0 %v2828
    %3480 = vmatprep.subr.mxu0 0.0
    %3481 = vmatpush1.msra.mxu0 %v2829
    %3482 = vmatprep.subr.mxu0 0.0
    %3483 = vmatpush1.msra.mxu0 %v2830
    %3484 = vmatprep.subr.mxu0 0.0
    %3485 = vmatpush1.msra.mxu0 %v2831
    %3486 = vmatprep.subr.mxu0 0.0
    %3487 = vmatpush1.msra.mxu0 %v2832
    %3488 = vmatprep.subr.mxu0 0.0
    %3489 = vmatpush1.msra.mxu0 %v2833
    %3490 = vmatprep.subr.mxu0 0.0
    %3491 = vmatpush1.msra.mxu0 %v2834
    %3492 = vmatprep.subr.mxu0 0.0
    %3493 = vmatpush1.msra.mxu0 %v2835
    %3494 = vmatprep.subr.mxu0 0.0
    %3495 = vmatpush1.msra.mxu0 %v2836
    %3496 = vmatprep.subr.mxu0 0.0
    %3497 = vmatpush1.msra.mxu0 %v2837
    %3498 = vmatprep.subr.mxu0 0.0
    %3499 = vmatpush1.msra.mxu0 %v2838
    %3500 = vmatprep.subr.mxu0 0.0
    %3501 = vmatpush1.msra.mxu0 %v2839
    %3502 = vmatprep.subr.mxu0 0.0
    %3503 = vmatpush1.msra.mxu0 %v2840
    %3504 = vmatprep.subr.mxu0 0.0
    %3505 = vmatpush1.msra.mxu0 %v2841
    %3506 = vmatprep.subr.mxu0 0.0
    %3507 = vmatpush1.msra.mxu0 %v2842
    %3508 = vmatprep.subr.mxu0 0.0
    %3509 = vmatpush1.msra.mxu0 %v2843
    %3510 = vmatprep.subr.mxu0 0.0
    %3511 = vmatpush1.msra.mxu0 %v2844
    %3512 = vmatprep.subr.mxu0 0.0
    %3513 = vmatpush1.msra.mxu0 %v2845
    %3514 = vmatprep.subr.mxu0 0.0
    %3515 = vmatpush1.msra.mxu0 %v2846
    %3516 = vmatprep.subr.mxu0 0.0
    %3517 = vmatpush1.msra.mxu0 %v2847
    %3518 = vmatprep.subr.mxu0 0.0
    %3519 = vmatpush1.msra.mxu0 %v2848
    %3520 = vmatprep.subr.mxu0 0.0
    %3521 = vmatpush1.msra.mxu0 %v2849
    %3522 = vmatprep.subr.mxu0 0.0
    %3523 = vmatpush1.msra.mxu0 %v2850
    %3524 = vmatprep.mubr.f32.mxu0 %v3046
    %3525 = vmatmul.mubr.f32.gmra.mrb[0].mxu0 %v3044
    %v3526 = vpop.f32.mrb[0].mxu0
    %v3527 = vadd.f32 %v3457, %v3526
    %v3528 = vpop.f32.mrb[0].mxu0
    %3529 = vdwg.mxu0
    %3530 = vmatprep.subr.mxu0 0.0
    %3531 = vmatpush1.msra.mxu0 %v2851
    %3532 = vmatprep.subr.mxu0 0.0
    %3533 = vmatpush1.msra.mxu0 %v2852
    %3534 = vmatprep.subr.mxu0 0.0
    %3535 = vmatpush1.msra.mxu0 %v2853
    %3536 = vmatprep.subr.mxu0 0.0
    %3537 = vmatpush1.msra.mxu0 %v2854
    %3538 = vmatprep.subr.mxu0 0.0
    %3539 = vmatpush1.msra.mxu0 %v2855
    %3540 = vmatprep.subr.mxu0 0.0
    %3541 = vmatpush1.msra.mxu0 %v2856
    %3542 = vmatprep.subr.mxu0 0.0
    %3543 = vmatpush1.msra.mxu0 %v2857
    %3544 = vmatprep.subr.mxu0 0.0
    %3545 = vmatpush1.msra.mxu0 %v2858
    %3546 = vmatprep.subr.mxu0 0.0
    %3547 = vmatpush1.msra.mxu0 %v2859
    %3548 = vmatprep.subr.mxu0 0.0
    %3549 = vmatpush1.msra.mxu0 %v2860
    %3550 = vmatprep.subr.mxu0 0.0
    %3551 = vmatpush1.msra.mxu0 %v2861
    %3552 = vmatprep.subr.mxu0 0.0
    %3553 = vmatpush1.msra.mxu0 %v2862
    %3554 = vmatprep.subr.mxu0 0.0
    %3555 = vmatpush1.msra.mxu0 %v2863
    %3556 = vmatprep.subr.mxu0 0.0
    %3557 = vmatpush1.msra.mxu0 %v2864
    %3558 = vmatprep.subr.mxu0 0.0
    %3559 = vmatpush1.msra.mxu0 %v2865
    %3560 = vmatprep.subr.mxu0 0.0
    %3561 = vmatpush1.msra.mxu0 %v2866
    %3562 = vmatprep.subr.mxu0 0.0
    %3563 = vmatpush1.msra.mxu0 %v2867
    %3564 = vmatprep.subr.mxu0 0.0
    %3565 = vmatpush1.msra.mxu0 %v2868
    %3566 = vmatprep.subr.mxu0 0.0
    %3567 = vmatpush1.msra.mxu0 %v2869
    %3568 = vmatprep.subr.mxu0 0.0
    %3569 = vmatpush1.msra.mxu0 %v2870
    %3570 = vmatprep.subr.mxu0 0.0
    %3571 = vmatpush1.msra.mxu0 %v2871
    %3572 = vmatprep.subr.mxu0 0.0
    %3573 = vmatpush1.msra.mxu0 %v2872
    %3574 = vmatprep.subr.mxu0 0.0
    %3575 = vmatpush1.msra.mxu0 %v2873
    %3576 = vmatprep.subr.mxu0 0.0
    %3577 = vmatpush1.msra.mxu0 %v2874
    %3578 = vmatprep.subr.mxu0 0.0
    %3579 = vmatpush1.msra.mxu0 %v2875
    %3580 = vmatprep.subr.mxu0 0.0
    %3581 = vmatpush1.msra.mxu0 %v2876
    %3582 = vmatprep.subr.mxu0 0.0
    %3583 = vmatpush1.msra.mxu0 %v2877
    %3584 = vmatprep.subr.mxu0 0.0
    %3585 = vmatpush1.msra.mxu0 %v2878
    %3586 = vmatprep.subr.mxu0 0.0
    %3587 = vmatpush1.msra.mxu0 %v2879
    %3588 = vmatprep.subr.mxu0 0.0
    %3589 = vmatpush1.msra.mxu0 %v2880
    %3590 = vmatprep.subr.mxu0 0.0
    %3591 = vmatpush1.msra.mxu0 %v2881
    %3592 = vmatprep.subr.mxu0 0.0
    %3593 = vmatpush1.msra.mxu0 %v2882
    %3594 = vmatprep.mubr.f32.mxu0 %v3062
    %3595 = vmatmul.mubr.f32.gmra.mrb[0].mxu0 %v3054
    %v3596 = vpop.f32.mrb[0].mxu0
    %v3597 = vadd.f32 %v3527, %v3596
    %v3598 = vpop.f32.mrb[0].mxu0
    %3599 = vdwg.mxu0
    %3600 = vmatprep.subr.mxu0 0.0
    %3601 = vmatpush1.msra.mxu0 %v2883
    %3602 = vmatprep.subr.mxu0 0.0
    %3603 = vmatpush1.msra.mxu0 %v2884
    %3604 = vmatprep.subr.mxu0 0.0
    %3605 = vmatpush1.msra.mxu0 %v2885
    %3606 = vmatprep.subr.mxu0 0.0
    %3607 = vmatpush1.msra.mxu0 %v2886
    %3608 = vmatprep.subr.mxu0 0.0
    %3609 = vmatpush1.msra.mxu0 %v2887
    %3610 = vmatprep.subr.mxu0 0.0
    %3611 = vmatpush1.msra.mxu0 %v2888
    %3612 = vmatprep.subr.mxu0 0.0
    %3613 = vmatpush1.msra.mxu0 %v2889
    %3614 = vmatprep.subr.mxu0 0.0
    %3615 = vmatpush1.msra.mxu0 %v2890
    %3616 = vmatprep.subr.mxu0 0.0
    %3617 = vmatpush1.msra.mxu0 %v2891
    %3618 = vmatprep.subr.mxu0 0.0
    %3619 = vmatpush1.msra.mxu0 %v2892
    %3620 = vmatprep.subr.mxu0 0.0
    %3621 = vmatpush1.msra.mxu0 %v2893
    %3622 = vmatprep.subr.mxu0 0.0
    %3623 = vmatpush1.msra.mxu0 %v2894
    %3624 = vmatprep.subr.mxu0 0.0
    %3625 = vmatpush1.msra.mxu0 %v2895
    %3626 = vmatprep.subr.mxu0 0.0
    %3627 = vmatpush1.msra.mxu0 %v2896
    %3628 = vmatprep.subr.mxu0 0.0
    %3629 = vmatpush1.msra.mxu0 %v2897
    %3630 = vmatprep.subr.mxu0 0.0
    %3631 = vmatpush1.msra.mxu0 %v2898
    %3632 = vmatprep.subr.mxu0 0.0
    %3633 = vmatpush1.msra.mxu0 %v2899
    %3634 = vmatprep.subr.mxu0 0.0
    %3635 = vmatpush1.msra.mxu0 %v2900
    %3636 = vmatprep.subr.mxu0 0.0
    %3637 = vmatpush1.msra.mxu0 %v2901
    %3638 = vmatprep.subr.mxu0 0.0
    %3639 = vmatpush1.msra.mxu0 %v2902
    %3640 = vmatprep.subr.mxu0 0.0
    %3641 = vmatpush1.msra.mxu0 %v2903
    %3642 = vmatprep.subr.mxu0 0.0
    %3643 = vmatpush1.msra.mxu0 %v2904
    %3644 = vmatprep.subr.mxu0 0.0
    %3645 = vmatpush1.msra.mxu0 %v2905
    %3646 = vmatprep.subr.mxu0 0.0
    %3647 = vmatpush1.msra.mxu0 %v2906
    %3648 = vmatprep.subr.mxu0 0.0
    %3649 = vmatpush1.msra.mxu0 %v2907
    %3650 = vmatprep.subr.mxu0 0.0
    %3651 = vmatpush1.msra.mxu0 %v2908
    %3652 = vmatprep.subr.mxu0 0.0
    %3653 = vmatpush1.msra.mxu0 %v2909
    %3654 = vmatprep.subr.mxu0 0.0
    %3655 = vmatpush1.msra.mxu0 %v2910
    %3656 = vmatprep.subr.mxu0 0.0
    %3657 = vmatpush1.msra.mxu0 %v2911
    %3658 = vmatprep.subr.mxu0 0.0
    %3659 = vmatpush1.msra.mxu0 %v2912
    %3660 = vmatprep.subr.mxu0 0.0
    %3661 = vmatpush1.msra.mxu0 %v2913
    %3662 = vmatprep.subr.mxu0 0.0
    %3663 = vmatpush1.msra.mxu0 %v2914
    %3664 = vmatprep.mubr.f32.mxu0 %v3063
    %3665 = vmatmul.mubr.f32.gmra.mrb[0].mxu0 %v3061
    %v3666 = vpop.f32.mrb[0].mxu0
    %v3667 = vadd.f32 %v3597, %v3666
    %v3668 = vpop.f32.mrb[0].mxu0
    %3669 = vdwg.mxu0
    %3670 = vmatprep.subr.mxu0 0.0
    %3671 = vmatpush1.msra.mxu0 %v2915
    %3672 = vmatprep.subr.mxu0 0.0
    %3673 = vmatpush1.msra.mxu0 %v2916
    %3674 = vmatprep.subr.mxu0 0.0
    %3675 = vmatpush1.msra.mxu0 %v2917
    %3676 = vmatprep.subr.mxu0 0.0
    %3677 = vmatpush1.msra.mxu0 %v2918
    %3678 = vmatprep.subr.mxu0 0.0
    %3679 = vmatpush1.msra.mxu0 %v2919
    %3680 = vmatprep.subr.mxu0 0.0
    %3681 = vmatpush1.msra.mxu0 %v2920
    %3682 = vmatprep.subr.mxu0 0.0
    %3683 = vmatpush1.msra.mxu0 %v2921
    %3684 = vmatprep.subr.mxu0 0.0
    %3685 = vmatpush1.msra.mxu0 %v2922
    %3686 = vmatprep.subr.mxu0 0.0
    %3687 = vmatpush1.msra.mxu0 %v2923
    %3688 = vmatprep.subr.mxu0 0.0
    %3689 = vmatpush1.msra.mxu0 %v2924
    %3690 = vmatprep.subr.mxu0 0.0
    %3691 = vmatpush1.msra.mxu0 %v2925
    %3692 = vmatprep.subr.mxu0 0.0
    %3693 = vmatpush1.msra.mxu0 %v2926
    %3694 = vmatprep.subr.mxu0 0.0
    %3695 = vmatpush1.msra.mxu0 %v2927
    %3696 = vmatprep.subr.mxu0 0.0
    %3697 = vmatpush1.msra.mxu0 %v2928
    %3698 = vmatprep.subr.mxu0 0.0
    %3699 = vmatpush1.msra.mxu0 %v2929
    %3700 = vmatprep.subr.mxu0 0.0
    %3701 = vmatpush1.msra.mxu0 %v2930
    %3702 = vmatprep.subr.mxu0 0.0
    %3703 = vmatpush1.msra.mxu0 %v2931
    %3704 = vmatprep.subr.mxu0 0.0
    %3705 = vmatpush1.msra.mxu0 %v2932
    %3706 = vmatprep.subr.mxu0 0.0
    %3707 = vmatpush1.msra.mxu0 %v2933
    %3708 = vmatprep.subr.mxu0 0.0
    %3709 = vmatpush1.msra.mxu0 %v2934
    %3710 = vmatprep.subr.mxu0 0.0
    %3711 = vmatpush1.msra.mxu0 %v2935
    %3712 = vmatprep.subr.mxu0 0.0
    %3713 = vmatpush1.msra.mxu0 %v2936
    %3714 = vmatprep.subr.mxu0 0.0
    %3715 = vmatpush1.msra.mxu0 %v2937
    %3716 = vmatprep.subr.mxu0 0.0
    %3717 = vmatpush1.msra.mxu0 %v2938
    %3718 = vmatprep.subr.mxu0 0.0
    %3719 = vmatpush1.msra.mxu0 %v2939
    %3720 = vmatprep.subr.mxu0 0.0
    %3721 = vmatpush1.msra.mxu0 %v2940
    %3722 = vmatprep.subr.mxu0 0.0
    %3723 = vmatpush1.msra.mxu0 %v2941
    %3724 = vmatprep.subr.mxu0 0.0
    %3725 = vmatpush1.msra.mxu0 %v2942
    %3726 = vmatprep.subr.mxu0 0.0
    %3727 = vmatpush1.msra.mxu0 %v2943
    %3728 = vmatprep.subr.mxu0 0.0
    %3729 = vmatpush1.msra.mxu0 %v2944
    %3730 = vmatprep.subr.mxu0 0.0
    %3731 = vmatpush1.msra.mxu0 %v2945
    %3732 = vmatprep.subr.mxu0 0.0
    %3733 = vmatpush1.msra.mxu0 %v2946
    %3734 = vmatprep.mubr.f32.mxu0 %v3079
    %3735 = vmatmul.mubr.f32.gmra.mrb[0].mxu0 %v3071
    %v3736 = vpop.f32.mrb[0].mxu0
    %v3737 = vadd.f32 %v3667, %v3736
    %v3738 = vpop.f32.mrb[0].mxu0
    %3739 = vdwg.mxu0
    %3740 = vmatprep.subr.mxu0 0.0
    %3741 = vmatpush1.msra.mxu0 %v2947
    %3742 = vmatprep.subr.mxu0 0.0
    %3743 = vmatpush1.msra.mxu0 %v2948
    %3744 = vmatprep.subr.mxu0 0.0
    %3745 = vmatpush1.msra.mxu0 %v2949
    %3746 = vmatprep.subr.mxu0 0.0
    %3747 = vmatpush1.msra.mxu0 %v2950
    %3748 = vmatprep.subr.mxu0 0.0
    %3749 = vmatpush1.msra.mxu0 %v2951
    %3750 = vmatprep.subr.mxu0 0.0
    %3751 = vmatpush1.msra.mxu0 %v2952
    %3752 = vmatprep.subr.mxu0 0.0
    %3753 = vmatpush1.msra.mxu0 %v2953
    %3754 = vmatprep.subr.mxu0 0.0
    %3755 = vmatpush1.msra.mxu0 %v2954
    %3756 = vmatprep.subr.mxu0 0.0
    %3757 = vmatpush1.msra.mxu0 %v2955
    %3758 = vmatprep.subr.mxu0 0.0
    %3759 = vmatpush1.msra.mxu0 %v2956
    %3760 = vmatprep.subr.mxu0 0.0
    %3761 = vmatpush1.msra.mxu0 %v2957
    %3762 = vmatprep.subr.mxu0 0.0
    %3763 = vmatpush1.msra.mxu0 %v2958
    %3764 = vmatprep.subr.mxu0 0.0
    %3765 = vmatpush1.msra.mxu0 %v2959
    %3766 = vmatprep.subr.mxu0 0.0
    %3767 = vmatpush1.msra.mxu0 %v2960
    %3768 = vmatprep.subr.mxu0 0.0
    %3769 = vmatpush1.msra.mxu0 %v2961
    %3770 = vmatprep.subr.mxu0 0.0
    %3771 = vmatpush1.msra.mxu0 %v2962
    %3772 = vmatprep.subr.mxu0 0.0
    %3773 = vmatpush1.msra.mxu0 %v2963
    %3774 = vmatprep.subr.mxu0 0.0
    %3775 = vmatpush1.msra.mxu0 %v2964
    %3776 = vmatprep.subr.mxu0 0.0
    %3777 = vmatpush1.msra.mxu0 %v2965
    %3778 = vmatprep.subr.mxu0 0.0
    %3779 = vmatpush1.msra.mxu0 %v2966
    %3780 = vmatprep.subr.mxu0 0.0
    %3781 = vmatpush1.msra.mxu0 %v2967
    %3782 = vmatprep.subr.mxu0 0.0
    %3783 = vmatpush1.msra.mxu0 %v2968
    %3784 = vmatprep.subr.mxu0 0.0
    %3785 = vmatpush1.msra.mxu0 %v2969
    %3786 = vmatprep.subr.mxu0 0.0
    %3787 = vmatpush1.msra.mxu0 %v2970
    %3788 = vmatprep.subr.mxu0 0.0
    %3789 = vmatpush1.msra.mxu0 %v2971
    %3790 = vmatprep.subr.mxu0 0.0
    %3791 = vmatpush1.msra.mxu0 %v2972
    %3792 = vmatprep.subr.mxu0 0.0
    %3793 = vmatpush1.msra.mxu0 %v2973
    %3794 = vmatprep.subr.mxu0 0.0
    %3795 = vmatpush1.msra.mxu0 %v2974
    %3796 = vmatprep.subr.mxu0 0.0
    %3797 = vmatpush1.msra.mxu0 %v2975
    %3798 = vmatprep.subr.mxu0 0.0
    %3799 = vmatpush1.msra.mxu0 %v2976
    %3800 = vmatprep.subr.mxu0 0.0
    %3801 = vmatpush1.msra.mxu0 %v2977
    %3802 = vmatprep.subr.mxu0 0.0
    %3803 = vmatpush1.msra.mxu0 %v2978
    %3804 = vmatprep.mubr.f32.mxu0 %v3080
    %3805 = vmatmul.mubr.f32.gmra.mrb[0].mxu0 %v3078
    %v3806 = vpop.f32.mrb[0].mxu0
    %v3807 = vadd.f32 %v3737, %v3806
    %v3808 = vpop.f32.mrb[0].mxu0
    %3809 = vdwg.mxu0
    %3810 = vmatprep.subr.mxu0 0.0
    %3811 = vmatpush1.msra.mxu0 %v2979
    %3812 = vmatprep.subr.mxu0 0.0
    %3813 = vmatpush1.msra.mxu0 %v2980
    %3814 = vmatprep.subr.mxu0 0.0
    %3815 = vmatpush1.msra.mxu0 %v2981
    %3816 = vmatprep.subr.mxu0 0.0
    %3817 = vmatpush1.msra.mxu0 %v2982
    %3818 = vmatprep.subr.mxu0 0.0
    %3819 = vmatpush1.msra.mxu0 0.0
    %3820 = vmatprep.subr.mxu0 0.0
    %3821 = vmatpush1.msra.mxu0 0.0
    %3822 = vmatprep.subr.mxu0 0.0
    %3823 = vmatpush1.msra.mxu0 0.0
    %3824 = vmatprep.subr.mxu0 0.0
    %3825 = vmatpush1.msra.mxu0 0.0
    %3826 = vmatprep.subr.mxu0 0.0
    %3827 = vmatpush1.msra.mxu0 0.0
    %3828 = vmatprep.subr.mxu0 0.0
    %3829 = vmatpush1.msra.mxu0 0.0
    %3830 = vmatprep.subr.mxu0 0.0
    %3831 = vmatpush1.msra.mxu0 0.0
    %3832 = vmatprep.subr.mxu0 0.0
    %3833 = vmatpush1.msra.mxu0 0.0
    %3834 = vmatprep.subr.mxu0 0.0
    %3835 = vmatpush1.msra.mxu0 0.0
    %3836 = vmatprep.subr.mxu0 0.0
    %3837 = vmatpush1.msra.mxu0 0.0
    %3838 = vmatprep.subr.mxu0 0.0
    %3839 = vmatpush1.msra.mxu0 0.0
    %3840 = vmatprep.subr.mxu0 0.0
    %3841 = vmatpush1.msra.mxu0 0.0
    %3842 = vmatprep.subr.mxu0 0.0
    %3843 = vmatpush1.msra.mxu0 0.0
    %3844 = vmatprep.subr.mxu0 0.0
    %3845 = vmatpush1.msra.mxu0 0.0
    %3846 = vmatprep.subr.mxu0 0.0
    %3847 = vmatpush1.msra.mxu0 0.0
    %3848 = vmatprep.subr.mxu0 0.0
    %3849 = vmatpush1.msra.mxu0 0.0
    %3850 = vmatprep.subr.mxu0 0.0
    %3851 = vmatpush1.msra.mxu0 0.0
    %3852 = vmatprep.subr.mxu0 0.0
    %3853 = vmatpush1.msra.mxu0 0.0
    %3854 = vmatprep.subr.mxu0 0.0
    %3855 = vmatpush1.msra.mxu0 0.0
    %3856 = vmatprep.subr.mxu0 0.0
    %3857 = vmatpush1.msra.mxu0 0.0
    %3858 = vmatprep.subr.mxu0 0.0
    %3859 = vmatpush1.msra.mxu0 0.0
    %3860 = vmatprep.subr.mxu0 0.0
    %3861 = vmatpush1.msra.mxu0 0.0
    %3862 = vmatprep.subr.mxu0 0.0
    %3863 = vmatpush1.msra.mxu0 0.0
    %3864 = vmatprep.subr.mxu0 0.0
    %3865 = vmatpush1.msra.mxu0 0.0
    %3866 = vmatprep.subr.mxu0 0.0
    %3867 = vmatpush1.msra.mxu0 0.0
    %3868 = vmatprep.subr.mxu0 0.0
    %3869 = vmatpush1.msra.mxu0 0.0
    %3870 = vmatprep.subr.mxu0 0.0
    %3871 = vmatpush1.msra.mxu0 0.0
    %3872 = vmatprep.subr.mxu0 0.0
    %3873 = vmatpush1.msra.mxu0 0.0
    %3874 = vmatprep.mubr.f32.mxu0 0.0
    %3875 = vmatmul.mubr.f32.gmra.mrb[0].mxu0 %v3108
    %v3876 = vpop.f32.mrb[0].mxu0
    %v3877 = vadd.f32 %v3807, %v3876
    %v3878 = vpop.f32.mrb[0].mxu0
    %3879 = vdwg.mxu0
    %v3880 = vxor.u32 %v3877, 2147483648
    %v3881 = vmul.f32 %v3880, 1.442695
    %v3882 = vpow.pop %v3881
    %v3883 = vadd.f32 %v3882, 1.0
    %v3884 = vrcp.pop %v3883
    %v3885 = vmul.f32 1.0, %v3884
    %v3886 = vld [vmem:[%s5] sm:$0xff]
    %v3887 = vld [vmem:[%s5 + $0x8] sm:$0xff]
    %v3888 = vld [vmem:[%s5 + $0x10] sm:$0xff]
    %v3889 = vld [vmem:[%s5 + $0x18] sm:$0xff]
    %v3890 = vld [vmem:[%s6] sm:$0x1]
    %v3892 = vlaneseq
    %v3893 = vshrl.u32 %v3892, 7
    %v3894 = vsub.s32 0, %v3893
    %v3895 = vrot.slane %v3890, %v3894
    %v3898 = vsel %vm1578, %v3885, 0
    %3900 = vmatprep.subr.mxu0 0.0
    %3901 = vmatpush1.msra.mxu0 %v3886
    %3902 = vmatprep.subr.mxu0 0.0
    %3903 = vmatpush1.msra.mxu0 %v3887
    %3904 = vmatprep.subr.mxu0 0.0
    %3905 = vmatpush1.msra.mxu0 %v3888
    %3906 = vmatprep.subr.mxu0 0.0
    %3907 = vmatpush1.msra.mxu0 %v3889
    %3908 = vmatprep.subr.mxu0 0.0
    %3909 = vmatpush1.msra.mxu0 0.0
    %3910 = vmatprep.subr.mxu0 0.0
    %3911 = vmatpush1.msra.mxu0 0.0
    %3912 = vmatprep.subr.mxu0 0.0
    %3913 = vmatpush1.msra.mxu0 0.0
    %3914 = vmatprep.subr.mxu0 0.0
    %3915 = vmatpush1.msra.mxu0 0.0
    %3916 = vmatprep.subr.mxu0 0.0
    %3917 = vmatpush1.msra.mxu0 0.0
    %3918 = vmatprep.subr.mxu0 0.0
    %3919 = vmatpush1.msra.mxu0 0.0
    %3920 = vmatprep.subr.mxu0 0.0
    %3921 = vmatpush1.msra.mxu0 0.0
    %3922 = vmatprep.subr.mxu0 0.0
    %3923 = vmatpush1.msra.mxu0 0.0
    %3924 = vmatprep.subr.mxu0 0.0
    %3925 = vmatpush1.msra.mxu0 0.0
    %3926 = vmatprep.subr.mxu0 0.0
    %3927 = vmatpush1.msra.mxu0 0.0
    %3928 = vmatprep.subr.mxu0 0.0
    %3929 = vmatpush1.msra.mxu0 0.0
    %3930 = vmatprep.subr.mxu0 0.0
    %3931 = vmatpush1.msra.mxu0 0.0
    %3932 = vmatprep.subr.mxu0 0.0
    %3933 = vmatpush1.msra.mxu0 0.0
    %3934 = vmatprep.subr.mxu0 0.0
    %3935 = vmatpush1.msra.mxu0 0.0
    %3936 = vmatprep.subr.mxu0 0.0
    %3937 = vmatpush1.msra.mxu0 0.0
    %3938 = vmatprep.subr.mxu0 0.0
    %3939 = vmatpush1.msra.mxu0 0.0
    %3940 = vmatprep.subr.mxu0 0.0
    %3941 = vmatpush1.msra.mxu0 0.0
    %3942 = vmatprep.subr.mxu0 0.0
    %3943 = vmatpush1.msra.mxu0 0.0
    %3944 = vmatprep.subr.mxu0 0.0
    %3945 = vmatpush1.msra.mxu0 0.0
    %3946 = vmatprep.subr.mxu0 0.0
    %3947 = vmatpush1.msra.mxu0 0.0
    %3948 = vmatprep.subr.mxu0 0.0
    %3949 = vmatpush1.msra.mxu0 0.0
    %3950 = vmatprep.subr.mxu0 0.0
    %3951 = vmatpush1.msra.mxu0 0.0
    %3952 = vmatprep.subr.mxu0 0.0
    %3953 = vmatpush1.msra.mxu0 0.0
    %3954 = vmatprep.subr.mxu0 0.0
    %3955 = vmatpush1.msra.mxu0 0.0
    %3956 = vmatprep.subr.mxu0 0.0
    %3957 = vmatpush1.msra.mxu0 0.0
    %3958 = vmatprep.subr.mxu0 0.0
    %3959 = vmatpush1.msra.mxu0 0.0
    %3960 = vmatprep.subr.mxu0 0.0
    %3961 = vmatpush1.msra.mxu0 0.0
    %3962 = vmatprep.subr.mxu0 0.0
    %3963 = vmatpush1.msra.mxu0 0.0
    %3964 = vmatprep.mubr.f32.mxu0 0.0
    %3965 = vmatmul.mubr.f32.gmra.mrb[0].mxu0 %v3898
    %v3966 = vpop.f32.mrb[0].mxu0
    %v3967 = vadd.f32 %v3895, %v3966
    %v3968 = vpop.f32.mrb[0].mxu0
    %3969 = vdwg.mxu0
    %vm3970 = vcmask 74752
    %3971 = vst.msk [vmem:[#allocation3] sm:$0x3] %vm3970, %v3967
    // Predicated region
    $region30: #{cnn_forward.1} parent=1 // pred_check
      _
    $region31: #{cnn_forward.1} parent=1 // pred_check_branch
      %3973 = sbr.rel (0) target = $region33
    $region32: #{cnn_forward.1} parent=1 // pred_region
      %s3975 = ssub.s32 32, 32
      %3976 = vsyncadd [#allocation4], %s3975
      %s3978 = sshll.u32 [#allocation3], 4
      %s3979 = int_to_ptr.vmem [resolvable:$true] %s3978
      %3981 = dma.vmem_to_hbm [thread:$0]  %s3979, 32, %s7, [#allocation4]
    $region33: #{cnn_forward.1} parent=1 // pred_fallthru
      _
    // Predicated region
    $region34: #{cnn_forward.1} parent=1 // pred_check
      _
    $region35: #{cnn_forward.1} parent=1 // pred_check_branch
      %3983 = sbr.rel (0) target = $region37
    $region36: #{cnn_forward.1} parent=1 // pred_region
      %3984 = dma.done [#allocation4], 32
    $region37: #{cnn_forward.1} parent=1 // pred_fallthru
      _
    %3985 = vsyncpa [#allocation4], 1

</llo_original>
